<compile_context>
chip_gen: v6e
topology: v6e:2x2x1
jax: 0.10.0
libtpu: 0.0.40
codegen_flags: <defaults>
</compile_context>

<pallas_src>
import jax
import jax.numpy as jnp
from jax import lax
from jax.experimental import pallas as pl
from jax.experimental.pallas import tpu as pltpu


def _round_up(x, m):
    return ((x + m - 1) // m) * m


def _axis_phases(size_in, size_out, stride, pad, dil, ksize):
    """Static sub-pixel (phase) decomposition along one spatial axis.

    Phase o0 (o0 = 0..stride-1) owns output indices {o0 + j*stride, 0<=j<n}.
    taps = [(k, off)]: kernel tap k contributes to output o0 + j*stride from
    input index j + off (zero contribution if outside [0, size_in)).
    Phases are ordered by o0 so a plain reshape re-interleaves the output.
    """
    phases = []
    for o0 in range(stride):
        n = max(0, (size_out - o0 + stride - 1) // stride)
        taps = []
        for k in range(ksize):
            if (o0 + pad - k * dil) % stride == 0:
                taps.append((k, (o0 + pad - k * dil) // stride))  # exact div
        phases.append((n, taps))
    return phases


def _make_phase_kernel(plan, w_slot, H_ph, W_ph, Cin, Cout_p, n_w):
    """plan[p]   : list of static (row_off, col_off) tap offsets into x_pad.
       w_slot[p] : index into the weight-ref list (None => bias-only phase)."""
    P = len(plan)
    M = H_ph * W_ph

    def kernel(x_ref, *args):
        # x_ref  : (1, H_p, W_p, Cin)  padded, un-dilated input (one image)
        # args   : n_w weight refs (Kp, Cout_p), bias (1, Cout_p) f32,
        #          output (1, P, M, Cout_p), scratch col_ref (M, K_max) f32
        w_refs = args[:n_w]
        b_ref = args[n_w]
        o_ref = args[n_w + 1]
        col_ref = args[n_w + 2]

        bias = b_ref[...]                                    # (1, Cout_p), f32
        for p in range(P):                                   # static unroll
            taps = plan[p]
            if not taps:                                     # bias-only phase
                acc = jnp.zeros((M, Cout_p), jnp.float32) + bias
            else:
                kp = len(taps) * Cin
                # im2col into VMEM scratch: fold all taps into one K dim.
                for t, (oh, ow) in enumerate(taps):
                    piece = x_ref[0, oh:oh + H_ph, ow:ow + W_ph, :]
                    col_ref[:, t * Cin:(t + 1) * Cin] = piece.reshape(M, Cin)
                # single MXU matmul per phase: (M, kp) x (kp, Cout_p)
                acc = jnp.dot(col_ref[:, :kp], w_refs[w_slot[p]][...],
                              preferred_element_type=jnp.float32)
                acc = acc + bias                             # f32 bias add
            o_ref[0, p] = acc.astype(o_ref.dtype)            # lane-dense store

    return kernel


def meta_conv_transpose2d(x_nchw, weight, bias, stride, padding,
                          output_padding, dilation, groups=1):
    """F.conv_transpose2d(x, weight, bias, stride, padding, output_padding,
    groups, dilation) with NCHW input, weight (Cin, Cout, kH, kW)."""
    assert groups == 1  # TODO(synk): grouped transposed conv not implemented
    N, Cin, H, W = x_nchw.shape
    Cin_w, Cout, kH, kW = weight.shape
    assert Cin == Cin_w
    sh, sw = stride
    ph, pw = padding
    oph, opw = output_padding
    dh, dw = dilation

    H_out = (H - 1) * sh - 2 * ph + dh * (kH - 1) + oph + 1
    W_out = (W - 1) * sw - 2 * pw + dw * (kW - 1) + opw + 1

    # ---- static phase plan (pure Python ints), ordered by output offset ----
    row_phases = _axis_phases(H, H_out, sh, ph, dh, kH)
    col_phases = _axis_phases(W, W_out, sw, pw, dw, kW)
    H_ph = max(1, max(n for n, _ in row_phases))
    W_ph = max(1, max(n for n, _ in col_phases))
    W_ph = _round_up(W_ph, 8)          # keep in-kernel reshape sublane-aligned
    M = H_ph * W_ph
    P = sh * sw

    # pad the *un-dilated* input so all tap windows are in-bounds; the zero
    # padding exactly models out-of-range input contributions.
    r_offs = [off for _, taps in row_phases for _, off in taps]
    c_offs = [off for _, taps in col_phases for _, off in taps]
    pad_t = max(0, -min(r_offs)) if r_offs else 0
    pad_b = max(0, (max(r_offs) if r_offs else 0) + H_ph - H)
    pad_l = max(0, -min(c_offs)) if c_offs else 0
    pad_r = max(0, (max(c_offs) if c_offs else 0) + W_ph - W)

    x = jnp.transpose(x_nchw, (0, 2, 3, 1)).astype(jnp.float32)  # NCHW -> NHWC
    x_pad = jnp.pad(x, ((0, 0), (pad_t, pad_b), (pad_l, pad_r), (0, 0)))
    H_p, W_p = x_pad.shape[1], x_pad.shape[2]

    # ---- per-phase packed weights (K folded) + static tap offsets ----------
    Cout_p = _round_up(Cout, 128)      # lane-dense output / MXU N dim
    plan, w_slot, w_arrays = [], [], []
    for _, rtaps in row_phases:
        for _, ctaps in col_phases:
            taps, wblks = [], []
            for kh, roff in rtaps:
                for kw_, coff in ctaps:
                    taps.append((roff + pad_t, coff + pad_l))
                    wblks.append(weight[:, :, kh, kw_])       # (Cin, Cout)
            plan.append(taps)
            if taps:
                w_pk = jnp.concatenate(wblks, axis=0).astype(jnp.float32)
                w_pk = jnp.pad(w_pk, ((0, 0), (0, Cout_p - Cout)))
                w_slot.append(len(w_arrays))
                w_arrays.append(w_pk)                         # (Tp*Cin, Cout_p)
            else:
                w_slot.append(None)

    K_max = max(1, max((len(t) for t in plan), default=1)) * Cin

    if bias is None:
        b_pad = jnp.zeros((1, Cout_p), jnp.float32)
    else:                              # keep bias in f32 inside the kernel
        b_pad = jnp.zeros((1, Cout_p), jnp.float32).at[0, :Cout].set(
            bias.astype(jnp.float32))

    kernel = _make_phase_kernel(plan, w_slot, H_ph, W_ph, Cin, Cout_p,
                                len(w_arrays))

    # weights / bias: constant index_map -> stay VMEM-resident across the grid
    w_specs = [pl.BlockSpec(w.shape, lambda n: (0, 0)) for w in w_arrays]

    flops = 2 * N * M * Cout_p * sum(len(t) * Cin for t in plan)
    bytes_accessed = 4 * (x_pad.size + sum(w.size for w in w_arrays)
                          + b_pad.size + N * P * M * Cout_p)

    out_pk = pl.pallas_call(
        kernel,
        out_shape=jax.ShapeDtypeStruct((N, P, M, Cout_p), jnp.float32),
        grid_spec=pltpu.PrefetchScalarGridSpec(
            num_scalar_prefetch=0,
            grid=(N,),
            in_specs=[pl.BlockSpec((1, H_p, W_p, Cin),
                                   lambda n: (n, 0, 0, 0))]
                     + w_specs
                     + [pl.BlockSpec((1, Cout_p), lambda n: (0, 0))],
            out_specs=pl.BlockSpec((1, P, M, Cout_p),
                                   lambda n: (n, 0, 0, 0)),
            scratch_shapes=[pltpu.VMEM((M, K_max), jnp.float32)],
        ),
        compiler_params=pltpu.CompilerParams(
            dimension_semantics=("parallel",)),
        cost_estimate=pl.CostEstimate(flops=flops, transcendentals=0,
                                      bytes_accessed=bytes_accessed),
    )(x_pad, *w_arrays, b_pad)

    # ---- interleave phases back into the dense output ----------------------
    # Phases are ordered (row_o0 major, col_o0 minor); output row = jh*sh+row_o0
    # and col = jw*sw+col_o0, so a reshape + transpose + slice reconstructs the
    # dense output (no strided scatters). Garbage rows/cols (j beyond a phase's
    # valid range, or W_ph padding) land at indices >= H_out/W_out and slice off.
    out = out_pk.reshape(N, sh, sw, H_ph, W_ph, Cout_p)
    out = jnp.transpose(out, (0, 3, 1, 4, 2, 5))     # (N, H_ph, sh, W_ph, sw, C)
    out = out.reshape(N, H_ph * sh, W_ph * sw, Cout_p)
    out = out[:, :H_out, :W_out, :Cout]
    return jnp.transpose(out, (0, 3, 1, 2)).astype(x_nchw.dtype)  # -> NCHW


def _reference_conv_transpose2d(x, weight, bias, stride, padding,
                                output_padding, dilation):
    """Pure-JAX reference via lax.conv_general_dilated (lhs dilation)."""
    kH, kW = weight.shape[2], weight.shape[3]
    dh, dw = dilation
    w = jnp.transpose(weight[:, :, ::-1, ::-1], (1, 0, 2, 3))   # (Cout,Cin,kH,kW)
    pads = ((dh * (kH - 1) - padding[0],
             dh * (kH - 1) - padding[0] + output_padding[0]),
            (dw * (kW - 1) - padding[1],
             dw * (kW - 1) - padding[1] + output_padding[1]))
    out = lax.conv_general_dilated(x, w, window_strides=(1, 1), padding=pads,
                                   lhs_dilation=stride, rhs_dilation=dilation,
                                   dimension_numbers=('NCHW', 'OIHW', 'NCHW'))
    if bias is not None:
        out = out + bias.reshape(1, -1, 1, 1)
    return out


if __name__ == "__main__":
    # MetaConvTranspose2d(4, 8, kernel_size=3, stride=2, padding=1,
    #                     output_padding=1, bias=True)
    # (forward(x, output_size=None): self._output_padding resolves to the
    #  constructor's output_padding; handled statically here.)
    N, Cin, Cout, H, W, kH, kW = 2, 4, 8, 16, 16, 3, 3
    stride, padding, output_padding, dilation = (2, 2), (1, 1), (1, 1), (1, 1)

    key = jax.random.PRNGKey(0)
    kx, kwt, kb = jax.random.split(key, 3)
    bound = 1.0 / (Cin * kH * kW) ** 0.5     # deterministic, PyTorch-style scale
    weight = jax.random.uniform(kwt, (Cin, Cout, kH, kW), jnp.float32,
                                -bound, bound)
    bias = jax.random.uniform(kb, (Cout,), jnp.float32, -bound, bound)
    x = jax.random.normal(kx, (N, Cin, H, W), jnp.float32)

    out = meta_conv_transpose2d(x, weight, bias, stride, padding,
                                output_padding, dilation)
    out = jax.block_until_ready(out)

    ref = _reference_conv_transpose2d(x, weight, bias, stride, padding,
                                      output_padding, dilation)
    assert out.shape == ref.shape == (N, Cout, 32, 32), out.shape
    assert jnp.allclose(out, ref, atol=1e-4, rtol=1e-4), \
        float(jnp.max(jnp.abs(out - ref)))
    print("KERNEL_OK")
</pallas_src>

<mosaic_0001>
module attributes {stable_mosaic.version = 11 : i64} {
  func.func @kernel(%arg0: i32, %arg1: memref<1x17x17x4xf32, #tpu.memory_space<vmem>>, %arg2: memref<4x128xf32, #tpu.memory_space<vmem>>, %arg3: memref<8x128xf32, #tpu.memory_space<vmem>>, %arg4: memref<8x128xf32, #tpu.memory_space<vmem>>, %arg5: memref<16x128xf32, #tpu.memory_space<vmem>>, %arg6: memref<1x128xf32, #tpu.memory_space<vmem>>, %arg7: memref<1x4x256x128xf32, #tpu.memory_space<vmem>>, %arg8: memref<256x16xf32, #tpu.memory_space<vmem>>) attributes {dimension_semantics = [#tpu.dimension_semantics<parallel>], iteration_bounds = array<i64: 2>, scalar_prefetch = 0 : i64, scratch_operands = 1 : i64, tpu.core_type = #tpu.core_type<tc>, window_params = [{transform_indices = @transform_0, window_bounds = array<i64: 1, 17, 17, 4>}, {pipeline_mode = #tpu.pipeline_mode<synchronous>, transform_indices = @transform_1, window_bounds = array<i64: 4, 128>}, {pipeline_mode = #tpu.pipeline_mode<synchronous>, transform_indices = @transform_2, window_bounds = array<i64: 8, 128>}, {pipeline_mode = #tpu.pipeline_mode<synchronous>, transform_indices = @transform_3, window_bounds = array<i64: 8, 128>}, {pipeline_mode = #tpu.pipeline_mode<synchronous>, transform_indices = @transform_4, window_bounds = array<i64: 16, 128>}, {pipeline_mode = #tpu.pipeline_mode<synchronous>, transform_indices = @transform_5, window_bounds = array<i64: 1, 128>}, {transform_indices = @transform_6, window_bounds = array<i64: 1, 4, 256, 128>}]} {
    %c0 = arith.constant 0 : index
    %c0_0 = arith.constant 0 : index
    %0 = vector.load %arg6[%c0, %c0_0] : memref<1x128xf32, #tpu.memory_space<vmem>>, vector<1x128xf32>
    %c0_1 = arith.constant 0 : index
    %c0_2 = arith.constant 0 : index
    %c0_3 = arith.constant 0 : index
    %c0_4 = arith.constant 0 : index
    %1 = vector.load %arg1[%c0_1, %c0_2, %c0_3, %c0_4] : memref<1x17x17x4xf32, #tpu.memory_space<vmem>>, vector<1x16x16x4xf32>
    %2 = vector.shape_cast %1 : vector<1x16x16x4xf32> to vector<16x16x4xf32>
    %3 = vector.shape_cast %2 : vector<16x16x4xf32> to vector<256x4xf32>
    %c0_5 = arith.constant 0 : index
    %c0_6 = arith.constant 0 : index
    %4 = vector.load %arg8[%c0_5, %c0_6] : memref<256x16xf32, #tpu.memory_space<vmem>>, vector<256x4xf32>
    tpu.vector_store %arg8[%c0_5, %c0_6], %3 {strides = array<i32>} : memref<256x16xf32, #tpu.memory_space<vmem>>, vector<256x4xf32>,
    %c0_7 = arith.constant 0 : index
    %c0_8 = arith.constant 0 : index
    %5 = vector.load %arg8[%c0_7, %c0_8] : memref<256x16xf32, #tpu.memory_space<vmem>>, vector<256x4xf32>
    %c0_9 = arith.constant 0 : index
    %c0_10 = arith.constant 0 : index
    %6 = vector.load %arg2[%c0_9, %c0_10] : memref<4x128xf32, #tpu.memory_space<vmem>>, vector<4x128xf32>
    %cst = arith.constant dense<0.000000e+00> : vector<256x128xf32>
    %7 = tpu.matmul %5, %6, %cst {dimension_numbers = #tpu.dot_dimension_numbers<[1], [0], [0], [1], [0, 0, 1, 1], [], []>} : vector<256x4xf32>, vector<4x128xf32>, vector<256x128xf32> -> vector<256x128xf32>
    %8 = vector.broadcast %0 : vector<1x128xf32> to vector<256x128xf32>
    %9 = arith.addf %7, %8 : vector<256x128xf32>
    %c0_11 = arith.constant 0 : index
    %c0_12 = arith.constant 0 : index
    %c0_13 = arith.constant 0 : index
    %c0_14 = arith.constant 0 : index
    %10 = vector.load %arg7[%c0_11, %c0_12, %c0_13, %c0_14] : memref<1x4x256x128xf32, #tpu.memory_space<vmem>>, vector<1x1x256x128xf32>
    %11 = vector.shape_cast %10 : vector<1x1x256x128xf32> to vector<256x128xf32>
    %12 = vector.shape_cast %9 : vector<256x128xf32> to vector<1x1x256x128xf32>
    tpu.vector_store %arg7[%c0_11, %c0_12, %c0_13, %c0_14], %12 {strides = array<i32>} : memref<1x4x256x128xf32, #tpu.memory_space<vmem>>, vector<1x1x256x128xf32>,
    %c0_15 = arith.constant 0 : index
    %c0_16 = arith.constant 0 : index
    %c1 = arith.constant 1 : index
    %c0_17 = arith.constant 0 : index
    %13 = vector.load %arg1[%c0_15, %c0_16, %c1, %c0_17] : memref<1x17x17x4xf32, #tpu.memory_space<vmem>>, vector<1x16x16x4xf32>
    %14 = vector.shape_cast %13 : vector<1x16x16x4xf32> to vector<16x16x4xf32>
    %15 = vector.shape_cast %14 : vector<16x16x4xf32> to vector<256x4xf32>
    %c0_18 = arith.constant 0 : index
    %c0_19 = arith.constant 0 : index
    %16 = vector.load %arg8[%c0_18, %c0_19] : memref<256x16xf32, #tpu.memory_space<vmem>>, vector<256x4xf32>
    tpu.vector_store %arg8[%c0_18, %c0_19], %15 {strides = array<i32>} : memref<256x16xf32, #tpu.memory_space<vmem>>, vector<256x4xf32>,
    %c0_20 = arith.constant 0 : index
    %c0_21 = arith.constant 0 : index
    %c0_22 = arith.constant 0 : index
    %c0_23 = arith.constant 0 : index
    %17 = vector.load %arg1[%c0_20, %c0_21, %c0_22, %c0_23] : memref<1x17x17x4xf32, #tpu.memory_space<vmem>>, vector<1x16x16x4xf32>
    %18 = vector.shape_cast %17 : vector<1x16x16x4xf32> to vector<16x16x4xf32>
    %19 = vector.shape_cast %18 : vector<16x16x4xf32> to vector<256x4xf32>
    %c0_24 = arith.constant 0 : index
    %c4 = arith.constant 4 : index
    %20 = vector.load %arg8[%c0_24, %c4] : memref<256x16xf32, #tpu.memory_space<vmem>>, vector<256x4xf32>
    tpu.vector_store %arg8[%c0_24, %c4], %19 {strides = array<i32>} : memref<256x16xf32, #tpu.memory_space<vmem>>, vector<256x4xf32>,
    %c0_25 = arith.constant 0 : index
    %c0_26 = arith.constant 0 : index
    %21 = vector.load %arg8[%c0_25, %c0_26] : memref<256x16xf32, #tpu.memory_space<vmem>>, vector<256x8xf32>
    %c0_27 = arith.constant 0 : index
    %c0_28 = arith.constant 0 : index
    %22 = vector.load %arg3[%c0_27, %c0_28] : memref<8x128xf32, #tpu.memory_space<vmem>>, vector<8x128xf32>
    %cst_29 = arith.constant dense<0.000000e+00> : vector<256x128xf32>
    %23 = tpu.matmul %21, %22, %cst_29 {dimension_numbers = #tpu.dot_dimension_numbers<[1], [0], [0], [1], [0, 0, 1, 1], [], []>} : vector<256x8xf32>, vector<8x128xf32>, vector<256x128xf32> -> vector<256x128xf32>
    %24 = vector.broadcast %0 : vector<1x128xf32> to vector<256x128xf32>
    %25 = arith.addf %23, %24 : vector<256x128xf32>
    %c0_30 = arith.constant 0 : index
    %c1_31 = arith.constant 1 : index
    %c0_32 = arith.constant 0 : index
    %c0_33 = arith.constant 0 : index
    %26 = vector.load %arg7[%c0_30, %c1_31, %c0_32, %c0_33] : memref<1x4x256x128xf32, #tpu.memory_space<vmem>>, vector<1x1x256x128xf32>
    %27 = vector.shape_cast %26 : vector<1x1x256x128xf32> to vector<256x128xf32>
    %28 = vector.shape_cast %25 : vector<256x128xf32> to vector<1x1x256x128xf32>
    tpu.vector_store %arg7[%c0_30, %c1_31, %c0_32, %c0_33], %28 {strides = array<i32>} : memref<1x4x256x128xf32, #tpu.memory_space<vmem>>, vector<1x1x256x128xf32>,
    %c0_34 = arith.constant 0 : index
    %c1_35 = arith.constant 1 : index
    %c0_36 = arith.constant 0 : index
    %c0_37 = arith.constant 0 : index
    %29 = vector.load %arg1[%c0_34, %c1_35, %c0_36, %c0_37] : memref<1x17x17x4xf32, #tpu.memory_space<vmem>>, vector<1x16x16x4xf32>
    %30 = vector.shape_cast %29 : vector<1x16x16x4xf32> to vector<16x16x4xf32>
    %31 = vector.shape_cast %30 : vector<16x16x4xf32> to vector<256x4xf32>
    %c0_38 = arith.constant 0 : index
    %c0_39 = arith.constant 0 : index
    %32 = vector.load %arg8[%c0_38, %c0_39] : memref<256x16xf32, #tpu.memory_space<vmem>>, vector<256x4xf32>
    tpu.vector_store %arg8[%c0_38, %c0_39], %31 {strides = array<i32>} : memref<256x16xf32, #tpu.memory_space<vmem>>, vector<256x4xf32>,
    %c0_40 = arith.constant 0 : index
    %c0_41 = arith.constant 0 : index
    %c0_42 = arith.constant 0 : index
    %c0_43 = arith.constant 0 : index
    %33 = vector.load %arg1[%c0_40, %c0_41, %c0_42, %c0_43] : memref<1x17x17x4xf32, #tpu.memory_space<vmem>>, vector<1x16x16x4xf32>
    %34 = vector.shape_cast %33 : vector<1x16x16x4xf32> to vector<16x16x4xf32>
    %35 = vector.shape_cast %34 : vector<16x16x4xf32> to vector<256x4xf32>
    %c0_44 = arith.constant 0 : index
    %c4_45 = arith.constant 4 : index
    %36 = vector.load %arg8[%c0_44, %c4_45] : memref<256x16xf32, #tpu.memory_space<vmem>>, vector<256x4xf32>
    tpu.vector_store %arg8[%c0_44, %c4_45], %35 {strides = array<i32>} : memref<256x16xf32, #tpu.memory_space<vmem>>, vector<256x4xf32>,
    %c0_46 = arith.constant 0 : index
    %c0_47 = arith.constant 0 : index
    %37 = vector.load %arg8[%c0_46, %c0_47] : memref<256x16xf32, #tpu.memory_space<vmem>>, vector<256x8xf32>
    %c0_48 = arith.constant 0 : index
    %c0_49 = arith.constant 0 : index
    %38 = vector.load %arg4[%c0_48, %c0_49] : memref<8x128xf32, #tpu.memory_space<vmem>>, vector<8x128xf32>
    %cst_50 = arith.constant dense<0.000000e+00> : vector<256x128xf32>
    %39 = tpu.matmul %37, %38, %cst_50 {dimension_numbers = #tpu.dot_dimension_numbers<[1], [0], [0], [1], [0, 0, 1, 1], [], []>} : vector<256x8xf32>, vector<8x128xf32>, vector<256x128xf32> -> vector<256x128xf32>
    %40 = vector.broadcast %0 : vector<1x128xf32> to vector<256x128xf32>
    %41 = arith.addf %39, %40 : vector<256x128xf32>
    %c0_51 = arith.constant 0 : index
    %c2 = arith.constant 2 : index
    %c0_52 = arith.constant 0 : index
    %c0_53 = arith.constant 0 : index
    %42 = vector.load %arg7[%c0_51, %c2, %c0_52, %c0_53] : memref<1x4x256x128xf32, #tpu.memory_space<vmem>>, vector<1x1x256x128xf32>
    %43 = vector.shape_cast %42 : vector<1x1x256x128xf32> to vector<256x128xf32>
    %44 = vector.shape_cast %41 : vector<256x128xf32> to vector<1x1x256x128xf32>
    tpu.vector_store %arg7[%c0_51, %c2, %c0_52, %c0_53], %44 {strides = array<i32>} : memref<1x4x256x128xf32, #tpu.memory_space<vmem>>, vector<1x1x256x128xf32>,
    %c0_54 = arith.constant 0 : index
    %c1_55 = arith.constant 1 : index
    %c1_56 = arith.constant 1 : index
    %c0_57 = arith.constant 0 : index
    %45 = vector.load %arg1[%c0_54, %c1_55, %c1_56, %c0_57] : memref<1x17x17x4xf32, #tpu.memory_space<vmem>>, vector<1x16x16x4xf32>
    %46 = vector.shape_cast %45 : vector<1x16x16x4xf32> to vector<16x16x4xf32>
    %47 = vector.shape_cast %46 : vector<16x16x4xf32> to vector<256x4xf32>
    %c0_58 = arith.constant 0 : index
    %c0_59 = arith.constant 0 : index
    %48 = vector.load %arg8[%c0_58, %c0_59] : memref<256x16xf32, #tpu.memory_space<vmem>>, vector<256x4xf32>
    tpu.vector_store %arg8[%c0_58, %c0_59], %47 {strides = array<i32>} : memref<256x16xf32, #tpu.memory_space<vmem>>, vector<256x4xf32>,
    %c0_60 = arith.constant 0 : index
    %c1_61 = arith.constant 1 : index
    %c0_62 = arith.constant 0 : index
    %c0_63 = arith.constant 0 : index
    %49 = vector.load %arg1[%c0_60, %c1_61, %c0_62, %c0_63] : memref<1x17x17x4xf32, #tpu.memory_space<vmem>>, vector<1x16x16x4xf32>
    %50 = vector.shape_cast %49 : vector<1x16x16x4xf32> to vector<16x16x4xf32>
    %51 = vector.shape_cast %50 : vector<16x16x4xf32> to vector<256x4xf32>
    %c0_64 = arith.constant 0 : index
    %c4_65 = arith.constant 4 : index
    %52 = vector.load %arg8[%c0_64, %c4_65] : memref<256x16xf32, #tpu.memory_space<vmem>>, vector<256x4xf32>
    tpu.vector_store %arg8[%c0_64, %c4_65], %51 {strides = array<i32>} : memref<256x16xf32, #tpu.memory_space<vmem>>, vector<256x4xf32>,
    %c0_66 = arith.constant 0 : index
    %c0_67 = arith.constant 0 : index
    %c1_68 = arith.constant 1 : index
    %c0_69 = arith.constant 0 : index
    %53 = vector.load %arg1[%c0_66, %c0_67, %c1_68, %c0_69] : memref<1x17x17x4xf32, #tpu.memory_space<vmem>>, vector<1x16x16x4xf32>
    %54 = vector.shape_cast %53 : vector<1x16x16x4xf32> to vector<16x16x4xf32>
    %55 = vector.shape_cast %54 : vector<16x16x4xf32> to vector<256x4xf32>
    %c0_70 = arith.constant 0 : index
    %c8 = arith.constant 8 : index
    %56 = vector.load %arg8[%c0_70, %c8] : memref<256x16xf32, #tpu.memory_space<vmem>>, vector<256x4xf32>
    tpu.vector_store %arg8[%c0_70, %c8], %55 {strides = array<i32>} : memref<256x16xf32, #tpu.memory_space<vmem>>, vector<256x4xf32>,
    %c0_71 = arith.constant 0 : index
    %c0_72 = arith.constant 0 : index
    %c0_73 = arith.constant 0 : index
    %c0_74 = arith.constant 0 : index
    %57 = vector.load %arg1[%c0_71, %c0_72, %c0_73, %c0_74] : memref<1x17x17x4xf32, #tpu.memory_space<vmem>>, vector<1x16x16x4xf32>
    %58 = vector.shape_cast %57 : vector<1x16x16x4xf32> to vector<16x16x4xf32>
    %59 = vector.shape_cast %58 : vector<16x16x4xf32> to vector<256x4xf32>
    %c0_75 = arith.constant 0 : index
    %c12 = arith.constant 12 : index
    %60 = vector.load %arg8[%c0_75, %c12] : memref<256x16xf32, #tpu.memory_space<vmem>>, vector<256x4xf32>
    tpu.vector_store %arg8[%c0_75, %c12], %59 {strides = array<i32>} : memref<256x16xf32, #tpu.memory_space<vmem>>, vector<256x4xf32>,
    %c0_76 = arith.constant 0 : index
    %c0_77 = arith.constant 0 : index
    %61 = vector.load %arg8[%c0_76, %c0_77] : memref<256x16xf32, #tpu.memory_space<vmem>>, vector<256x16xf32>
    %c0_78 = arith.constant 0 : index
    %c0_79 = arith.constant 0 : index
    %62 = vector.load %arg5[%c0_78, %c0_79] : memref<16x128xf32, #tpu.memory_space<vmem>>, vector<16x128xf32>
    %cst_80 = arith.constant dense<0.000000e+00> : vector<256x128xf32>
    %63 = tpu.matmul %61, %62, %cst_80 {dimension_numbers = #tpu.dot_dimension_numbers<[1], [0], [0], [1], [0, 0, 1, 1], [], []>} : vector<256x16xf32>, vector<16x128xf32>, vector<256x128xf32> -> vector<256x128xf32>
    %64 = vector.broadcast %0 : vector<1x128xf32> to vector<256x128xf32>
    %65 = arith.addf %63, %64 : vector<256x128xf32>
    %c0_81 = arith.constant 0 : index
    %c3 = arith.constant 3 : index
    %c0_82 = arith.constant 0 : index
    %c0_83 = arith.constant 0 : index
    %66 = vector.load %arg7[%c0_81, %c3, %c0_82, %c0_83] : memref<1x4x256x128xf32, #tpu.memory_space<vmem>>, vector<1x1x256x128xf32>
    %67 = vector.shape_cast %66 : vector<1x1x256x128xf32> to vector<256x128xf32>
    %68 = vector.shape_cast %65 : vector<256x128xf32> to vector<1x1x256x128xf32>
    tpu.vector_store %arg7[%c0_81, %c3, %c0_82, %c0_83], %68 {strides = array<i32>} : memref<1x4x256x128xf32, #tpu.memory_space<vmem>>, vector<1x1x256x128xf32>,
    return
  }
  func.func @transform_0(%arg0: i32) -> (i32, i32, i32, i32) {
    %c0_i32 = arith.constant 0 : i32
    %c0_i32_0 = arith.constant 0 : i32
    %c0_i32_1 = arith.constant 0 : i32
    %c0_i32_2 = arith.constant 0 : i32
    return %arg0, %c0_i32, %c0_i32_0, %c0_i32_1 : i32, i32, i32, i32
  }
  func.func @transform_1(%arg0: i32) -> (i32, i32) {
    %c0_i32 = arith.constant 0 : i32
    %c0_i32_0 = arith.constant 0 : i32
    %c0_i32_1 = arith.constant 0 : i32
    return %c0_i32, %c0_i32_0 : i32, i32
  }
  func.func @transform_2(%arg0: i32) -> (i32, i32) {
    %c0_i32 = arith.constant 0 : i32
    %c0_i32_0 = arith.constant 0 : i32
    %c0_i32_1 = arith.constant 0 : i32
    return %c0_i32, %c0_i32_0 : i32, i32
  }
  func.func @transform_3(%arg0: i32) -> (i32, i32) {
    %c0_i32 = arith.constant 0 : i32
    %c0_i32_0 = arith.constant 0 : i32
    %c0_i32_1 = arith.constant 0 : i32
    return %c0_i32, %c0_i32_0 : i32, i32
  }
  func.func @transform_4(%arg0: i32) -> (i32, i32) {
    %c0_i32 = arith.constant 0 : i32
    %c0_i32_0 = arith.constant 0 : i32
    %c0_i32_1 = arith.constant 0 : i32
    return %c0_i32, %c0_i32_0 : i32, i32
  }
  func.func @transform_5(%arg0: i32) -> (i32, i32) {
    %c0_i32 = arith.constant 0 : i32
    %c0_i32_0 = arith.constant 0 : i32
    %c0_i32_1 = arith.constant 0 : i32
    return %c0_i32, %c0_i32_0 : i32, i32
  }
  func.func @transform_6(%arg0: i32) -> (i32, i32, i32, i32) {
    %c0_i32 = arith.constant 0 : i32
    %c0_i32_0 = arith.constant 0 : i32
    %c0_i32_1 = arith.constant 0 : i32
    %c0_i32_2 = arith.constant 0 : i32
    return %arg0, %c0_i32, %c0_i32_0, %c0_i32_1 : i32, i32, i32, i32
  }
}

</mosaic_0001>

<llo_original>
// kernel: tpu_custom_call.1
$region0: #{tpu_custom_call.1}
  #allocation0 [shape = 'u32[]', space=smem, size = 0x4, offset = 0x4, fixed_abs, tag = 'smem constant byte address 0x4 - core index']
  #allocation1 [shape = 'u32[144,128]{1,0:T(1,128)}', space=vmem, size = 0x12000, scoped, tag = 'internal scratch']
  #allocation2 [shape = 'f32[256,16]{1,0:T(8,128)}', space=vmem, size = 0x20000, scoped, tag = 'scratch operand']
  %s0 = inlined_call_operand.vmem [shape: f32[2,17,17,4], index: 0, kind: input, shape index: {}]
  %s1 = inlined_call_operand.vmem [shape: f32[4,128], index: 1, kind: input, shape index: {}]
  %s2 = inlined_call_operand.vmem [shape: f32[8,128], index: 2, kind: input, shape index: {}]
  %s3 = inlined_call_operand.vmem [shape: f32[8,128], index: 3, kind: input, shape index: {}]
  %s4 = inlined_call_operand.vmem [shape: f32[16,128], index: 4, kind: input, shape index: {}]
  %s5 = inlined_call_operand.vmem [shape: f32[1,128], index: 5, kind: input, shape index: {}]
  %s6 = inlined_call_operand.hbm [shape: f32[2,4,256,128], index: 6, kind: output, shape index: {}]
  %s7 = sld [smem:[#allocation0]]
  $region57: #{tpu_custom_call.1} parent=0
    _
  %s9 = ssub.s32 1, %s7
  %s10 = scalar_select 0, %s9, %s7
  $region1: #{tpu_custom_call.1} parent=0
    #allocation3 [shape = 'u8[1048576]{0}', space=vmem, size = 0x100000, scoped, tag = 'output window, operand 0']
    #allocation4 [shape = 's32[2]{0}', space=sflag, size = 0x8, scoped, tag = 'scoped memory for tpu_custom_call.1']
    %11 = vsyncpa [#allocation4], 0
    %s12 = scalar_lea.sflag [#allocation4], 1
    %13 = vsyncpa %s12, 0
    loop: start=0, step=1, limit=4
    $region2: #{tpu_custom_call.1} parent=1 // loop_pre_header
      _
    $region3: #{tpu_custom_call.1} parent=1 // loop_header
      %s15 = sphi 0, %s19
      %p16 = scmp.ge.s32.totalorder %s15, 4
      %s25 = sphi 0, %s27
      %s28 = sphi 0, %s25
      %s29 = sphi 0, %s28
      %s45 = sphi 0, %s29
      %s49 = sphi 0, %s49
      %s51 = sphi 0, %s49
      %s52 = sphi 0, %s51
      %s66 = sphi 0, %s52
      %s70 = sphi 0, %s70
      %s72 = sphi 0, %s70
      %s73 = sphi 0, %s72
      %s87 = sphi 0, %s73
      %s91 = sphi 0, %s91
      %s93 = sphi 0, %s91
      %s94 = sphi 0, %s93
      %s108 = sphi 0, %s94
      %s112 = sphi 0, %s112
      %s114 = sphi 0, %s112
      %s115 = sphi 0, %s114
      %s129 = sphi 0, %s115
      %s133 = sphi 0, %s133
      %s135 = sphi 0, %s133
      %s136 = sphi 0, %s135
      %s150 = sphi 0, %s136
      %s156 = sphi 0, %s158
      %s159 = sphi 0, %s156
      %s160 = sphi 0, %s159
      %s176 = sphi 0, %s160
    $region4: #{tpu_custom_call.1} parent=1 // loop_header_branch
      %18 = sbr.rel (%p16) target = $region8
    $region5: #{tpu_custom_call.1} parent=1 // loop_body
      %s20 = ssub.s32 %s15, 1
      %s21 = ssub.s32 %s15, 2
      %s22 = sadd.s32 %s15, 1
      %s23 = ssub.s32 %s15, %s22
      %p24 = scmp.eq.s32.totalorder %s23, 0
      %s26 = sadd.s32 %s25, 1
      %s27 = scalar_select %p24, %s25, %s26
      %p30 = pneg %p24
      %p31 = scmp.eq.s32.totalorder %s15, 1
      %p32 = por %p30, %p31
      %p33 = scmp.ne.s32.totalorder %s25, %s28
      %p34 = scmp.eq.s32.totalorder %s15, 0
      %p35 = por %p33, %p34
      %p36 = scmp.ne.s32.totalorder %s25, %s28
      %p37 = scmp.eq.s32.totalorder %s20, 1
      %p38 = por %p36, %p37
      %p39 = scmp.ne.s32.totalorder %s28, %s29
      %p40 = scmp.eq.s32.totalorder %s20, 0
      %p41 = por %p39, %p40
      %p42 = scmp.ne.s32.totalorder %s28, %s29
      %p43 = scmp.eq.s32.totalorder %s21, 1
      %p44 = por %p42, %p43
      %p46 = scmp.ne.s32.totalorder %s29, %s45
      %p47 = scmp.eq.s32.totalorder %s21, 0
      %p48 = por %p46, %p47
      %s50 = sadd.s32 %s49, 1
      %p53 = scmp.eq.s32.totalorder %s15, 1
      %p54 = scmp.ne.s32.totalorder %s49, %s51
      %p55 = scmp.eq.s32.totalorder %s15, 0
      %p56 = por %p54, %p55
      %p57 = scmp.ne.s32.totalorder %s49, %s51
      %p58 = scmp.eq.s32.totalorder %s20, 1
      %p59 = por %p57, %p58
      %p60 = scmp.ne.s32.totalorder %s51, %s52
      %p61 = scmp.eq.s32.totalorder %s20, 0
      %p62 = por %p60, %p61
      %p63 = scmp.ne.s32.totalorder %s51, %s52
      %p64 = scmp.eq.s32.totalorder %s21, 1
      %p65 = por %p63, %p64
      %p67 = scmp.ne.s32.totalorder %s52, %s66
      %p68 = scmp.eq.s32.totalorder %s21, 0
      %p69 = por %p67, %p68
      %s71 = sadd.s32 %s70, 1
      %p74 = scmp.eq.s32.totalorder %s15, 1
      %p75 = scmp.ne.s32.totalorder %s70, %s72
      %p76 = scmp.eq.s32.totalorder %s15, 0
      %p77 = por %p75, %p76
      %p78 = scmp.ne.s32.totalorder %s70, %s72
      %p79 = scmp.eq.s32.totalorder %s20, 1
      %p80 = por %p78, %p79
      %p81 = scmp.ne.s32.totalorder %s72, %s73
      %p82 = scmp.eq.s32.totalorder %s20, 0
      %p83 = por %p81, %p82
      %p84 = scmp.ne.s32.totalorder %s72, %s73
      %p85 = scmp.eq.s32.totalorder %s21, 1
      %p86 = por %p84, %p85
      %p88 = scmp.ne.s32.totalorder %s73, %s87
      %p89 = scmp.eq.s32.totalorder %s21, 0
      %p90 = por %p88, %p89
      %s92 = sadd.s32 %s91, 1
      %p95 = scmp.eq.s32.totalorder %s15, 1
      %p96 = scmp.ne.s32.totalorder %s91, %s93
      %p97 = scmp.eq.s32.totalorder %s15, 0
      %p98 = por %p96, %p97
      %p99 = scmp.ne.s32.totalorder %s91, %s93
      %p100 = scmp.eq.s32.totalorder %s20, 1
      %p101 = por %p99, %p100
      %p102 = scmp.ne.s32.totalorder %s93, %s94
      %p103 = scmp.eq.s32.totalorder %s20, 0
      %p104 = por %p102, %p103
      %p105 = scmp.ne.s32.totalorder %s93, %s94
      %p106 = scmp.eq.s32.totalorder %s21, 1
      %p107 = por %p105, %p106
      %p109 = scmp.ne.s32.totalorder %s94, %s108
      %p110 = scmp.eq.s32.totalorder %s21, 0
      %p111 = por %p109, %p110
      %s113 = sadd.s32 %s112, 1
      %p116 = scmp.eq.s32.totalorder %s15, 1
      %p117 = scmp.ne.s32.totalorder %s112, %s114
      %p118 = scmp.eq.s32.totalorder %s15, 0
      %p119 = por %p117, %p118
      %p120 = scmp.ne.s32.totalorder %s112, %s114
      %p121 = scmp.eq.s32.totalorder %s20, 1
      %p122 = por %p120, %p121
      %p123 = scmp.ne.s32.totalorder %s114, %s115
      %p124 = scmp.eq.s32.totalorder %s20, 0
      %p125 = por %p123, %p124
      %p126 = scmp.ne.s32.totalorder %s114, %s115
      %p127 = scmp.eq.s32.totalorder %s21, 1
      %p128 = por %p126, %p127
      %p130 = scmp.ne.s32.totalorder %s115, %s129
      %p131 = scmp.eq.s32.totalorder %s21, 0
      %p132 = por %p130, %p131
      %s134 = sadd.s32 %s133, 1
      %p137 = scmp.eq.s32.totalorder %s15, 1
      %p138 = scmp.ne.s32.totalorder %s133, %s135
      %p139 = scmp.eq.s32.totalorder %s15, 0
      %p140 = por %p138, %p139
      %p141 = scmp.ne.s32.totalorder %s133, %s135
      %p142 = scmp.eq.s32.totalorder %s20, 1
      %p143 = por %p141, %p142
      %p144 = scmp.ne.s32.totalorder %s135, %s136
      %p145 = scmp.eq.s32.totalorder %s20, 0
      %p146 = por %p144, %p145
      %p147 = scmp.ne.s32.totalorder %s135, %s136
      %p148 = scmp.eq.s32.totalorder %s21, 1
      %p149 = por %p147, %p148
      %p151 = scmp.ne.s32.totalorder %s136, %s150
      %p152 = scmp.eq.s32.totalorder %s21, 0
      %p153 = por %p151, %p152
      %s154 = ssub.s32 %s15, %s22
      %p155 = scmp.eq.s32.totalorder %s154, 0
      %s157 = sadd.s32 %s156, 1
      %s158 = scalar_select %p155, %s156, %s157
      %p161 = pneg %p155
      %p162 = scmp.eq.s32.totalorder %s15, 1
      %p163 = por %p161, %p162
      %p164 = scmp.ne.s32.totalorder %s156, %s159
      %p165 = scmp.eq.s32.totalorder %s15, 0
      %p166 = por %p164, %p165
      %p167 = scmp.ne.s32.totalorder %s156, %s159
      %p168 = scmp.eq.s32.totalorder %s20, 1
      %p169 = por %p167, %p168
      %p170 = scmp.ne.s32.totalorder %s159, %s160
      %p171 = scmp.eq.s32.totalorder %s20, 0
      %p172 = por %p170, %p171
      %p173 = scmp.ne.s32.totalorder %s159, %s160
      %p174 = scmp.eq.s32.totalorder %s21, 1
      %p175 = por %p173, %p174
      %p177 = scmp.ne.s32.totalorder %s160, %s176
      %p178 = scmp.eq.s32.totalorder %s21, 0
      %p179 = por %p177, %p178
      %p180 = scmp.le.s32.totalorder 1, %s15
      %p181 = scmp.lt.s32.totalorder %s15, 3
      %p182 = pnand %p180, %p181
      %p183 = pneg %p182
      // Predicated region
      $region9: #{tpu_custom_call.1} parent=5 // pred_check
        _
      $region10: #{tpu_custom_call.1} parent=5 // pred_check_branch
        %185 = sbr.rel (%p182) target = $region12
      $region11: #{tpu_custom_call.1} parent=5 // pred_region
        %s186 = ssub.s32 %s15, 1
        // Predicated region
        $region13: #{tpu_custom_call.1} parent=11 // pred_check
          %p187 = pneg %p62
        $region14: #{tpu_custom_call.1} parent=11 // pred_check_branch
          %189 = sbr.rel (%p187) target = $region16
        $region15: #{tpu_custom_call.1} parent=11 // pred_region
          _
        $region16: #{tpu_custom_call.1} parent=11 // pred_fallthru
          _
        // Predicated region
        $region17: #{tpu_custom_call.1} parent=11 // pred_check
          %p190 = pneg %p83
        $region18: #{tpu_custom_call.1} parent=11 // pred_check_branch
          %192 = sbr.rel (%p190) target = $region20
        $region19: #{tpu_custom_call.1} parent=11 // pred_region
          _
        $region20: #{tpu_custom_call.1} parent=11 // pred_fallthru
          _
        // Predicated region
        $region21: #{tpu_custom_call.1} parent=11 // pred_check
          %p193 = pneg %p104
        $region22: #{tpu_custom_call.1} parent=11 // pred_check_branch
          %195 = sbr.rel (%p193) target = $region24
        $region23: #{tpu_custom_call.1} parent=11 // pred_region
          _
        $region24: #{tpu_custom_call.1} parent=11 // pred_fallthru
          _
        // Predicated region
        $region25: #{tpu_custom_call.1} parent=11 // pred_check
          %p196 = pneg %p125
        $region26: #{tpu_custom_call.1} parent=11 // pred_check_branch
          %198 = sbr.rel (%p196) target = $region28
        $region27: #{tpu_custom_call.1} parent=11 // pred_region
          _
        $region28: #{tpu_custom_call.1} parent=11 // pred_fallthru
          _
        // Predicated region
        $region29: #{tpu_custom_call.1} parent=11 // pred_check
          %p199 = pneg %p146
        $region30: #{tpu_custom_call.1} parent=11 // pred_check_branch
          %201 = sbr.rel (%p199) target = $region32
        $region31: #{tpu_custom_call.1} parent=11 // pred_region
          _
        $region32: #{tpu_custom_call.1} parent=11 // pred_fallthru
          _
      $region12: #{tpu_custom_call.1} parent=5 // pred_fallthru
        _
      %p202 = scmp.lt.s32.totalorder %s15, 2
      // Predicated region
      $region33: #{tpu_custom_call.1} parent=5 // pred_check
        %p203 = pneg %p202
      $region34: #{tpu_custom_call.1} parent=5 // pred_check_branch
        %205 = sbr.rel (%p203) target = $region36
      $region35: #{tpu_custom_call.1} parent=5 // pred_region
        // Predicated region
        $region37: #{tpu_custom_call.1} parent=35 // pred_check
          %p206 = pneg %p35
        $region38: #{tpu_custom_call.1} parent=35 // pred_check_branch
          %208 = sbr.rel (%p206) target = $region40
        $region39: #{tpu_custom_call.1} parent=35 // pred_region
          %p209 = scmp.lt.s32.totalorder %s15, 1
          %s210 = scalar_select %p209, %s15, 1
          %s211 = smul.addr %s210, 51
          %s212 = smul.addr %s211, 8
          %s213 = scalar_lea.vmem %s0, %s212
        $region40: #{tpu_custom_call.1} parent=35 // pred_fallthru
          _
      $region36: #{tpu_custom_call.1} parent=5 // pred_fallthru
        _
      %p214 = scmp.le.s32.totalorder 1, %s15
      %p215 = scmp.lt.s32.totalorder %s15, 3
      %p216 = pnand %p214, %p215
      %p217 = pneg %p216
      // Predicated region
      $region41: #{tpu_custom_call.1} parent=5 // pred_check
        _
      $region42: #{tpu_custom_call.1} parent=5 // pred_check_branch
        %219 = sbr.rel (%p216) target = $region44
      $region43: #{tpu_custom_call.1} parent=5 // pred_region
        %s220 = ssub.s32 %s15, 1
        %p221 = scmp.lt.s32.totalorder %s20, 1
        %s222 = scalar_select %p221, %s20, 1
        %s223 = smul.addr %s222, 51
        %s224 = smul.addr %s223, 8
        %s225 = scalar_lea.vmem %s0, %s224
        %p226 = pneg %p41
        %p227 = pneg %p38
        %p228 = pneg %p62
        %p229 = pneg %p59
        %p230 = pneg %p83
        %p231 = pneg %p80
        %p232 = pneg %p104
        %p233 = pneg %p101
        %p234 = pneg %p125
        %p235 = pneg %p122
        %p236 = pneg %p146
        %p237 = pneg %p143
        %p238 = pneg %p172
        %p239 = pneg %p169
        %s240 = sand.u32 %s159, 1
        %s241 = scalar_lea.sflag [#allocation4], %s240
        %s242 = sand.u32 %s159, 1
        %s243 = smul.addr %s242, 1024
        %s244 = scalar_lea.vmem [#allocation3], %s243
        %p245 = scmp.lt.s32.totalorder %s20, 1
        %s246 = scalar_select %p245, %s20, 1
        %s247 = smul.addr %s246, 51
        %s248 = smul.addr %s247, 8
        %s249 = scalar_lea.vmem %s0, %s248
        %v250 = vld [vmem:[%s5] sm:$0x1]
        %v251 = vld [vmem:[%s249] sm:$0xff]
        %v252 = vld [vmem:[%s249 + $0x8] sm:$0xff]
        %v253 = vld [vmem:[%s249 + $0x18] sm:$0xff]
        %v254 = vld [vmem:[%s249 + $0x20] sm:$0xff]
        %v255 = vld [vmem:[%s249 + $0x30] sm:$0xff]
        %v256 = vld [vmem:[%s249 + $0x38] sm:$0xff]
        %v257 = vld [vmem:[%s249 + $0x48] sm:$0xff]
        %v258 = vld [vmem:[%s249 + $0x50] sm:$0xff]
        %v259 = vld [vmem:[%s249 + $0x60] sm:$0xff]
        %v260 = vld [vmem:[%s249 + $0x68] sm:$0xff]
        %v261 = vld [vmem:[%s249 + $0x78] sm:$0xff]
        %v262 = vld [vmem:[%s249 + $0x80] sm:$0xff]
        %v263 = vld [vmem:[%s249 + $0x90] sm:$0xff]
        %v264 = vld [vmem:[%s249 + $0x98] sm:$0xff]
        %v265 = vld [vmem:[%s249 + $0xa8] sm:$0xff]
        %v266 = vld [vmem:[%s249 + $0xb0] sm:$0xff]
        %v267 = vld [vmem:[%s249 + $0xc0] sm:$0xff]
        %v268 = vld [vmem:[%s249 + $0xc8] sm:$0xff]
        %v269 = vld [vmem:[%s249 + $0xd8] sm:$0xff]
        %v270 = vld [vmem:[%s249 + $0xe0] sm:$0xff]
        %v271 = vld [vmem:[%s249 + $0xf0] sm:$0xff]
        %v272 = vld [vmem:[%s249 + $0xf8] sm:$0xff]
        %v273 = vld [vmem:[%s249 + $0x108] sm:$0xff]
        %v274 = vld [vmem:[%s249 + $0x110] sm:$0xff]
        %v275 = vld [vmem:[%s249 + $0x120] sm:$0xff]
        %v276 = vld [vmem:[%s249 + $0x128] sm:$0xff]
        %v277 = vld [vmem:[%s249 + $0x138] sm:$0xff]
        %v278 = vld [vmem:[%s249 + $0x140] sm:$0xff]
        %v279 = vld [vmem:[%s249 + $0x150] sm:$0xff]
        %v280 = vld [vmem:[%s249 + $0x158] sm:$0xff]
        %v281 = vld [vmem:[%s249 + $0x168] sm:$0xff]
        %v282 = vld [vmem:[%s249 + $0x170] sm:$0xff]
        %vm283 = vcmask 31744
        %284 = vst.msk [vmem:[#allocation2] sm:$0xff] %vm283, %v251
        %285 = vst.msk [vmem:[#allocation2 + $0x8] sm:$0xff] %vm283, %v252
        %286 = vst.msk [vmem:[#allocation2 + $0x10] sm:$0xff] %vm283, %v253
        %287 = vst.msk [vmem:[#allocation2 + $0x18] sm:$0xff] %vm283, %v254
        %288 = vst.msk [vmem:[#allocation2 + $0x20] sm:$0xff] %vm283, %v255
        %289 = vst.msk [vmem:[#allocation2 + $0x28] sm:$0xff] %vm283, %v256
        %290 = vst.msk [vmem:[#allocation2 + $0x30] sm:$0xff] %vm283, %v257
        %291 = vst.msk [vmem:[#allocation2 + $0x38] sm:$0xff] %vm283, %v258
        %292 = vst.msk [vmem:[#allocation2 + $0x40] sm:$0xff] %vm283, %v259
        %293 = vst.msk [vmem:[#allocation2 + $0x48] sm:$0xff] %vm283, %v260
        %294 = vst.msk [vmem:[#allocation2 + $0x50] sm:$0xff] %vm283, %v261
        %295 = vst.msk [vmem:[#allocation2 + $0x58] sm:$0xff] %vm283, %v262
        %296 = vst.msk [vmem:[#allocation2 + $0x60] sm:$0xff] %vm283, %v263
        %297 = vst.msk [vmem:[#allocation2 + $0x68] sm:$0xff] %vm283, %v264
        %298 = vst.msk [vmem:[#allocation2 + $0x70] sm:$0xff] %vm283, %v265
        %299 = vst.msk [vmem:[#allocation2 + $0x78] sm:$0xff] %vm283, %v266
        %300 = vst.msk [vmem:[#allocation2 + $0x80] sm:$0xff] %vm283, %v267
        %301 = vst.msk [vmem:[#allocation2 + $0x88] sm:$0xff] %vm283, %v268
        %302 = vst.msk [vmem:[#allocation2 + $0x90] sm:$0xff] %vm283, %v269
        %303 = vst.msk [vmem:[#allocation2 + $0x98] sm:$0xff] %vm283, %v270
        %304 = vst.msk [vmem:[#allocation2 + $0xa0] sm:$0xff] %vm283, %v271
        %305 = vst.msk [vmem:[#allocation2 + $0xa8] sm:$0xff] %vm283, %v272
        %306 = vst.msk [vmem:[#allocation2 + $0xb0] sm:$0xff] %vm283, %v273
        %307 = vst.msk [vmem:[#allocation2 + $0xb8] sm:$0xff] %vm283, %v274
        %308 = vst.msk [vmem:[#allocation2 + $0xc0] sm:$0xff] %vm283, %v275
        %309 = vst.msk [vmem:[#allocation2 + $0xc8] sm:$0xff] %vm283, %v276
        %310 = vst.msk [vmem:[#allocation2 + $0xd0] sm:$0xff] %vm283, %v277
        %311 = vst.msk [vmem:[#allocation2 + $0xd8] sm:$0xff] %vm283, %v278
        %312 = vst.msk [vmem:[#allocation2 + $0xe0] sm:$0xff] %vm283, %v279
        %313 = vst.msk [vmem:[#allocation2 + $0xe8] sm:$0xff] %vm283, %v280
        %314 = vst.msk [vmem:[#allocation2 + $0xf0] sm:$0xff] %vm283, %v281
        %315 = vst.msk [vmem:[#allocation2 + $0xf8] sm:$0xff] %vm283, %v282
        %v316 = vld [vmem:[#allocation2] sm:$0xff]
        %v317 = vld [vmem:[#allocation2 + $0x8] sm:$0xff]
        %v318 = vld [vmem:[#allocation2 + $0x10] sm:$0xff]
        %v319 = vld [vmem:[#allocation2 + $0x18] sm:$0xff]
        %v320 = vld [vmem:[#allocation2 + $0x20] sm:$0xff]
        %v321 = vld [vmem:[#allocation2 + $0x28] sm:$0xff]
        %v322 = vld [vmem:[#allocation2 + $0x30] sm:$0xff]
        %v323 = vld [vmem:[#allocation2 + $0x38] sm:$0xff]
        %v324 = vld [vmem:[#allocation2 + $0x40] sm:$0xff]
        %v325 = vld [vmem:[#allocation2 + $0x48] sm:$0xff]
        %v326 = vld [vmem:[#allocation2 + $0x50] sm:$0xff]
        %v327 = vld [vmem:[#allocation2 + $0x58] sm:$0xff]
        %v328 = vld [vmem:[#allocation2 + $0x60] sm:$0xff]
        %v329 = vld [vmem:[#allocation2 + $0x68] sm:$0xff]
        %v330 = vld [vmem:[#allocation2 + $0x70] sm:$0xff]
        %v331 = vld [vmem:[#allocation2 + $0x78] sm:$0xff]
        %v332 = vld [vmem:[#allocation2 + $0x80] sm:$0xff]
        %v333 = vld [vmem:[#allocation2 + $0x88] sm:$0xff]
        %v334 = vld [vmem:[#allocation2 + $0x90] sm:$0xff]
        %v335 = vld [vmem:[#allocation2 + $0x98] sm:$0xff]
        %v336 = vld [vmem:[#allocation2 + $0xa0] sm:$0xff]
        %v337 = vld [vmem:[#allocation2 + $0xa8] sm:$0xff]
        %v338 = vld [vmem:[#allocation2 + $0xb0] sm:$0xff]
        %v339 = vld [vmem:[#allocation2 + $0xb8] sm:$0xff]
        %v340 = vld [vmem:[#allocation2 + $0xc0] sm:$0xff]
        %v341 = vld [vmem:[#allocation2 + $0xc8] sm:$0xff]
        %v342 = vld [vmem:[#allocation2 + $0xd0] sm:$0xff]
        %v343 = vld [vmem:[#allocation2 + $0xd8] sm:$0xff]
        %v344 = vld [vmem:[#allocation2 + $0xe0] sm:$0xff]
        %v345 = vld [vmem:[#allocation2 + $0xe8] sm:$0xff]
        %v346 = vld [vmem:[#allocation2 + $0xf0] sm:$0xff]
        %v347 = vld [vmem:[#allocation2 + $0xf8] sm:$0xff]
        %v348 = vld [vmem:[%s1] sm:$0xf]
        %v350 = vlaneseq
        %v351 = vshrl.u32 %v350, 7
        %v352 = vsub.s32 0, %v351
        %v353 = vrot.slane %v250, %v352
        %v356 = vsel %vm283, %v316, 0
        %v359 = vsel %vm283, %v317, 0
        %v362 = vsel %vm283, %v318, 0
        %v365 = vsel %vm283, %v319, 0
        %v368 = vsel %vm283, %v320, 0
        %v371 = vsel %vm283, %v321, 0
        %v374 = vsel %vm283, %v322, 0
        %v377 = vsel %vm283, %v323, 0
        %v380 = vsel %vm283, %v324, 0
        %v383 = vsel %vm283, %v325, 0
        %v386 = vsel %vm283, %v326, 0
        %v389 = vsel %vm283, %v327, 0
        %v392 = vsel %vm283, %v328, 0
        %v395 = vsel %vm283, %v329, 0
        %v398 = vsel %vm283, %v330, 0
        %v401 = vsel %vm283, %v331, 0
        %v404 = vsel %vm283, %v332, 0
        %v407 = vsel %vm283, %v333, 0
        %v410 = vsel %vm283, %v334, 0
        %v413 = vsel %vm283, %v335, 0
        %v416 = vsel %vm283, %v336, 0
        %v419 = vsel %vm283, %v337, 0
        %v422 = vsel %vm283, %v338, 0
        %v425 = vsel %vm283, %v339, 0
        %v428 = vsel %vm283, %v340, 0
        %v431 = vsel %vm283, %v341, 0
        %v434 = vsel %vm283, %v342, 0
        %v437 = vsel %vm283, %v343, 0
        %v440 = vsel %vm283, %v344, 0
        %v443 = vsel %vm283, %v345, 0
        %v446 = vsel %vm283, %v346, 0
        %v449 = vsel %vm283, %v347, 0
        %vm451 = vcmask 1043456
        %v453 = vsel %vm451, %v348, 0
        %455 = vmatprep.subr.mxu0 0.0
        %456 = vmatpush1.msra.mxu0 0.0
        %457 = vmatprep.subr.mxu0 0.0
        %458 = vmatpush1.msra.mxu0 0.0
        %459 = vmatprep.subr.mxu0 0.0
        %460 = vmatpush1.msra.mxu0 0.0
        %461 = vmatprep.subr.mxu0 0.0
        %462 = vmatpush1.msra.mxu0 0.0
        %463 = vmatprep.subr.mxu0 0.0
        %464 = vmatpush1.msra.mxu0 0.0
        %465 = vmatprep.subr.mxu0 0.0
        %466 = vmatpush1.msra.mxu0 0.0
        %467 = vmatprep.subr.mxu0 0.0
        %468 = vmatpush1.msra.mxu0 0.0
        %469 = vmatprep.subr.mxu0 0.0
        %470 = vmatpush1.msra.mxu0 0.0
        %471 = vmatprep.subr.mxu0 0.0
        %472 = vmatpush1.msra.mxu0 0.0
        %473 = vmatprep.subr.mxu0 0.0
        %474 = vmatpush1.msra.mxu0 0.0
        %475 = vmatprep.subr.mxu0 0.0
        %476 = vmatpush1.msra.mxu0 0.0
        %477 = vmatprep.subr.mxu0 0.0
        %478 = vmatpush1.msra.mxu0 0.0
        %479 = vmatprep.subr.mxu0 0.0
        %480 = vmatpush1.msra.mxu0 0.0
        %481 = vmatprep.subr.mxu0 0.0
        %482 = vmatpush1.msra.mxu0 0.0
        %483 = vmatprep.subr.mxu0 0.0
        %484 = vmatpush1.msra.mxu0 0.0
        %485 = vmatprep.subr.mxu0 0.0
        %486 = vmatpush1.msra.mxu0 %v453
        %487 = vmatprep.subr.mxu0 0.0
        %488 = vmatpush2.msra.mxu0 0.0
        %489 = vmatprep.subr.mxu0 0.0
        %490 = vmatpush2.msra.mxu0 0.0
        %491 = vmatprep.subr.mxu0 0.0
        %492 = vmatpush2.msra.mxu0 0.0
        %493 = vmatprep.subr.mxu0 0.0
        %494 = vmatpush2.msra.mxu0 0.0
        %495 = vmatprep.subr.mxu0 0.0
        %496 = vmatpush2.msra.mxu0 0.0
        %497 = vmatprep.subr.mxu0 0.0
        %498 = vmatpush2.msra.mxu0 0.0
        %499 = vmatprep.subr.mxu0 0.0
        %500 = vmatpush2.msra.mxu0 0.0
        %501 = vmatprep.subr.mxu0 0.0
        %502 = vmatpush2.msra.mxu0 0.0
        %503 = vmatprep.subr.mxu0 0.0
        %504 = vmatpush2.msra.mxu0 0.0
        %505 = vmatprep.subr.mxu0 0.0
        %506 = vmatpush2.msra.mxu0 0.0
        %507 = vmatprep.subr.mxu0 0.0
        %508 = vmatpush2.msra.mxu0 0.0
        %509 = vmatprep.subr.mxu0 0.0
        %510 = vmatpush2.msra.mxu0 0.0
        %511 = vmatprep.subr.mxu0 0.0
        %512 = vmatpush2.msra.mxu0 0.0
        %513 = vmatprep.subr.mxu0 0.0
        %514 = vmatpush2.msra.mxu0 0.0
        %515 = vmatprep.subr.mxu0 0.0
        %516 = vmatpush2.msra.mxu0 0.0
        %517 = vmatprep.subr.mxu0 0.0
        %518 = vmatpush2.msra.mxu0 0.0
        %519 = vmatprep.mubr.f32.mxu0 0.0
        %520 = vmatmul.mubr.f32.gmra.mxu0 %v356
        %v521 = vpop.f32.mrf.mxu0
        %v522 = vadd.f32 %v353, %v521
        %v523 = vpop.f32.mrf.mxu0
        %524 = vmatprep.mubr.f32.mxu0 0.0
        %525 = vmatmul.mubr.f32.gmra.mxu0 %v359
        %v526 = vpop.f32.mrf.mxu0
        %v527 = vadd.f32 %v353, %v526
        %v528 = vpop.f32.mrf.mxu0
        %529 = vmatprep.mubr.f32.mxu0 0.0
        %530 = vmatmul.mubr.f32.gmra.mxu0 %v362
        %v531 = vpop.f32.mrf.mxu0
        %v532 = vadd.f32 %v353, %v531
        %v533 = vpop.f32.mrf.mxu0
        %534 = vmatprep.mubr.f32.mxu0 0.0
        %535 = vmatmul.mubr.f32.gmra.mxu0 %v365
        %v536 = vpop.f32.mrf.mxu0
        %v537 = vadd.f32 %v353, %v536
        %v538 = vpop.f32.mrf.mxu0
        %539 = vmatprep.mubr.f32.mxu0 0.0
        %540 = vmatmul.mubr.f32.gmra.mxu0 %v368
        %v541 = vpop.f32.mrf.mxu0
        %v542 = vadd.f32 %v353, %v541
        %v543 = vpop.f32.mrf.mxu0
        %544 = vmatprep.mubr.f32.mxu0 0.0
        %545 = vmatmul.mubr.f32.gmra.mxu0 %v371
        %v546 = vpop.f32.mrf.mxu0
        %v547 = vadd.f32 %v353, %v546
        %v548 = vpop.f32.mrf.mxu0
        %549 = vmatprep.mubr.f32.mxu0 0.0
        %550 = vmatmul.mubr.f32.gmra.mxu0 %v374
        %v551 = vpop.f32.mrf.mxu0
        %v552 = vadd.f32 %v353, %v551
        %v553 = vpop.f32.mrf.mxu0
        %554 = vmatprep.mubr.f32.mxu0 0.0
        %555 = vmatmul.mubr.f32.gmra.mxu0 %v377
        %v556 = vpop.f32.mrf.mxu0
        %v557 = vadd.f32 %v353, %v556
        %v558 = vpop.f32.mrf.mxu0
        %559 = vmatprep.mubr.f32.mxu0 0.0
        %560 = vmatmul.mubr.f32.gmra.mxu0 %v380
        %v561 = vpop.f32.mrf.mxu0
        %v562 = vadd.f32 %v353, %v561
        %v563 = vpop.f32.mrf.mxu0
        %564 = vmatprep.mubr.f32.mxu0 0.0
        %565 = vmatmul.mubr.f32.gmra.mxu0 %v383
        %v566 = vpop.f32.mrf.mxu0
        %v567 = vadd.f32 %v353, %v566
        %v568 = vpop.f32.mrf.mxu0
        %569 = vmatprep.mubr.f32.mxu0 0.0
        %570 = vmatmul.mubr.f32.gmra.mxu0 %v386
        %v571 = vpop.f32.mrf.mxu0
        %v572 = vadd.f32 %v353, %v571
        %v573 = vpop.f32.mrf.mxu0
        %574 = vmatprep.mubr.f32.mxu0 0.0
        %575 = vmatmul.mubr.f32.gmra.mxu0 %v389
        %v576 = vpop.f32.mrf.mxu0
        %v577 = vadd.f32 %v353, %v576
        %v578 = vpop.f32.mrf.mxu0
        %579 = vmatprep.mubr.f32.mxu0 0.0
        %580 = vmatmul.mubr.f32.gmra.mxu0 %v392
        %v581 = vpop.f32.mrf.mxu0
        %v582 = vadd.f32 %v353, %v581
        %v583 = vpop.f32.mrf.mxu0
        %584 = vmatprep.mubr.f32.mxu0 0.0
        %585 = vmatmul.mubr.f32.gmra.mxu0 %v395
        %v586 = vpop.f32.mrf.mxu0
        %v587 = vadd.f32 %v353, %v586
        %v588 = vpop.f32.mrf.mxu0
        %589 = vmatprep.mubr.f32.mxu0 0.0
        %590 = vmatmul.mubr.f32.gmra.mxu0 %v398
        %v591 = vpop.f32.mrf.mxu0
        %v592 = vadd.f32 %v353, %v591
        %v593 = vpop.f32.mrf.mxu0
        %594 = vmatprep.mubr.f32.mxu0 0.0
        %595 = vmatmul.mubr.f32.gmra.mxu0 %v401
        %v596 = vpop.f32.mrf.mxu0
        %v597 = vadd.f32 %v353, %v596
        %v598 = vpop.f32.mrf.mxu0
        %599 = vmatprep.mubr.f32.mxu0 0.0
        %600 = vmatmul.mubr.f32.gmra.mxu0 %v404
        %v601 = vpop.f32.mrf.mxu0
        %v602 = vadd.f32 %v353, %v601
        %v603 = vpop.f32.mrf.mxu0
        %604 = vmatprep.mubr.f32.mxu0 0.0
        %605 = vmatmul.mubr.f32.gmra.mxu0 %v407
        %v606 = vpop.f32.mrf.mxu0
        %v607 = vadd.f32 %v353, %v606
        %v608 = vpop.f32.mrf.mxu0
        %609 = vmatprep.mubr.f32.mxu0 0.0
        %610 = vmatmul.mubr.f32.gmra.mxu0 %v410
        %v611 = vpop.f32.mrf.mxu0
        %v612 = vadd.f32 %v353, %v611
        %v613 = vpop.f32.mrf.mxu0
        %614 = vmatprep.mubr.f32.mxu0 0.0
        %615 = vmatmul.mubr.f32.gmra.mxu0 %v413
        %v616 = vpop.f32.mrf.mxu0
        %v617 = vadd.f32 %v353, %v616
        %v618 = vpop.f32.mrf.mxu0
        %619 = vmatprep.mubr.f32.mxu0 0.0
        %620 = vmatmul.mubr.f32.gmra.mxu0 %v416
        %v621 = vpop.f32.mrf.mxu0
        %v622 = vadd.f32 %v353, %v621
        %v623 = vpop.f32.mrf.mxu0
        %624 = vmatprep.mubr.f32.mxu0 0.0
        %625 = vmatmul.mubr.f32.gmra.mxu0 %v419
        %v626 = vpop.f32.mrf.mxu0
        %v627 = vadd.f32 %v353, %v626
        %v628 = vpop.f32.mrf.mxu0
        %629 = vmatprep.mubr.f32.mxu0 0.0
        %630 = vmatmul.mubr.f32.gmra.mxu0 %v422
        %v631 = vpop.f32.mrf.mxu0
        %v632 = vadd.f32 %v353, %v631
        %v633 = vpop.f32.mrf.mxu0
        %634 = vmatprep.mubr.f32.mxu0 0.0
        %635 = vmatmul.mubr.f32.gmra.mxu0 %v425
        %v636 = vpop.f32.mrf.mxu0
        %v637 = vadd.f32 %v353, %v636
        %v638 = vpop.f32.mrf.mxu0
        %639 = vmatprep.mubr.f32.mxu0 0.0
        %640 = vmatmul.mubr.f32.gmra.mxu0 %v428
        %v641 = vpop.f32.mrf.mxu0
        %v642 = vadd.f32 %v353, %v641
        %v643 = vpop.f32.mrf.mxu0
        %644 = vmatprep.mubr.f32.mxu0 0.0
        %645 = vmatmul.mubr.f32.gmra.mxu0 %v431
        %v646 = vpop.f32.mrf.mxu0
        %v647 = vadd.f32 %v353, %v646
        %v648 = vpop.f32.mrf.mxu0
        %649 = vmatprep.mubr.f32.mxu0 0.0
        %650 = vmatmul.mubr.f32.gmra.mxu0 %v434
        %v651 = vpop.f32.mrf.mxu0
        %v652 = vadd.f32 %v353, %v651
        %v653 = vpop.f32.mrf.mxu0
        %654 = vmatprep.mubr.f32.mxu0 0.0
        %655 = vmatmul.mubr.f32.gmra.mxu0 %v437
        %v656 = vpop.f32.mrf.mxu0
        %v657 = vadd.f32 %v353, %v656
        %v658 = vpop.f32.mrf.mxu0
        %659 = vmatprep.mubr.f32.mxu0 0.0
        %660 = vmatmul.mubr.f32.gmra.mxu0 %v440
        %v661 = vpop.f32.mrf.mxu0
        %v662 = vadd.f32 %v353, %v661
        %v663 = vpop.f32.mrf.mxu0
        %664 = vmatprep.mubr.f32.mxu0 0.0
        %665 = vmatmul.mubr.f32.gmra.mxu0 %v443
        %v666 = vpop.f32.mrf.mxu0
        %v667 = vadd.f32 %v353, %v666
        %v668 = vpop.f32.mrf.mxu0
        %669 = vmatprep.mubr.f32.mxu0 0.0
        %670 = vmatmul.mubr.f32.gmra.mxu0 %v446
        %v671 = vpop.f32.mrf.mxu0
        %v672 = vadd.f32 %v353, %v671
        %v673 = vpop.f32.mrf.mxu0
        %674 = vmatprep.mubr.f32.mxu0 0.0
        %675 = vmatmul.mubr.f32.gmra.mxu0 %v449
        %v676 = vpop.f32.mrf.mxu0
        %v677 = vadd.f32 %v353, %v676
        %v678 = vpop.f32.mrf.mxu0
        %679 = vdwg.mxu0
        %680 = vst [vmem:[%s244] sm:$0xff] %v522
        %681 = vst [vmem:[%s244 + $0x8] sm:$0xff] %v527
        %682 = vst [vmem:[%s244 + $0x10] sm:$0xff] %v532
        %683 = vst [vmem:[%s244 + $0x18] sm:$0xff] %v537
        %684 = vst [vmem:[%s244 + $0x20] sm:$0xff] %v542
        %685 = vst [vmem:[%s244 + $0x28] sm:$0xff] %v547
        %686 = vst [vmem:[%s244 + $0x30] sm:$0xff] %v552
        %687 = vst [vmem:[%s244 + $0x38] sm:$0xff] %v557
        %688 = vst [vmem:[%s244 + $0x40] sm:$0xff] %v562
        %689 = vst [vmem:[%s244 + $0x48] sm:$0xff] %v567
        %690 = vst [vmem:[%s244 + $0x50] sm:$0xff] %v572
        %691 = vst [vmem:[%s244 + $0x58] sm:$0xff] %v577
        %692 = vst [vmem:[%s244 + $0x60] sm:$0xff] %v582
        %693 = vst [vmem:[%s244 + $0x68] sm:$0xff] %v587
        %694 = vst [vmem:[%s244 + $0x70] sm:$0xff] %v592
        %695 = vst [vmem:[%s244 + $0x78] sm:$0xff] %v597
        %696 = vst [vmem:[%s244 + $0x80] sm:$0xff] %v602
        %697 = vst [vmem:[%s244 + $0x88] sm:$0xff] %v607
        %698 = vst [vmem:[%s244 + $0x90] sm:$0xff] %v612
        %699 = vst [vmem:[%s244 + $0x98] sm:$0xff] %v617
        %700 = vst [vmem:[%s244 + $0xa0] sm:$0xff] %v622
        %701 = vst [vmem:[%s244 + $0xa8] sm:$0xff] %v627
        %702 = vst [vmem:[%s244 + $0xb0] sm:$0xff] %v632
        %703 = vst [vmem:[%s244 + $0xb8] sm:$0xff] %v637
        %704 = vst [vmem:[%s244 + $0xc0] sm:$0xff] %v642
        %705 = vst [vmem:[%s244 + $0xc8] sm:$0xff] %v647
        %706 = vst [vmem:[%s244 + $0xd0] sm:$0xff] %v652
        %707 = vst [vmem:[%s244 + $0xd8] sm:$0xff] %v657
        %708 = vst [vmem:[%s244 + $0xe0] sm:$0xff] %v662
        %709 = vst [vmem:[%s244 + $0xe8] sm:$0xff] %v667
        %710 = vst [vmem:[%s244 + $0xf0] sm:$0xff] %v672
        %711 = vst [vmem:[%s244 + $0xf8] sm:$0xff] %v677
        %v712 = vld [vmem:[%s249 + $0x1] sm:$0xff]
        %v713 = vld [vmem:[%s249 + $0x9] sm:$0xff]
        %v714 = vld [vmem:[%s249 + $0x19] sm:$0xff]
        %v715 = vld [vmem:[%s249 + $0x21] sm:$0xff]
        %v716 = vld [vmem:[%s249 + $0x31] sm:$0xff]
        %v717 = vld [vmem:[%s249 + $0x39] sm:$0xff]
        %v718 = vld [vmem:[%s249 + $0x49] sm:$0xff]
        %v719 = vld [vmem:[%s249 + $0x51] sm:$0xff]
        %v720 = vld [vmem:[%s249 + $0x61] sm:$0xff]
        %v721 = vld [vmem:[%s249 + $0x69] sm:$0xff]
        %v722 = vld [vmem:[%s249 + $0x79] sm:$0xff]
        %v723 = vld [vmem:[%s249 + $0x81] sm:$0xff]
        %v724 = vld [vmem:[%s249 + $0x91] sm:$0xff]
        %v725 = vld [vmem:[%s249 + $0x99] sm:$0xff]
        %v726 = vld [vmem:[%s249 + $0xa9] sm:$0xff]
        %v727 = vld [vmem:[%s249 + $0xb1] sm:$0xff]
        %v728 = vld [vmem:[%s249 + $0xc1] sm:$0xff]
        %v729 = vld [vmem:[%s249 + $0xc9] sm:$0xff]
        %v730 = vld [vmem:[%s249 + $0xd9] sm:$0xff]
        %v731 = vld [vmem:[%s249 + $0xe1] sm:$0xff]
        %v732 = vld [vmem:[%s249 + $0xf1] sm:$0xff]
        %v733 = vld [vmem:[%s249 + $0xf9] sm:$0xff]
        %v734 = vld [vmem:[%s249 + $0x109] sm:$0xff]
        %v735 = vld [vmem:[%s249 + $0x111] sm:$0xff]
        %v736 = vld [vmem:[%s249 + $0x121] sm:$0xff]
        %v737 = vld [vmem:[%s249 + $0x129] sm:$0xff]
        %v738 = vld [vmem:[%s249 + $0x139] sm:$0xff]
        %v739 = vld [vmem:[%s249 + $0x141] sm:$0xff]
        %v740 = vld [vmem:[%s249 + $0x151] sm:$0xff]
        %v741 = vld [vmem:[%s249 + $0x159] sm:$0xff]
        %v742 = vld [vmem:[%s249 + $0x169] sm:$0xff]
        %v743 = vld [vmem:[%s249 + $0x171] sm:$0xff]
        %744 = vst.msk [vmem:[#allocation2] sm:$0xff] %vm283, %v712
        %745 = vst.msk [vmem:[#allocation2 + $0x8] sm:$0xff] %vm283, %v713
        %746 = vst.msk [vmem:[#allocation2 + $0x10] sm:$0xff] %vm283, %v714
        %747 = vst.msk [vmem:[#allocation2 + $0x18] sm:$0xff] %vm283, %v715
        %748 = vst.msk [vmem:[#allocation2 + $0x20] sm:$0xff] %vm283, %v716
        %749 = vst.msk [vmem:[#allocation2 + $0x28] sm:$0xff] %vm283, %v717
        %750 = vst.msk [vmem:[#allocation2 + $0x30] sm:$0xff] %vm283, %v718
        %751 = vst.msk [vmem:[#allocation2 + $0x38] sm:$0xff] %vm283, %v719
        %752 = vst.msk [vmem:[#allocation2 + $0x40] sm:$0xff] %vm283, %v720
        %753 = vst.msk [vmem:[#allocation2 + $0x48] sm:$0xff] %vm283, %v721
        %754 = vst.msk [vmem:[#allocation2 + $0x50] sm:$0xff] %vm283, %v722
        %755 = vst.msk [vmem:[#allocation2 + $0x58] sm:$0xff] %vm283, %v723
        %756 = vst.msk [vmem:[#allocation2 + $0x60] sm:$0xff] %vm283, %v724
        %757 = vst.msk [vmem:[#allocation2 + $0x68] sm:$0xff] %vm283, %v725
        %758 = vst.msk [vmem:[#allocation2 + $0x70] sm:$0xff] %vm283, %v726
        %759 = vst.msk [vmem:[#allocation2 + $0x78] sm:$0xff] %vm283, %v727
        %760 = vst.msk [vmem:[#allocation2 + $0x80] sm:$0xff] %vm283, %v728
        %761 = vst.msk [vmem:[#allocation2 + $0x88] sm:$0xff] %vm283, %v729
        %762 = vst.msk [vmem:[#allocation2 + $0x90] sm:$0xff] %vm283, %v730
        %763 = vst.msk [vmem:[#allocation2 + $0x98] sm:$0xff] %vm283, %v731
        %764 = vst.msk [vmem:[#allocation2 + $0xa0] sm:$0xff] %vm283, %v732
        %765 = vst.msk [vmem:[#allocation2 + $0xa8] sm:$0xff] %vm283, %v733
        %766 = vst.msk [vmem:[#allocation2 + $0xb0] sm:$0xff] %vm283, %v734
        %767 = vst.msk [vmem:[#allocation2 + $0xb8] sm:$0xff] %vm283, %v735
        %768 = vst.msk [vmem:[#allocation2 + $0xc0] sm:$0xff] %vm283, %v736
        %769 = vst.msk [vmem:[#allocation2 + $0xc8] sm:$0xff] %vm283, %v737
        %770 = vst.msk [vmem:[#allocation2 + $0xd0] sm:$0xff] %vm283, %v738
        %771 = vst.msk [vmem:[#allocation2 + $0xd8] sm:$0xff] %vm283, %v739
        %772 = vst.msk [vmem:[#allocation2 + $0xe0] sm:$0xff] %vm283, %v740
        %773 = vst.msk [vmem:[#allocation2 + $0xe8] sm:$0xff] %vm283, %v741
        %774 = vst.msk [vmem:[#allocation2 + $0xf0] sm:$0xff] %vm283, %v742
        %775 = vst.msk [vmem:[#allocation2 + $0xf8] sm:$0xff] %vm283, %v743
        %v776 = vld [vmem:[%s249] sm:$0xff]
        %v777 = vld [vmem:[%s249 + $0x8] sm:$0xff]
        %v778 = vld [vmem:[%s249 + $0x18] sm:$0xff]
        %v779 = vld [vmem:[%s249 + $0x20] sm:$0xff]
        %v780 = vld [vmem:[%s249 + $0x30] sm:$0xff]
        %v781 = vld [vmem:[%s249 + $0x38] sm:$0xff]
        %v782 = vld [vmem:[%s249 + $0x48] sm:$0xff]
        %v783 = vld [vmem:[%s249 + $0x50] sm:$0xff]
        %v784 = vld [vmem:[%s249 + $0x60] sm:$0xff]
        %v785 = vld [vmem:[%s249 + $0x68] sm:$0xff]
        %v786 = vld [vmem:[%s249 + $0x78] sm:$0xff]
        %v787 = vld [vmem:[%s249 + $0x80] sm:$0xff]
        %v788 = vld [vmem:[%s249 + $0x90] sm:$0xff]
        %v789 = vld [vmem:[%s249 + $0x98] sm:$0xff]
        %v790 = vld [vmem:[%s249 + $0xa8] sm:$0xff]
        %v791 = vld [vmem:[%s249 + $0xb0] sm:$0xff]
        %v792 = vld [vmem:[%s249 + $0xc0] sm:$0xff]
        %v793 = vld [vmem:[%s249 + $0xc8] sm:$0xff]
        %v794 = vld [vmem:[%s249 + $0xd8] sm:$0xff]
        %v795 = vld [vmem:[%s249 + $0xe0] sm:$0xff]
        %v796 = vld [vmem:[%s249 + $0xf0] sm:$0xff]
        %v797 = vld [vmem:[%s249 + $0xf8] sm:$0xff]
        %v798 = vld [vmem:[%s249 + $0x108] sm:$0xff]
        %v799 = vld [vmem:[%s249 + $0x110] sm:$0xff]
        %v800 = vld [vmem:[%s249 + $0x120] sm:$0xff]
        %v801 = vld [vmem:[%s249 + $0x128] sm:$0xff]
        %v802 = vld [vmem:[%s249 + $0x138] sm:$0xff]
        %v803 = vld [vmem:[%s249 + $0x140] sm:$0xff]
        %v804 = vld [vmem:[%s249 + $0x150] sm:$0xff]
        %v805 = vld [vmem:[%s249 + $0x158] sm:$0xff]
        %v806 = vld [vmem:[%s249 + $0x168] sm:$0xff]
        %v807 = vld [vmem:[%s249 + $0x170] sm:$0xff]
        %840 = vrot.lane.b32.xlu0 %v776, 4
        %v841 = vpop.permute.xlu0 %840
        %842 = vrot.lane.b32.xlu0 %v777, 4
        %v843 = vpop.permute.xlu0 %842
        %844 = vrot.lane.b32.xlu0 %v778, 4
        %v845 = vpop.permute.xlu0 %844
        %846 = vrot.lane.b32.xlu0 %v779, 4
        %v847 = vpop.permute.xlu0 %846
        %848 = vrot.lane.b32.xlu0 %v780, 4
        %v849 = vpop.permute.xlu0 %848
        %850 = vrot.lane.b32.xlu0 %v781, 4
        %v851 = vpop.permute.xlu0 %850
        %852 = vrot.lane.b32.xlu0 %v782, 4
        %v853 = vpop.permute.xlu0 %852
        %854 = vrot.lane.b32.xlu0 %v783, 4
        %v855 = vpop.permute.xlu0 %854
        %856 = vrot.lane.b32.xlu0 %v784, 4
        %v857 = vpop.permute.xlu0 %856
        %858 = vrot.lane.b32.xlu0 %v785, 4
        %v859 = vpop.permute.xlu0 %858
        %860 = vrot.lane.b32.xlu0 %v786, 4
        %v861 = vpop.permute.xlu0 %860
        %862 = vrot.lane.b32.xlu0 %v787, 4
        %v863 = vpop.permute.xlu0 %862
        %864 = vrot.lane.b32.xlu0 %v788, 4
        %v865 = vpop.permute.xlu0 %864
        %866 = vrot.lane.b32.xlu0 %v789, 4
        %v867 = vpop.permute.xlu0 %866
        %868 = vrot.lane.b32.xlu0 %v790, 4
        %v869 = vpop.permute.xlu0 %868
        %870 = vrot.lane.b32.xlu0 %v791, 4
        %v871 = vpop.permute.xlu0 %870
        %872 = vrot.lane.b32.xlu0 %v792, 4
        %v873 = vpop.permute.xlu0 %872
        %874 = vrot.lane.b32.xlu0 %v793, 4
        %v875 = vpop.permute.xlu0 %874
        %876 = vrot.lane.b32.xlu0 %v794, 4
        %v877 = vpop.permute.xlu0 %876
        %878 = vrot.lane.b32.xlu0 %v795, 4
        %v879 = vpop.permute.xlu0 %878
        %880 = vrot.lane.b32.xlu0 %v796, 4
        %v881 = vpop.permute.xlu0 %880
        %882 = vrot.lane.b32.xlu0 %v797, 4
        %v883 = vpop.permute.xlu0 %882
        %884 = vrot.lane.b32.xlu0 %v798, 4
        %v885 = vpop.permute.xlu0 %884
        %886 = vrot.lane.b32.xlu0 %v799, 4
        %v887 = vpop.permute.xlu0 %886
        %888 = vrot.lane.b32.xlu0 %v800, 4
        %v889 = vpop.permute.xlu0 %888
        %890 = vrot.lane.b32.xlu0 %v801, 4
        %v891 = vpop.permute.xlu0 %890
        %892 = vrot.lane.b32.xlu0 %v802, 4
        %v893 = vpop.permute.xlu0 %892
        %894 = vrot.lane.b32.xlu0 %v803, 4
        %v895 = vpop.permute.xlu0 %894
        %896 = vrot.lane.b32.xlu0 %v804, 4
        %v897 = vpop.permute.xlu0 %896
        %898 = vrot.lane.b32.xlu0 %v805, 4
        %v899 = vpop.permute.xlu0 %898
        %900 = vrot.lane.b32.xlu0 %v806, 4
        %v901 = vpop.permute.xlu0 %900
        %902 = vrot.lane.b32.xlu0 %v807, 4
        %v903 = vpop.permute.xlu0 %902
        %vm936 = vcmask 64544
        %937 = vst.msk [vmem:[#allocation2] sm:$0xff] %vm936, %v841
        %938 = vst.msk [vmem:[#allocation2 + $0x8] sm:$0xff] %vm936, %v843
        %939 = vst.msk [vmem:[#allocation2 + $0x10] sm:$0xff] %vm936, %v845
        %940 = vst.msk [vmem:[#allocation2 + $0x18] sm:$0xff] %vm936, %v847
        %941 = vst.msk [vmem:[#allocation2 + $0x20] sm:$0xff] %vm936, %v849
        %942 = vst.msk [vmem:[#allocation2 + $0x28] sm:$0xff] %vm936, %v851
        %943 = vst.msk [vmem:[#allocation2 + $0x30] sm:$0xff] %vm936, %v853
        %944 = vst.msk [vmem:[#allocation2 + $0x38] sm:$0xff] %vm936, %v855
        %945 = vst.msk [vmem:[#allocation2 + $0x40] sm:$0xff] %vm936, %v857
        %946 = vst.msk [vmem:[#allocation2 + $0x48] sm:$0xff] %vm936, %v859
        %947 = vst.msk [vmem:[#allocation2 + $0x50] sm:$0xff] %vm936, %v861
        %948 = vst.msk [vmem:[#allocation2 + $0x58] sm:$0xff] %vm936, %v863
        %949 = vst.msk [vmem:[#allocation2 + $0x60] sm:$0xff] %vm936, %v865
        %950 = vst.msk [vmem:[#allocation2 + $0x68] sm:$0xff] %vm936, %v867
        %951 = vst.msk [vmem:[#allocation2 + $0x70] sm:$0xff] %vm936, %v869
        %952 = vst.msk [vmem:[#allocation2 + $0x78] sm:$0xff] %vm936, %v871
        %953 = vst.msk [vmem:[#allocation2 + $0x80] sm:$0xff] %vm936, %v873
        %954 = vst.msk [vmem:[#allocation2 + $0x88] sm:$0xff] %vm936, %v875
        %955 = vst.msk [vmem:[#allocation2 + $0x90] sm:$0xff] %vm936, %v877
        %956 = vst.msk [vmem:[#allocation2 + $0x98] sm:$0xff] %vm936, %v879
        %957 = vst.msk [vmem:[#allocation2 + $0xa0] sm:$0xff] %vm936, %v881
        %958 = vst.msk [vmem:[#allocation2 + $0xa8] sm:$0xff] %vm936, %v883
        %959 = vst.msk [vmem:[#allocation2 + $0xb0] sm:$0xff] %vm936, %v885
        %960 = vst.msk [vmem:[#allocation2 + $0xb8] sm:$0xff] %vm936, %v887
        %961 = vst.msk [vmem:[#allocation2 + $0xc0] sm:$0xff] %vm936, %v889
        %962 = vst.msk [vmem:[#allocation2 + $0xc8] sm:$0xff] %vm936, %v891
        %963 = vst.msk [vmem:[#allocation2 + $0xd0] sm:$0xff] %vm936, %v893
        %964 = vst.msk [vmem:[#allocation2 + $0xd8] sm:$0xff] %vm936, %v895
        %965 = vst.msk [vmem:[#allocation2 + $0xe0] sm:$0xff] %vm936, %v897
        %966 = vst.msk [vmem:[#allocation2 + $0xe8] sm:$0xff] %vm936, %v899
        %967 = vst.msk [vmem:[#allocation2 + $0xf0] sm:$0xff] %vm936, %v901
        %968 = vst.msk [vmem:[#allocation2 + $0xf8] sm:$0xff] %vm936, %v903
        %v969 = vld [vmem:[#allocation2] sm:$0xff]
        %v970 = vld [vmem:[#allocation2 + $0x8] sm:$0xff]
        %v971 = vld [vmem:[#allocation2 + $0x10] sm:$0xff]
        %v972 = vld [vmem:[#allocation2 + $0x18] sm:$0xff]
        %v973 = vld [vmem:[#allocation2 + $0x20] sm:$0xff]
        %v974 = vld [vmem:[#allocation2 + $0x28] sm:$0xff]
        %v975 = vld [vmem:[#allocation2 + $0x30] sm:$0xff]
        %v976 = vld [vmem:[#allocation2 + $0x38] sm:$0xff]
        %v977 = vld [vmem:[#allocation2 + $0x40] sm:$0xff]
        %v978 = vld [vmem:[#allocation2 + $0x48] sm:$0xff]
        %v979 = vld [vmem:[#allocation2 + $0x50] sm:$0xff]
        %v980 = vld [vmem:[#allocation2 + $0x58] sm:$0xff]
        %v981 = vld [vmem:[#allocation2 + $0x60] sm:$0xff]
        %v982 = vld [vmem:[#allocation2 + $0x68] sm:$0xff]
        %v983 = vld [vmem:[#allocation2 + $0x70] sm:$0xff]
        %v984 = vld [vmem:[#allocation2 + $0x78] sm:$0xff]
        %v985 = vld [vmem:[#allocation2 + $0x80] sm:$0xff]
        %v986 = vld [vmem:[#allocation2 + $0x88] sm:$0xff]
        %v987 = vld [vmem:[#allocation2 + $0x90] sm:$0xff]
        %v988 = vld [vmem:[#allocation2 + $0x98] sm:$0xff]
        %v989 = vld [vmem:[#allocation2 + $0xa0] sm:$0xff]
        %v990 = vld [vmem:[#allocation2 + $0xa8] sm:$0xff]
        %v991 = vld [vmem:[#allocation2 + $0xb0] sm:$0xff]
        %v992 = vld [vmem:[#allocation2 + $0xb8] sm:$0xff]
        %v993 = vld [vmem:[#allocation2 + $0xc0] sm:$0xff]
        %v994 = vld [vmem:[#allocation2 + $0xc8] sm:$0xff]
        %v995 = vld [vmem:[#allocation2 + $0xd0] sm:$0xff]
        %v996 = vld [vmem:[#allocation2 + $0xd8] sm:$0xff]
        %v997 = vld [vmem:[#allocation2 + $0xe0] sm:$0xff]
        %v998 = vld [vmem:[#allocation2 + $0xe8] sm:$0xff]
        %v999 = vld [vmem:[#allocation2 + $0xf0] sm:$0xff]
        %v1000 = vld [vmem:[#allocation2 + $0xf8] sm:$0xff]
        %v1001 = vld [vmem:[%s2] sm:$0xff]
        %vm1002 = vcmask 64512
        %v1004 = vsel %vm1002, %v969, 0
        %v1007 = vsel %vm1002, %v970, 0
        %v1010 = vsel %vm1002, %v971, 0
        %v1013 = vsel %vm1002, %v972, 0
        %v1016 = vsel %vm1002, %v973, 0
        %v1019 = vsel %vm1002, %v974, 0
        %v1022 = vsel %vm1002, %v975, 0
        %v1025 = vsel %vm1002, %v976, 0
        %v1028 = vsel %vm1002, %v977, 0
        %v1031 = vsel %vm1002, %v978, 0
        %v1034 = vsel %vm1002, %v979, 0
        %v1037 = vsel %vm1002, %v980, 0
        %v1040 = vsel %vm1002, %v981, 0
        %v1043 = vsel %vm1002, %v982, 0
        %v1046 = vsel %vm1002, %v983, 0
        %v1049 = vsel %vm1002, %v984, 0
        %v1052 = vsel %vm1002, %v985, 0
        %v1055 = vsel %vm1002, %v986, 0
        %v1058 = vsel %vm1002, %v987, 0
        %v1061 = vsel %vm1002, %v988, 0
        %v1064 = vsel %vm1002, %v989, 0
        %v1067 = vsel %vm1002, %v990, 0
        %v1070 = vsel %vm1002, %v991, 0
        %v1073 = vsel %vm1002, %v992, 0
        %v1076 = vsel %vm1002, %v993, 0
        %v1079 = vsel %vm1002, %v994, 0
        %v1082 = vsel %vm1002, %v995, 0
        %v1085 = vsel %vm1002, %v996, 0
        %v1088 = vsel %vm1002, %v997, 0
        %v1091 = vsel %vm1002, %v998, 0
        %v1094 = vsel %vm1002, %v999, 0
        %v1097 = vsel %vm1002, %v1000, 0
        %1099 = vmatprep.subr.mxu0 0.0
        %1100 = vmatpush1.msra.mxu0 0.0
        %1101 = vmatprep.subr.mxu0 0.0
        %1102 = vmatpush1.msra.mxu0 0.0
        %1103 = vmatprep.subr.mxu0 0.0
        %1104 = vmatpush1.msra.mxu0 0.0
        %1105 = vmatprep.subr.mxu0 0.0
        %1106 = vmatpush1.msra.mxu0 0.0
        %1107 = vmatprep.subr.mxu0 0.0
        %1108 = vmatpush1.msra.mxu0 0.0
        %1109 = vmatprep.subr.mxu0 0.0
        %1110 = vmatpush1.msra.mxu0 0.0
        %1111 = vmatprep.subr.mxu0 0.0
        %1112 = vmatpush1.msra.mxu0 0.0
        %1113 = vmatprep.subr.mxu0 0.0
        %1114 = vmatpush1.msra.mxu0 0.0
        %1115 = vmatprep.subr.mxu0 0.0
        %1116 = vmatpush1.msra.mxu0 0.0
        %1117 = vmatprep.subr.mxu0 0.0
        %1118 = vmatpush1.msra.mxu0 0.0
        %1119 = vmatprep.subr.mxu0 0.0
        %1120 = vmatpush1.msra.mxu0 0.0
        %1121 = vmatprep.subr.mxu0 0.0
        %1122 = vmatpush1.msra.mxu0 0.0
        %1123 = vmatprep.subr.mxu0 0.0
        %1124 = vmatpush1.msra.mxu0 0.0
        %1125 = vmatprep.subr.mxu0 0.0
        %1126 = vmatpush1.msra.mxu0 0.0
        %1127 = vmatprep.subr.mxu0 0.0
        %1128 = vmatpush1.msra.mxu0 0.0
        %1129 = vmatprep.subr.mxu0 0.0
        %1130 = vmatpush1.msra.mxu0 %v1001
        %1131 = vmatprep.subr.mxu0 0.0
        %1132 = vmatpush2.msra.mxu0 0.0
        %1133 = vmatprep.subr.mxu0 0.0
        %1134 = vmatpush2.msra.mxu0 0.0
        %1135 = vmatprep.subr.mxu0 0.0
        %1136 = vmatpush2.msra.mxu0 0.0
        %1137 = vmatprep.subr.mxu0 0.0
        %1138 = vmatpush2.msra.mxu0 0.0
        %1139 = vmatprep.subr.mxu0 0.0
        %1140 = vmatpush2.msra.mxu0 0.0
        %1141 = vmatprep.subr.mxu0 0.0
        %1142 = vmatpush2.msra.mxu0 0.0
        %1143 = vmatprep.subr.mxu0 0.0
        %1144 = vmatpush2.msra.mxu0 0.0
        %1145 = vmatprep.subr.mxu0 0.0
        %1146 = vmatpush2.msra.mxu0 0.0
        %1147 = vmatprep.subr.mxu0 0.0
        %1148 = vmatpush2.msra.mxu0 0.0
        %1149 = vmatprep.subr.mxu0 0.0
        %1150 = vmatpush2.msra.mxu0 0.0
        %1151 = vmatprep.subr.mxu0 0.0
        %1152 = vmatpush2.msra.mxu0 0.0
        %1153 = vmatprep.subr.mxu0 0.0
        %1154 = vmatpush2.msra.mxu0 0.0
        %1155 = vmatprep.subr.mxu0 0.0
        %1156 = vmatpush2.msra.mxu0 0.0
        %1157 = vmatprep.subr.mxu0 0.0
        %1158 = vmatpush2.msra.mxu0 0.0
        %1159 = vmatprep.subr.mxu0 0.0
        %1160 = vmatpush2.msra.mxu0 0.0
        %1161 = vmatprep.subr.mxu0 0.0
        %1162 = vmatpush2.msra.mxu0 0.0
        %1163 = vmatprep.mubr.f32.mxu0 0.0
        %1164 = vmatmul.mubr.f32.gmra.mxu0 %v1004
        %v1165 = vpop.f32.mrf.mxu0
        %v1166 = vadd.f32 %v353, %v1165
        %v1167 = vpop.f32.mrf.mxu0
        %1168 = vmatprep.mubr.f32.mxu0 0.0
        %1169 = vmatmul.mubr.f32.gmra.mxu0 %v1007
        %v1170 = vpop.f32.mrf.mxu0
        %v1171 = vadd.f32 %v353, %v1170
        %v1172 = vpop.f32.mrf.mxu0
        %1173 = vmatprep.mubr.f32.mxu0 0.0
        %1174 = vmatmul.mubr.f32.gmra.mxu0 %v1010
        %v1175 = vpop.f32.mrf.mxu0
        %v1176 = vadd.f32 %v353, %v1175
        %v1177 = vpop.f32.mrf.mxu0
        %1178 = vmatprep.mubr.f32.mxu0 0.0
        %1179 = vmatmul.mubr.f32.gmra.mxu0 %v1013
        %v1180 = vpop.f32.mrf.mxu0
        %v1181 = vadd.f32 %v353, %v1180
        %v1182 = vpop.f32.mrf.mxu0
        %1183 = vmatprep.mubr.f32.mxu0 0.0
        %1184 = vmatmul.mubr.f32.gmra.mxu0 %v1016
        %v1185 = vpop.f32.mrf.mxu0
        %v1186 = vadd.f32 %v353, %v1185
        %v1187 = vpop.f32.mrf.mxu0
        %1188 = vmatprep.mubr.f32.mxu0 0.0
        %1189 = vmatmul.mubr.f32.gmra.mxu0 %v1019
        %v1190 = vpop.f32.mrf.mxu0
        %v1191 = vadd.f32 %v353, %v1190
        %v1192 = vpop.f32.mrf.mxu0
        %1193 = vmatprep.mubr.f32.mxu0 0.0
        %1194 = vmatmul.mubr.f32.gmra.mxu0 %v1022
        %v1195 = vpop.f32.mrf.mxu0
        %v1196 = vadd.f32 %v353, %v1195
        %v1197 = vpop.f32.mrf.mxu0
        %1198 = vmatprep.mubr.f32.mxu0 0.0
        %1199 = vmatmul.mubr.f32.gmra.mxu0 %v1025
        %v1200 = vpop.f32.mrf.mxu0
        %v1201 = vadd.f32 %v353, %v1200
        %v1202 = vpop.f32.mrf.mxu0
        %1203 = vmatprep.mubr.f32.mxu0 0.0
        %1204 = vmatmul.mubr.f32.gmra.mxu0 %v1028
        %v1205 = vpop.f32.mrf.mxu0
        %v1206 = vadd.f32 %v353, %v1205
        %v1207 = vpop.f32.mrf.mxu0
        %1208 = vmatprep.mubr.f32.mxu0 0.0
        %1209 = vmatmul.mubr.f32.gmra.mxu0 %v1031
        %v1210 = vpop.f32.mrf.mxu0
        %v1211 = vadd.f32 %v353, %v1210
        %v1212 = vpop.f32.mrf.mxu0
        %1213 = vmatprep.mubr.f32.mxu0 0.0
        %1214 = vmatmul.mubr.f32.gmra.mxu0 %v1034
        %v1215 = vpop.f32.mrf.mxu0
        %v1216 = vadd.f32 %v353, %v1215
        %v1217 = vpop.f32.mrf.mxu0
        %1218 = vmatprep.mubr.f32.mxu0 0.0
        %1219 = vmatmul.mubr.f32.gmra.mxu0 %v1037
        %v1220 = vpop.f32.mrf.mxu0
        %v1221 = vadd.f32 %v353, %v1220
        %v1222 = vpop.f32.mrf.mxu0
        %1223 = vmatprep.mubr.f32.mxu0 0.0
        %1224 = vmatmul.mubr.f32.gmra.mxu0 %v1040
        %v1225 = vpop.f32.mrf.mxu0
        %v1226 = vadd.f32 %v353, %v1225
        %v1227 = vpop.f32.mrf.mxu0
        %1228 = vmatprep.mubr.f32.mxu0 0.0
        %1229 = vmatmul.mubr.f32.gmra.mxu0 %v1043
        %v1230 = vpop.f32.mrf.mxu0
        %v1231 = vadd.f32 %v353, %v1230
        %v1232 = vpop.f32.mrf.mxu0
        %1233 = vmatprep.mubr.f32.mxu0 0.0
        %1234 = vmatmul.mubr.f32.gmra.mxu0 %v1046
        %v1235 = vpop.f32.mrf.mxu0
        %v1236 = vadd.f32 %v353, %v1235
        %v1237 = vpop.f32.mrf.mxu0
        %1238 = vmatprep.mubr.f32.mxu0 0.0
        %1239 = vmatmul.mubr.f32.gmra.mxu0 %v1049
        %v1240 = vpop.f32.mrf.mxu0
        %v1241 = vadd.f32 %v353, %v1240
        %v1242 = vpop.f32.mrf.mxu0
        %1243 = vmatprep.mubr.f32.mxu0 0.0
        %1244 = vmatmul.mubr.f32.gmra.mxu0 %v1052
        %v1245 = vpop.f32.mrf.mxu0
        %v1246 = vadd.f32 %v353, %v1245
        %v1247 = vpop.f32.mrf.mxu0
        %1248 = vmatprep.mubr.f32.mxu0 0.0
        %1249 = vmatmul.mubr.f32.gmra.mxu0 %v1055
        %v1250 = vpop.f32.mrf.mxu0
        %v1251 = vadd.f32 %v353, %v1250
        %v1252 = vpop.f32.mrf.mxu0
        %1253 = vmatprep.mubr.f32.mxu0 0.0
        %1254 = vmatmul.mubr.f32.gmra.mxu0 %v1058
        %v1255 = vpop.f32.mrf.mxu0
        %v1256 = vadd.f32 %v353, %v1255
        %v1257 = vpop.f32.mrf.mxu0
        %1258 = vmatprep.mubr.f32.mxu0 0.0
        %1259 = vmatmul.mubr.f32.gmra.mxu0 %v1061
        %v1260 = vpop.f32.mrf.mxu0
        %v1261 = vadd.f32 %v353, %v1260
        %v1262 = vpop.f32.mrf.mxu0
        %1263 = vmatprep.mubr.f32.mxu0 0.0
        %1264 = vmatmul.mubr.f32.gmra.mxu0 %v1064
        %v1265 = vpop.f32.mrf.mxu0
        %v1266 = vadd.f32 %v353, %v1265
        %v1267 = vpop.f32.mrf.mxu0
        %1268 = vmatprep.mubr.f32.mxu0 0.0
        %1269 = vmatmul.mubr.f32.gmra.mxu0 %v1067
        %v1270 = vpop.f32.mrf.mxu0
        %v1271 = vadd.f32 %v353, %v1270
        %v1272 = vpop.f32.mrf.mxu0
        %1273 = vmatprep.mubr.f32.mxu0 0.0
        %1274 = vmatmul.mubr.f32.gmra.mxu0 %v1070
        %v1275 = vpop.f32.mrf.mxu0
        %v1276 = vadd.f32 %v353, %v1275
        %v1277 = vpop.f32.mrf.mxu0
        %1278 = vmatprep.mubr.f32.mxu0 0.0
        %1279 = vmatmul.mubr.f32.gmra.mxu0 %v1073
        %v1280 = vpop.f32.mrf.mxu0
        %v1281 = vadd.f32 %v353, %v1280
        %v1282 = vpop.f32.mrf.mxu0
        %1283 = vmatprep.mubr.f32.mxu0 0.0
        %1284 = vmatmul.mubr.f32.gmra.mxu0 %v1076
        %v1285 = vpop.f32.mrf.mxu0
        %v1286 = vadd.f32 %v353, %v1285
        %v1287 = vpop.f32.mrf.mxu0
        %1288 = vmatprep.mubr.f32.mxu0 0.0
        %1289 = vmatmul.mubr.f32.gmra.mxu0 %v1079
        %v1290 = vpop.f32.mrf.mxu0
        %v1291 = vadd.f32 %v353, %v1290
        %v1292 = vpop.f32.mrf.mxu0
        %1293 = vmatprep.mubr.f32.mxu0 0.0
        %1294 = vmatmul.mubr.f32.gmra.mxu0 %v1082
        %v1295 = vpop.f32.mrf.mxu0
        %v1296 = vadd.f32 %v353, %v1295
        %v1297 = vpop.f32.mrf.mxu0
        %1298 = vmatprep.mubr.f32.mxu0 0.0
        %1299 = vmatmul.mubr.f32.gmra.mxu0 %v1085
        %v1300 = vpop.f32.mrf.mxu0
        %v1301 = vadd.f32 %v353, %v1300
        %v1302 = vpop.f32.mrf.mxu0
        %1303 = vmatprep.mubr.f32.mxu0 0.0
        %1304 = vmatmul.mubr.f32.gmra.mxu0 %v1088
        %v1305 = vpop.f32.mrf.mxu0
        %v1306 = vadd.f32 %v353, %v1305
        %v1307 = vpop.f32.mrf.mxu0
        %1308 = vmatprep.mubr.f32.mxu0 0.0
        %1309 = vmatmul.mubr.f32.gmra.mxu0 %v1091
        %v1310 = vpop.f32.mrf.mxu0
        %v1311 = vadd.f32 %v353, %v1310
        %v1312 = vpop.f32.mrf.mxu0
        %1313 = vmatprep.mubr.f32.mxu0 0.0
        %1314 = vmatmul.mubr.f32.gmra.mxu0 %v1094
        %v1315 = vpop.f32.mrf.mxu0
        %v1316 = vadd.f32 %v353, %v1315
        %v1317 = vpop.f32.mrf.mxu0
        %1318 = vmatprep.mubr.f32.mxu0 0.0
        %1319 = vmatmul.mubr.f32.gmra.mxu0 %v1097
        %v1320 = vpop.f32.mrf.mxu0
        %v1321 = vadd.f32 %v353, %v1320
        %v1322 = vpop.f32.mrf.mxu0
        %1323 = vdwg.mxu0
        %s1324 = scalar_lea.vmem %s244, 256 [#allocation3]
        %1325 = vst [vmem:[%s1324] sm:$0xff] %v1166
        %1326 = vst [vmem:[%s1324 + $0x8] sm:$0xff] %v1171
        %1327 = vst [vmem:[%s1324 + $0x10] sm:$0xff] %v1176
        %1328 = vst [vmem:[%s1324 + $0x18] sm:$0xff] %v1181
        %1329 = vst [vmem:[%s1324 + $0x20] sm:$0xff] %v1186
        %1330 = vst [vmem:[%s1324 + $0x28] sm:$0xff] %v1191
        %1331 = vst [vmem:[%s1324 + $0x30] sm:$0xff] %v1196
        %1332 = vst [vmem:[%s1324 + $0x38] sm:$0xff] %v1201
        %1333 = vst [vmem:[%s1324 + $0x40] sm:$0xff] %v1206
        %1334 = vst [vmem:[%s1324 + $0x48] sm:$0xff] %v1211
        %1335 = vst [vmem:[%s1324 + $0x50] sm:$0xff] %v1216
        %1336 = vst [vmem:[%s1324 + $0x58] sm:$0xff] %v1221
        %1337 = vst [vmem:[%s1324 + $0x60] sm:$0xff] %v1226
        %1338 = vst [vmem:[%s1324 + $0x68] sm:$0xff] %v1231
        %1339 = vst [vmem:[%s1324 + $0x70] sm:$0xff] %v1236
        %1340 = vst [vmem:[%s1324 + $0x78] sm:$0xff] %v1241
        %1341 = vst [vmem:[%s1324 + $0x80] sm:$0xff] %v1246
        %1342 = vst [vmem:[%s1324 + $0x88] sm:$0xff] %v1251
        %1343 = vst [vmem:[%s1324 + $0x90] sm:$0xff] %v1256
        %1344 = vst [vmem:[%s1324 + $0x98] sm:$0xff] %v1261
        %1345 = vst [vmem:[%s1324 + $0xa0] sm:$0xff] %v1266
        %1346 = vst [vmem:[%s1324 + $0xa8] sm:$0xff] %v1271
        %1347 = vst [vmem:[%s1324 + $0xb0] sm:$0xff] %v1276
        %1348 = vst [vmem:[%s1324 + $0xb8] sm:$0xff] %v1281
        %1349 = vst [vmem:[%s1324 + $0xc0] sm:$0xff] %v1286
        %1350 = vst [vmem:[%s1324 + $0xc8] sm:$0xff] %v1291
        %1351 = vst [vmem:[%s1324 + $0xd0] sm:$0xff] %v1296
        %1352 = vst [vmem:[%s1324 + $0xd8] sm:$0xff] %v1301
        %1353 = vst [vmem:[%s1324 + $0xe0] sm:$0xff] %v1306
        %1354 = vst [vmem:[%s1324 + $0xe8] sm:$0xff] %v1311
        %1355 = vst [vmem:[%s1324 + $0xf0] sm:$0xff] %v1316
        %1356 = vst [vmem:[%s1324 + $0xf8] sm:$0xff] %v1321
        %s1357 = scalar_lea.vmem %s249, 24
        %v1358 = vld [vmem:[%s1357] sm:$0xff]
        %v1359 = vld [vmem:[%s1357 + $0x8] sm:$0xff]
        %v1360 = vld [vmem:[%s1357 + $0x18] sm:$0xff]
        %v1361 = vld [vmem:[%s1357 + $0x20] sm:$0xff]
        %v1362 = vld [vmem:[%s1357 + $0x30] sm:$0xff]
        %v1363 = vld [vmem:[%s1357 + $0x38] sm:$0xff]
        %v1364 = vld [vmem:[%s1357 + $0x48] sm:$0xff]
        %v1365 = vld [vmem:[%s1357 + $0x50] sm:$0xff]
        %v1366 = vld [vmem:[%s1357 + $0x60] sm:$0xff]
        %v1367 = vld [vmem:[%s1357 + $0x68] sm:$0xff]
        %v1368 = vld [vmem:[%s1357 + $0x78] sm:$0xff]
        %v1369 = vld [vmem:[%s1357 + $0x80] sm:$0xff]
        %v1370 = vld [vmem:[%s1357 + $0x90] sm:$0xff]
        %v1371 = vld [vmem:[%s1357 + $0x98] sm:$0xff]
        %v1372 = vld [vmem:[%s1357 + $0xa8] sm:$0xff]
        %v1373 = vld [vmem:[%s1357 + $0xb0] sm:$0xff]
        %v1374 = vld [vmem:[%s1357 + $0xc0] sm:$0xff]
        %v1375 = vld [vmem:[%s1357 + $0xc8] sm:$0xff]
        %v1376 = vld [vmem:[%s1357 + $0xd8] sm:$0xff]
        %v1377 = vld [vmem:[%s1357 + $0xe0] sm:$0xff]
        %v1378 = vld [vmem:[%s1357 + $0xf0] sm:$0xff]
        %v1379 = vld [vmem:[%s1357 + $0xf8] sm:$0xff]
        %v1380 = vld [vmem:[%s1357 + $0x108] sm:$0xff]
        %v1381 = vld [vmem:[%s1357 + $0x110] sm:$0xff]
        %v1382 = vld [vmem:[%s1357 + $0x120] sm:$0xff]
        %v1383 = vld [vmem:[%s1357 + $0x128] sm:$0xff]
        %v1384 = vld [vmem:[%s1357 + $0x138] sm:$0xff]
        %v1385 = vld [vmem:[%s1357 + $0x140] sm:$0xff]
        %v1386 = vld [vmem:[%s1357 + $0x150] sm:$0xff]
        %v1387 = vld [vmem:[%s1357 + $0x158] sm:$0xff]
        %v1388 = vld [vmem:[%s1357 + $0x168] sm:$0xff]
        %v1389 = vld [vmem:[%s1357 + $0x170] sm:$0xff]
        %1390 = vst.msk [vmem:[#allocation2] sm:$0xff] %vm283, %v1358
        %1391 = vst.msk [vmem:[#allocation2 + $0x8] sm:$0xff] %vm283, %v1359
        %1392 = vst.msk [vmem:[#allocation2 + $0x10] sm:$0xff] %vm283, %v1360
        %1393 = vst.msk [vmem:[#allocation2 + $0x18] sm:$0xff] %vm283, %v1361
        %1394 = vst.msk [vmem:[#allocation2 + $0x20] sm:$0xff] %vm283, %v1362
        %1395 = vst.msk [vmem:[#allocation2 + $0x28] sm:$0xff] %vm283, %v1363
        %1396 = vst.msk [vmem:[#allocation2 + $0x30] sm:$0xff] %vm283, %v1364
        %1397 = vst.msk [vmem:[#allocation2 + $0x38] sm:$0xff] %vm283, %v1365
        %1398 = vst.msk [vmem:[#allocation2 + $0x40] sm:$0xff] %vm283, %v1366
        %1399 = vst.msk [vmem:[#allocation2 + $0x48] sm:$0xff] %vm283, %v1367
        %1400 = vst.msk [vmem:[#allocation2 + $0x50] sm:$0xff] %vm283, %v1368
        %1401 = vst.msk [vmem:[#allocation2 + $0x58] sm:$0xff] %vm283, %v1369
        %1402 = vst.msk [vmem:[#allocation2 + $0x60] sm:$0xff] %vm283, %v1370
        %1403 = vst.msk [vmem:[#allocation2 + $0x68] sm:$0xff] %vm283, %v1371
        %1404 = vst.msk [vmem:[#allocation2 + $0x70] sm:$0xff] %vm283, %v1372
        %1405 = vst.msk [vmem:[#allocation2 + $0x78] sm:$0xff] %vm283, %v1373
        %1406 = vst.msk [vmem:[#allocation2 + $0x80] sm:$0xff] %vm283, %v1374
        %1407 = vst.msk [vmem:[#allocation2 + $0x88] sm:$0xff] %vm283, %v1375
        %1408 = vst.msk [vmem:[#allocation2 + $0x90] sm:$0xff] %vm283, %v1376
        %1409 = vst.msk [vmem:[#allocation2 + $0x98] sm:$0xff] %vm283, %v1377
        %1410 = vst.msk [vmem:[#allocation2 + $0xa0] sm:$0xff] %vm283, %v1378
        %1411 = vst.msk [vmem:[#allocation2 + $0xa8] sm:$0xff] %vm283, %v1379
        %1412 = vst.msk [vmem:[#allocation2 + $0xb0] sm:$0xff] %vm283, %v1380
        %1413 = vst.msk [vmem:[#allocation2 + $0xb8] sm:$0xff] %vm283, %v1381
        %1414 = vst.msk [vmem:[#allocation2 + $0xc0] sm:$0xff] %vm283, %v1382
        %1415 = vst.msk [vmem:[#allocation2 + $0xc8] sm:$0xff] %vm283, %v1383
        %1416 = vst.msk [vmem:[#allocation2 + $0xd0] sm:$0xff] %vm283, %v1384
        %1417 = vst.msk [vmem:[#allocation2 + $0xd8] sm:$0xff] %vm283, %v1385
        %1418 = vst.msk [vmem:[#allocation2 + $0xe0] sm:$0xff] %vm283, %v1386
        %1419 = vst.msk [vmem:[#allocation2 + $0xe8] sm:$0xff] %vm283, %v1387
        %1420 = vst.msk [vmem:[#allocation2 + $0xf0] sm:$0xff] %vm283, %v1388
        %1421 = vst.msk [vmem:[#allocation2 + $0xf8] sm:$0xff] %vm283, %v1389
        %v1422 = vld [vmem:[%s249] sm:$0xff]
        %v1423 = vld [vmem:[%s249 + $0x8] sm:$0xff]
        %v1424 = vld [vmem:[%s249 + $0x18] sm:$0xff]
        %v1425 = vld [vmem:[%s249 + $0x20] sm:$0xff]
        %v1426 = vld [vmem:[%s249 + $0x30] sm:$0xff]
        %v1427 = vld [vmem:[%s249 + $0x38] sm:$0xff]
        %v1428 = vld [vmem:[%s249 + $0x48] sm:$0xff]
        %v1429 = vld [vmem:[%s249 + $0x50] sm:$0xff]
        %v1430 = vld [vmem:[%s249 + $0x60] sm:$0xff]
        %v1431 = vld [vmem:[%s249 + $0x68] sm:$0xff]
        %v1432 = vld [vmem:[%s249 + $0x78] sm:$0xff]
        %v1433 = vld [vmem:[%s249 + $0x80] sm:$0xff]
        %v1434 = vld [vmem:[%s249 + $0x90] sm:$0xff]
        %v1435 = vld [vmem:[%s249 + $0x98] sm:$0xff]
        %v1436 = vld [vmem:[%s249 + $0xa8] sm:$0xff]
        %v1437 = vld [vmem:[%s249 + $0xb0] sm:$0xff]
        %v1438 = vld [vmem:[%s249 + $0xc0] sm:$0xff]
        %v1439 = vld [vmem:[%s249 + $0xc8] sm:$0xff]
        %v1440 = vld [vmem:[%s249 + $0xd8] sm:$0xff]
        %v1441 = vld [vmem:[%s249 + $0xe0] sm:$0xff]
        %v1442 = vld [vmem:[%s249 + $0xf0] sm:$0xff]
        %v1443 = vld [vmem:[%s249 + $0xf8] sm:$0xff]
        %v1444 = vld [vmem:[%s249 + $0x108] sm:$0xff]
        %v1445 = vld [vmem:[%s249 + $0x110] sm:$0xff]
        %v1446 = vld [vmem:[%s249 + $0x120] sm:$0xff]
        %v1447 = vld [vmem:[%s249 + $0x128] sm:$0xff]
        %v1448 = vld [vmem:[%s249 + $0x138] sm:$0xff]
        %v1449 = vld [vmem:[%s249 + $0x140] sm:$0xff]
        %v1450 = vld [vmem:[%s249 + $0x150] sm:$0xff]
        %v1451 = vld [vmem:[%s249 + $0x158] sm:$0xff]
        %v1452 = vld [vmem:[%s249 + $0x168] sm:$0xff]
        %v1453 = vld [vmem:[%s249 + $0x170] sm:$0xff]
        %1486 = vrot.lane.b32.xlu0 %v1422, 4
        %v1487 = vpop.permute.xlu0 %1486
        %1488 = vrot.lane.b32.xlu0 %v1423, 4
        %v1489 = vpop.permute.xlu0 %1488
        %1490 = vrot.lane.b32.xlu0 %v1424, 4
        %v1491 = vpop.permute.xlu0 %1490
        %1492 = vrot.lane.b32.xlu0 %v1425, 4
        %v1493 = vpop.permute.xlu0 %1492
        %1494 = vrot.lane.b32.xlu0 %v1426, 4
        %v1495 = vpop.permute.xlu0 %1494
        %1496 = vrot.lane.b32.xlu0 %v1427, 4
        %v1497 = vpop.permute.xlu0 %1496
        %1498 = vrot.lane.b32.xlu0 %v1428, 4
        %v1499 = vpop.permute.xlu0 %1498
        %1500 = vrot.lane.b32.xlu0 %v1429, 4
        %v1501 = vpop.permute.xlu0 %1500
        %1502 = vrot.lane.b32.xlu0 %v1430, 4
        %v1503 = vpop.permute.xlu0 %1502
        %1504 = vrot.lane.b32.xlu0 %v1431, 4
        %v1505 = vpop.permute.xlu0 %1504
        %1506 = vrot.lane.b32.xlu0 %v1432, 4
        %v1507 = vpop.permute.xlu0 %1506
        %1508 = vrot.lane.b32.xlu0 %v1433, 4
        %v1509 = vpop.permute.xlu0 %1508
        %1510 = vrot.lane.b32.xlu0 %v1434, 4
        %v1511 = vpop.permute.xlu0 %1510
        %1512 = vrot.lane.b32.xlu0 %v1435, 4
        %v1513 = vpop.permute.xlu0 %1512
        %1514 = vrot.lane.b32.xlu0 %v1436, 4
        %v1515 = vpop.permute.xlu0 %1514
        %1516 = vrot.lane.b32.xlu0 %v1437, 4
        %v1517 = vpop.permute.xlu0 %1516
        %1518 = vrot.lane.b32.xlu0 %v1438, 4
        %v1519 = vpop.permute.xlu0 %1518
        %1520 = vrot.lane.b32.xlu0 %v1439, 4
        %v1521 = vpop.permute.xlu0 %1520
        %1522 = vrot.lane.b32.xlu0 %v1440, 4
        %v1523 = vpop.permute.xlu0 %1522
        %1524 = vrot.lane.b32.xlu0 %v1441, 4
        %v1525 = vpop.permute.xlu0 %1524
        %1526 = vrot.lane.b32.xlu0 %v1442, 4
        %v1527 = vpop.permute.xlu0 %1526
        %1528 = vrot.lane.b32.xlu0 %v1443, 4
        %v1529 = vpop.permute.xlu0 %1528
        %1530 = vrot.lane.b32.xlu0 %v1444, 4
        %v1531 = vpop.permute.xlu0 %1530
        %1532 = vrot.lane.b32.xlu0 %v1445, 4
        %v1533 = vpop.permute.xlu0 %1532
        %1534 = vrot.lane.b32.xlu0 %v1446, 4
        %v1535 = vpop.permute.xlu0 %1534
        %1536 = vrot.lane.b32.xlu0 %v1447, 4
        %v1537 = vpop.permute.xlu0 %1536
        %1538 = vrot.lane.b32.xlu0 %v1448, 4
        %v1539 = vpop.permute.xlu0 %1538
        %1540 = vrot.lane.b32.xlu0 %v1449, 4
        %v1541 = vpop.permute.xlu0 %1540
        %1542 = vrot.lane.b32.xlu0 %v1450, 4
        %v1543 = vpop.permute.xlu0 %1542
        %1544 = vrot.lane.b32.xlu0 %v1451, 4
        %v1545 = vpop.permute.xlu0 %1544
        %1546 = vrot.lane.b32.xlu0 %v1452, 4
        %v1547 = vpop.permute.xlu0 %1546
        %1548 = vrot.lane.b32.xlu0 %v1453, 4
        %v1549 = vpop.permute.xlu0 %1548
        %1582 = vst.msk [vmem:[#allocation2] sm:$0xff] %vm936, %v1487
        %1583 = vst.msk [vmem:[#allocation2 + $0x8] sm:$0xff] %vm936, %v1489
        %1584 = vst.msk [vmem:[#allocation2 + $0x10] sm:$0xff] %vm936, %v1491
        %1585 = vst.msk [vmem:[#allocation2 + $0x18] sm:$0xff] %vm936, %v1493
        %1586 = vst.msk [vmem:[#allocation2 + $0x20] sm:$0xff] %vm936, %v1495
        %1587 = vst.msk [vmem:[#allocation2 + $0x28] sm:$0xff] %vm936, %v1497
        %1588 = vst.msk [vmem:[#allocation2 + $0x30] sm:$0xff] %vm936, %v1499
        %1589 = vst.msk [vmem:[#allocation2 + $0x38] sm:$0xff] %vm936, %v1501
        %1590 = vst.msk [vmem:[#allocation2 + $0x40] sm:$0xff] %vm936, %v1503
        %1591 = vst.msk [vmem:[#allocation2 + $0x48] sm:$0xff] %vm936, %v1505
        %1592 = vst.msk [vmem:[#allocation2 + $0x50] sm:$0xff] %vm936, %v1507
        %1593 = vst.msk [vmem:[#allocation2 + $0x58] sm:$0xff] %vm936, %v1509
        %1594 = vst.msk [vmem:[#allocation2 + $0x60] sm:$0xff] %vm936, %v1511
        %1595 = vst.msk [vmem:[#allocation2 + $0x68] sm:$0xff] %vm936, %v1513
        %1596 = vst.msk [vmem:[#allocation2 + $0x70] sm:$0xff] %vm936, %v1515
        %1597 = vst.msk [vmem:[#allocation2 + $0x78] sm:$0xff] %vm936, %v1517
        %1598 = vst.msk [vmem:[#allocation2 + $0x80] sm:$0xff] %vm936, %v1519
        %1599 = vst.msk [vmem:[#allocation2 + $0x88] sm:$0xff] %vm936, %v1521
        %1600 = vst.msk [vmem:[#allocation2 + $0x90] sm:$0xff] %vm936, %v1523
        %1601 = vst.msk [vmem:[#allocation2 + $0x98] sm:$0xff] %vm936, %v1525
        %1602 = vst.msk [vmem:[#allocation2 + $0xa0] sm:$0xff] %vm936, %v1527
        %1603 = vst.msk [vmem:[#allocation2 + $0xa8] sm:$0xff] %vm936, %v1529
        %1604 = vst.msk [vmem:[#allocation2 + $0xb0] sm:$0xff] %vm936, %v1531
        %1605 = vst.msk [vmem:[#allocation2 + $0xb8] sm:$0xff] %vm936, %v1533
        %1606 = vst.msk [vmem:[#allocation2 + $0xc0] sm:$0xff] %vm936, %v1535
        %1607 = vst.msk [vmem:[#allocation2 + $0xc8] sm:$0xff] %vm936, %v1537
        %1608 = vst.msk [vmem:[#allocation2 + $0xd0] sm:$0xff] %vm936, %v1539
        %1609 = vst.msk [vmem:[#allocation2 + $0xd8] sm:$0xff] %vm936, %v1541
        %1610 = vst.msk [vmem:[#allocation2 + $0xe0] sm:$0xff] %vm936, %v1543
        %1611 = vst.msk [vmem:[#allocation2 + $0xe8] sm:$0xff] %vm936, %v1545
        %1612 = vst.msk [vmem:[#allocation2 + $0xf0] sm:$0xff] %vm936, %v1547
        %1613 = vst.msk [vmem:[#allocation2 + $0xf8] sm:$0xff] %vm936, %v1549
        %v1614 = vld [vmem:[#allocation2] sm:$0xff]
        %v1615 = vld [vmem:[#allocation2 + $0x8] sm:$0xff]
        %v1616 = vld [vmem:[#allocation2 + $0x10] sm:$0xff]
        %v1617 = vld [vmem:[#allocation2 + $0x18] sm:$0xff]
        %v1618 = vld [vmem:[#allocation2 + $0x20] sm:$0xff]
        %v1619 = vld [vmem:[#allocation2 + $0x28] sm:$0xff]
        %v1620 = vld [vmem:[#allocation2 + $0x30] sm:$0xff]
        %v1621 = vld [vmem:[#allocation2 + $0x38] sm:$0xff]
        %v1622 = vld [vmem:[#allocation2 + $0x40] sm:$0xff]
        %v1623 = vld [vmem:[#allocation2 + $0x48] sm:$0xff]
        %v1624 = vld [vmem:[#allocation2 + $0x50] sm:$0xff]
        %v1625 = vld [vmem:[#allocation2 + $0x58] sm:$0xff]
        %v1626 = vld [vmem:[#allocation2 + $0x60] sm:$0xff]
        %v1627 = vld [vmem:[#allocation2 + $0x68] sm:$0xff]
        %v1628 = vld [vmem:[#allocation2 + $0x70] sm:$0xff]
        %v1629 = vld [vmem:[#allocation2 + $0x78] sm:$0xff]
        %v1630 = vld [vmem:[#allocation2 + $0x80] sm:$0xff]
        %v1631 = vld [vmem:[#allocation2 + $0x88] sm:$0xff]
        %v1632 = vld [vmem:[#allocation2 + $0x90] sm:$0xff]
        %v1633 = vld [vmem:[#allocation2 + $0x98] sm:$0xff]
        %v1634 = vld [vmem:[#allocation2 + $0xa0] sm:$0xff]
        %v1635 = vld [vmem:[#allocation2 + $0xa8] sm:$0xff]
        %v1636 = vld [vmem:[#allocation2 + $0xb0] sm:$0xff]
        %v1637 = vld [vmem:[#allocation2 + $0xb8] sm:$0xff]
        %v1638 = vld [vmem:[#allocation2 + $0xc0] sm:$0xff]
        %v1639 = vld [vmem:[#allocation2 + $0xc8] sm:$0xff]
        %v1640 = vld [vmem:[#allocation2 + $0xd0] sm:$0xff]
        %v1641 = vld [vmem:[#allocation2 + $0xd8] sm:$0xff]
        %v1642 = vld [vmem:[#allocation2 + $0xe0] sm:$0xff]
        %v1643 = vld [vmem:[#allocation2 + $0xe8] sm:$0xff]
        %v1644 = vld [vmem:[#allocation2 + $0xf0] sm:$0xff]
        %v1645 = vld [vmem:[#allocation2 + $0xf8] sm:$0xff]
        %v1646 = vld [vmem:[%s3] sm:$0xff]
        %v1648 = vsel %vm1002, %v1614, 0
        %v1651 = vsel %vm1002, %v1615, 0
        %v1654 = vsel %vm1002, %v1616, 0
        %v1657 = vsel %vm1002, %v1617, 0
        %v1660 = vsel %vm1002, %v1618, 0
        %v1663 = vsel %vm1002, %v1619, 0
        %v1666 = vsel %vm1002, %v1620, 0
        %v1669 = vsel %vm1002, %v1621, 0
        %v1672 = vsel %vm1002, %v1622, 0
        %v1675 = vsel %vm1002, %v1623, 0
        %v1678 = vsel %vm1002, %v1624, 0
        %v1681 = vsel %vm1002, %v1625, 0
        %v1684 = vsel %vm1002, %v1626, 0
        %v1687 = vsel %vm1002, %v1627, 0
        %v1690 = vsel %vm1002, %v1628, 0
        %v1693 = vsel %vm1002, %v1629, 0
        %v1696 = vsel %vm1002, %v1630, 0
        %v1699 = vsel %vm1002, %v1631, 0
        %v1702 = vsel %vm1002, %v1632, 0
        %v1705 = vsel %vm1002, %v1633, 0
        %v1708 = vsel %vm1002, %v1634, 0
        %v1711 = vsel %vm1002, %v1635, 0
        %v1714 = vsel %vm1002, %v1636, 0
        %v1717 = vsel %vm1002, %v1637, 0
        %v1720 = vsel %vm1002, %v1638, 0
        %v1723 = vsel %vm1002, %v1639, 0
        %v1726 = vsel %vm1002, %v1640, 0
        %v1729 = vsel %vm1002, %v1641, 0
        %v1732 = vsel %vm1002, %v1642, 0
        %v1735 = vsel %vm1002, %v1643, 0
        %v1738 = vsel %vm1002, %v1644, 0
        %v1741 = vsel %vm1002, %v1645, 0
        %1743 = vmatprep.subr.mxu0 0.0
        %1744 = vmatpush1.msra.mxu0 0.0
        %1745 = vmatprep.subr.mxu0 0.0
        %1746 = vmatpush1.msra.mxu0 0.0
        %1747 = vmatprep.subr.mxu0 0.0
        %1748 = vmatpush1.msra.mxu0 0.0
        %1749 = vmatprep.subr.mxu0 0.0
        %1750 = vmatpush1.msra.mxu0 0.0
        %1751 = vmatprep.subr.mxu0 0.0
        %1752 = vmatpush1.msra.mxu0 0.0
        %1753 = vmatprep.subr.mxu0 0.0
        %1754 = vmatpush1.msra.mxu0 0.0
        %1755 = vmatprep.subr.mxu0 0.0
        %1756 = vmatpush1.msra.mxu0 0.0
        %1757 = vmatprep.subr.mxu0 0.0
        %1758 = vmatpush1.msra.mxu0 0.0
        %1759 = vmatprep.subr.mxu0 0.0
        %1760 = vmatpush1.msra.mxu0 0.0
        %1761 = vmatprep.subr.mxu0 0.0
        %1762 = vmatpush1.msra.mxu0 0.0
        %1763 = vmatprep.subr.mxu0 0.0
        %1764 = vmatpush1.msra.mxu0 0.0
        %1765 = vmatprep.subr.mxu0 0.0
        %1766 = vmatpush1.msra.mxu0 0.0
        %1767 = vmatprep.subr.mxu0 0.0
        %1768 = vmatpush1.msra.mxu0 0.0
        %1769 = vmatprep.subr.mxu0 0.0
        %1770 = vmatpush1.msra.mxu0 0.0
        %1771 = vmatprep.subr.mxu0 0.0
        %1772 = vmatpush1.msra.mxu0 0.0
        %1773 = vmatprep.subr.mxu0 0.0
        %1774 = vmatpush1.msra.mxu0 %v1646
        %1775 = vmatprep.subr.mxu0 0.0
        %1776 = vmatpush2.msra.mxu0 0.0
        %1777 = vmatprep.subr.mxu0 0.0
        %1778 = vmatpush2.msra.mxu0 0.0
        %1779 = vmatprep.subr.mxu0 0.0
        %1780 = vmatpush2.msra.mxu0 0.0
        %1781 = vmatprep.subr.mxu0 0.0
        %1782 = vmatpush2.msra.mxu0 0.0
        %1783 = vmatprep.subr.mxu0 0.0
        %1784 = vmatpush2.msra.mxu0 0.0
        %1785 = vmatprep.subr.mxu0 0.0
        %1786 = vmatpush2.msra.mxu0 0.0
        %1787 = vmatprep.subr.mxu0 0.0
        %1788 = vmatpush2.msra.mxu0 0.0
        %1789 = vmatprep.subr.mxu0 0.0
        %1790 = vmatpush2.msra.mxu0 0.0
        %1791 = vmatprep.subr.mxu0 0.0
        %1792 = vmatpush2.msra.mxu0 0.0
        %1793 = vmatprep.subr.mxu0 0.0
        %1794 = vmatpush2.msra.mxu0 0.0
        %1795 = vmatprep.subr.mxu0 0.0
        %1796 = vmatpush2.msra.mxu0 0.0
        %1797 = vmatprep.subr.mxu0 0.0
        %1798 = vmatpush2.msra.mxu0 0.0
        %1799 = vmatprep.subr.mxu0 0.0
        %1800 = vmatpush2.msra.mxu0 0.0
        %1801 = vmatprep.subr.mxu0 0.0
        %1802 = vmatpush2.msra.mxu0 0.0
        %1803 = vmatprep.subr.mxu0 0.0
        %1804 = vmatpush2.msra.mxu0 0.0
        %1805 = vmatprep.subr.mxu0 0.0
        %1806 = vmatpush2.msra.mxu0 0.0
        %1807 = vmatprep.mubr.f32.mxu0 0.0
        %1808 = vmatmul.mubr.f32.gmra.mxu0 %v1648
        %v1809 = vpop.f32.mrf.mxu0
        %v1810 = vadd.f32 %v353, %v1809
        %v1811 = vpop.f32.mrf.mxu0
        %1812 = vmatprep.mubr.f32.mxu0 0.0
        %1813 = vmatmul.mubr.f32.gmra.mxu0 %v1651
        %v1814 = vpop.f32.mrf.mxu0
        %v1815 = vadd.f32 %v353, %v1814
        %v1816 = vpop.f32.mrf.mxu0
        %1817 = vmatprep.mubr.f32.mxu0 0.0
        %1818 = vmatmul.mubr.f32.gmra.mxu0 %v1654
        %v1819 = vpop.f32.mrf.mxu0
        %v1820 = vadd.f32 %v353, %v1819
        %v1821 = vpop.f32.mrf.mxu0
        %1822 = vmatprep.mubr.f32.mxu0 0.0
        %1823 = vmatmul.mubr.f32.gmra.mxu0 %v1657
        %v1824 = vpop.f32.mrf.mxu0
        %v1825 = vadd.f32 %v353, %v1824
        %v1826 = vpop.f32.mrf.mxu0
        %1827 = vmatprep.mubr.f32.mxu0 0.0
        %1828 = vmatmul.mubr.f32.gmra.mxu0 %v1660
        %v1829 = vpop.f32.mrf.mxu0
        %v1830 = vadd.f32 %v353, %v1829
        %v1831 = vpop.f32.mrf.mxu0
        %1832 = vmatprep.mubr.f32.mxu0 0.0
        %1833 = vmatmul.mubr.f32.gmra.mxu0 %v1663
        %v1834 = vpop.f32.mrf.mxu0
        %v1835 = vadd.f32 %v353, %v1834
        %v1836 = vpop.f32.mrf.mxu0
        %1837 = vmatprep.mubr.f32.mxu0 0.0
        %1838 = vmatmul.mubr.f32.gmra.mxu0 %v1666
        %v1839 = vpop.f32.mrf.mxu0
        %v1840 = vadd.f32 %v353, %v1839
        %v1841 = vpop.f32.mrf.mxu0
        %1842 = vmatprep.mubr.f32.mxu0 0.0
        %1843 = vmatmul.mubr.f32.gmra.mxu0 %v1669
        %v1844 = vpop.f32.mrf.mxu0
        %v1845 = vadd.f32 %v353, %v1844
        %v1846 = vpop.f32.mrf.mxu0
        %1847 = vmatprep.mubr.f32.mxu0 0.0
        %1848 = vmatmul.mubr.f32.gmra.mxu0 %v1672
        %v1849 = vpop.f32.mrf.mxu0
        %v1850 = vadd.f32 %v353, %v1849
        %v1851 = vpop.f32.mrf.mxu0
        %1852 = vmatprep.mubr.f32.mxu0 0.0
        %1853 = vmatmul.mubr.f32.gmra.mxu0 %v1675
        %v1854 = vpop.f32.mrf.mxu0
        %v1855 = vadd.f32 %v353, %v1854
        %v1856 = vpop.f32.mrf.mxu0
        %1857 = vmatprep.mubr.f32.mxu0 0.0
        %1858 = vmatmul.mubr.f32.gmra.mxu0 %v1678
        %v1859 = vpop.f32.mrf.mxu0
        %v1860 = vadd.f32 %v353, %v1859
        %v1861 = vpop.f32.mrf.mxu0
        %1862 = vmatprep.mubr.f32.mxu0 0.0
        %1863 = vmatmul.mubr.f32.gmra.mxu0 %v1681
        %v1864 = vpop.f32.mrf.mxu0
        %v1865 = vadd.f32 %v353, %v1864
        %v1866 = vpop.f32.mrf.mxu0
        %1867 = vmatprep.mubr.f32.mxu0 0.0
        %1868 = vmatmul.mubr.f32.gmra.mxu0 %v1684
        %v1869 = vpop.f32.mrf.mxu0
        %v1870 = vadd.f32 %v353, %v1869
        %v1871 = vpop.f32.mrf.mxu0
        %1872 = vmatprep.mubr.f32.mxu0 0.0
        %1873 = vmatmul.mubr.f32.gmra.mxu0 %v1687
        %v1874 = vpop.f32.mrf.mxu0
        %v1875 = vadd.f32 %v353, %v1874
        %v1876 = vpop.f32.mrf.mxu0
        %1877 = vmatprep.mubr.f32.mxu0 0.0
        %1878 = vmatmul.mubr.f32.gmra.mxu0 %v1690
        %v1879 = vpop.f32.mrf.mxu0
        %v1880 = vadd.f32 %v353, %v1879
        %v1881 = vpop.f32.mrf.mxu0
        %1882 = vmatprep.mubr.f32.mxu0 0.0
        %1883 = vmatmul.mubr.f32.gmra.mxu0 %v1693
        %v1884 = vpop.f32.mrf.mxu0
        %v1885 = vadd.f32 %v353, %v1884
        %v1886 = vpop.f32.mrf.mxu0
        %1887 = vmatprep.mubr.f32.mxu0 0.0
        %1888 = vmatmul.mubr.f32.gmra.mxu0 %v1696
        %v1889 = vpop.f32.mrf.mxu0
        %v1890 = vadd.f32 %v353, %v1889
        %v1891 = vpop.f32.mrf.mxu0
        %1892 = vmatprep.mubr.f32.mxu0 0.0
        %1893 = vmatmul.mubr.f32.gmra.mxu0 %v1699
        %v1894 = vpop.f32.mrf.mxu0
        %v1895 = vadd.f32 %v353, %v1894
        %v1896 = vpop.f32.mrf.mxu0
        %1897 = vmatprep.mubr.f32.mxu0 0.0
        %1898 = vmatmul.mubr.f32.gmra.mxu0 %v1702
        %v1899 = vpop.f32.mrf.mxu0
        %v1900 = vadd.f32 %v353, %v1899
        %v1901 = vpop.f32.mrf.mxu0
        %1902 = vmatprep.mubr.f32.mxu0 0.0
        %1903 = vmatmul.mubr.f32.gmra.mxu0 %v1705
        %v1904 = vpop.f32.mrf.mxu0
        %v1905 = vadd.f32 %v353, %v1904
        %v1906 = vpop.f32.mrf.mxu0
        %1907 = vmatprep.mubr.f32.mxu0 0.0
        %1908 = vmatmul.mubr.f32.gmra.mxu0 %v1708
        %v1909 = vpop.f32.mrf.mxu0
        %v1910 = vadd.f32 %v353, %v1909
        %v1911 = vpop.f32.mrf.mxu0
        %1912 = vmatprep.mubr.f32.mxu0 0.0
        %1913 = vmatmul.mubr.f32.gmra.mxu0 %v1711
        %v1914 = vpop.f32.mrf.mxu0
        %v1915 = vadd.f32 %v353, %v1914
        %v1916 = vpop.f32.mrf.mxu0
        %1917 = vmatprep.mubr.f32.mxu0 0.0
        %1918 = vmatmul.mubr.f32.gmra.mxu0 %v1714
        %v1919 = vpop.f32.mrf.mxu0
        %v1920 = vadd.f32 %v353, %v1919
        %v1921 = vpop.f32.mrf.mxu0
        %1922 = vmatprep.mubr.f32.mxu0 0.0
        %1923 = vmatmul.mubr.f32.gmra.mxu0 %v1717
        %v1924 = vpop.f32.mrf.mxu0
        %v1925 = vadd.f32 %v353, %v1924
        %v1926 = vpop.f32.mrf.mxu0
        %1927 = vmatprep.mubr.f32.mxu0 0.0
        %1928 = vmatmul.mubr.f32.gmra.mxu0 %v1720
        %v1929 = vpop.f32.mrf.mxu0
        %v1930 = vadd.f32 %v353, %v1929
        %v1931 = vpop.f32.mrf.mxu0
        %1932 = vmatprep.mubr.f32.mxu0 0.0
        %1933 = vmatmul.mubr.f32.gmra.mxu0 %v1723
        %v1934 = vpop.f32.mrf.mxu0
        %v1935 = vadd.f32 %v353, %v1934
        %v1936 = vpop.f32.mrf.mxu0
        %1937 = vmatprep.mubr.f32.mxu0 0.0
        %1938 = vmatmul.mubr.f32.gmra.mxu0 %v1726
        %v1939 = vpop.f32.mrf.mxu0
        %v1940 = vadd.f32 %v353, %v1939
        %v1941 = vpop.f32.mrf.mxu0
        %1942 = vmatprep.mubr.f32.mxu0 0.0
        %1943 = vmatmul.mubr.f32.gmra.mxu0 %v1729
        %v1944 = vpop.f32.mrf.mxu0
        %v1945 = vadd.f32 %v353, %v1944
        %v1946 = vpop.f32.mrf.mxu0
        %1947 = vmatprep.mubr.f32.mxu0 0.0
        %1948 = vmatmul.mubr.f32.gmra.mxu0 %v1732
        %v1949 = vpop.f32.mrf.mxu0
        %v1950 = vadd.f32 %v353, %v1949
        %v1951 = vpop.f32.mrf.mxu0
        %1952 = vmatprep.mubr.f32.mxu0 0.0
        %1953 = vmatmul.mubr.f32.gmra.mxu0 %v1735
        %v1954 = vpop.f32.mrf.mxu0
        %v1955 = vadd.f32 %v353, %v1954
        %v1956 = vpop.f32.mrf.mxu0
        %1957 = vmatprep.mubr.f32.mxu0 0.0
        %1958 = vmatmul.mubr.f32.gmra.mxu0 %v1738
        %v1959 = vpop.f32.mrf.mxu0
        %v1960 = vadd.f32 %v353, %v1959
        %v1961 = vpop.f32.mrf.mxu0
        %1962 = vmatprep.mubr.f32.mxu0 0.0
        %1963 = vmatmul.mubr.f32.gmra.mxu0 %v1741
        %v1964 = vpop.f32.mrf.mxu0
        %v1965 = vadd.f32 %v353, %v1964
        %v1966 = vpop.f32.mrf.mxu0
        %1967 = vdwg.mxu0
        %s1968 = scalar_lea.vmem %s244, 512 [#allocation3]
        %1969 = vst [vmem:[%s1968] sm:$0xff] %v1810
        %1970 = vst [vmem:[%s1968 + $0x8] sm:$0xff] %v1815
        %1971 = vst [vmem:[%s1968 + $0x10] sm:$0xff] %v1820
        %1972 = vst [vmem:[%s1968 + $0x18] sm:$0xff] %v1825
        %1973 = vst [vmem:[%s1968 + $0x20] sm:$0xff] %v1830
        %1974 = vst [vmem:[%s1968 + $0x28] sm:$0xff] %v1835
        %1975 = vst [vmem:[%s1968 + $0x30] sm:$0xff] %v1840
        %1976 = vst [vmem:[%s1968 + $0x38] sm:$0xff] %v1845
        %1977 = vst [vmem:[%s1968 + $0x40] sm:$0xff] %v1850
        %1978 = vst [vmem:[%s1968 + $0x48] sm:$0xff] %v1855
        %1979 = vst [vmem:[%s1968 + $0x50] sm:$0xff] %v1860
        %1980 = vst [vmem:[%s1968 + $0x58] sm:$0xff] %v1865
        %1981 = vst [vmem:[%s1968 + $0x60] sm:$0xff] %v1870
        %1982 = vst [vmem:[%s1968 + $0x68] sm:$0xff] %v1875
        %1983 = vst [vmem:[%s1968 + $0x70] sm:$0xff] %v1880
        %1984 = vst [vmem:[%s1968 + $0x78] sm:$0xff] %v1885
        %1985 = vst [vmem:[%s1968 + $0x80] sm:$0xff] %v1890
        %1986 = vst [vmem:[%s1968 + $0x88] sm:$0xff] %v1895
        %1987 = vst [vmem:[%s1968 + $0x90] sm:$0xff] %v1900
        %1988 = vst [vmem:[%s1968 + $0x98] sm:$0xff] %v1905
        %1989 = vst [vmem:[%s1968 + $0xa0] sm:$0xff] %v1910
        %1990 = vst [vmem:[%s1968 + $0xa8] sm:$0xff] %v1915
        %1991 = vst [vmem:[%s1968 + $0xb0] sm:$0xff] %v1920
        %1992 = vst [vmem:[%s1968 + $0xb8] sm:$0xff] %v1925
        %1993 = vst [vmem:[%s1968 + $0xc0] sm:$0xff] %v1930
        %1994 = vst [vmem:[%s1968 + $0xc8] sm:$0xff] %v1935
        %1995 = vst [vmem:[%s1968 + $0xd0] sm:$0xff] %v1940
        %1996 = vst [vmem:[%s1968 + $0xd8] sm:$0xff] %v1945
        %1997 = vst [vmem:[%s1968 + $0xe0] sm:$0xff] %v1950
        %1998 = vst [vmem:[%s1968 + $0xe8] sm:$0xff] %v1955
        %1999 = vst [vmem:[%s1968 + $0xf0] sm:$0xff] %v1960
        %2000 = vst [vmem:[%s1968 + $0xf8] sm:$0xff] %v1965
        %v2001 = vld [vmem:[%s1357 + $0x1] sm:$0xff]
        %v2002 = vld [vmem:[%s1357 + $0x9] sm:$0xff]
        %v2003 = vld [vmem:[%s1357 + $0x19] sm:$0xff]
        %v2004 = vld [vmem:[%s1357 + $0x21] sm:$0xff]
        %v2005 = vld [vmem:[%s1357 + $0x31] sm:$0xff]
        %v2006 = vld [vmem:[%s1357 + $0x39] sm:$0xff]
        %v2007 = vld [vmem:[%s1357 + $0x49] sm:$0xff]
        %v2008 = vld [vmem:[%s1357 + $0x51] sm:$0xff]
        %v2009 = vld [vmem:[%s1357 + $0x61] sm:$0xff]
        %v2010 = vld [vmem:[%s1357 + $0x69] sm:$0xff]
        %v2011 = vld [vmem:[%s1357 + $0x79] sm:$0xff]
        %v2012 = vld [vmem:[%s1357 + $0x81] sm:$0xff]
        %v2013 = vld [vmem:[%s1357 + $0x91] sm:$0xff]
        %v2014 = vld [vmem:[%s1357 + $0x99] sm:$0xff]
        %v2015 = vld [vmem:[%s1357 + $0xa9] sm:$0xff]
        %v2016 = vld [vmem:[%s1357 + $0xb1] sm:$0xff]
        %v2017 = vld [vmem:[%s1357 + $0xc1] sm:$0xff]
        %v2018 = vld [vmem:[%s1357 + $0xc9] sm:$0xff]
        %v2019 = vld [vmem:[%s1357 + $0xd9] sm:$0xff]
        %v2020 = vld [vmem:[%s1357 + $0xe1] sm:$0xff]
        %v2021 = vld [vmem:[%s1357 + $0xf1] sm:$0xff]
        %v2022 = vld [vmem:[%s1357 + $0xf9] sm:$0xff]
        %v2023 = vld [vmem:[%s1357 + $0x109] sm:$0xff]
        %v2024 = vld [vmem:[%s1357 + $0x111] sm:$0xff]
        %v2025 = vld [vmem:[%s1357 + $0x121] sm:$0xff]
        %v2026 = vld [vmem:[%s1357 + $0x129] sm:$0xff]
        %v2027 = vld [vmem:[%s1357 + $0x139] sm:$0xff]
        %v2028 = vld [vmem:[%s1357 + $0x141] sm:$0xff]
        %v2029 = vld [vmem:[%s1357 + $0x151] sm:$0xff]
        %v2030 = vld [vmem:[%s1357 + $0x159] sm:$0xff]
        %v2031 = vld [vmem:[%s1357 + $0x169] sm:$0xff]
        %v2032 = vld [vmem:[%s1357 + $0x171] sm:$0xff]
        %2033 = vst.msk [vmem:[#allocation2] sm:$0xff] %vm283, %v2001
        %2034 = vst.msk [vmem:[#allocation2 + $0x8] sm:$0xff] %vm283, %v2002
        %2035 = vst.msk [vmem:[#allocation2 + $0x10] sm:$0xff] %vm283, %v2003
        %2036 = vst.msk [vmem:[#allocation2 + $0x18] sm:$0xff] %vm283, %v2004
        %2037 = vst.msk [vmem:[#allocation2 + $0x20] sm:$0xff] %vm283, %v2005
        %2038 = vst.msk [vmem:[#allocation2 + $0x28] sm:$0xff] %vm283, %v2006
        %2039 = vst.msk [vmem:[#allocation2 + $0x30] sm:$0xff] %vm283, %v2007
        %2040 = vst.msk [vmem:[#allocation2 + $0x38] sm:$0xff] %vm283, %v2008
        %2041 = vst.msk [vmem:[#allocation2 + $0x40] sm:$0xff] %vm283, %v2009
        %2042 = vst.msk [vmem:[#allocation2 + $0x48] sm:$0xff] %vm283, %v2010
        %2043 = vst.msk [vmem:[#allocation2 + $0x50] sm:$0xff] %vm283, %v2011
        %2044 = vst.msk [vmem:[#allocation2 + $0x58] sm:$0xff] %vm283, %v2012
        %2045 = vst.msk [vmem:[#allocation2 + $0x60] sm:$0xff] %vm283, %v2013
        %2046 = vst.msk [vmem:[#allocation2 + $0x68] sm:$0xff] %vm283, %v2014
        %2047 = vst.msk [vmem:[#allocation2 + $0x70] sm:$0xff] %vm283, %v2015
        %2048 = vst.msk [vmem:[#allocation2 + $0x78] sm:$0xff] %vm283, %v2016
        %2049 = vst.msk [vmem:[#allocation2 + $0x80] sm:$0xff] %vm283, %v2017
        %2050 = vst.msk [vmem:[#allocation2 + $0x88] sm:$0xff] %vm283, %v2018
        %2051 = vst.msk [vmem:[#allocation2 + $0x90] sm:$0xff] %vm283, %v2019
        %2052 = vst.msk [vmem:[#allocation2 + $0x98] sm:$0xff] %vm283, %v2020
        %2053 = vst.msk [vmem:[#allocation2 + $0xa0] sm:$0xff] %vm283, %v2021
        %2054 = vst.msk [vmem:[#allocation2 + $0xa8] sm:$0xff] %vm283, %v2022
        %2055 = vst.msk [vmem:[#allocation2 + $0xb0] sm:$0xff] %vm283, %v2023
        %2056 = vst.msk [vmem:[#allocation2 + $0xb8] sm:$0xff] %vm283, %v2024
        %2057 = vst.msk [vmem:[#allocation2 + $0xc0] sm:$0xff] %vm283, %v2025
        %2058 = vst.msk [vmem:[#allocation2 + $0xc8] sm:$0xff] %vm283, %v2026
        %2059 = vst.msk [vmem:[#allocation2 + $0xd0] sm:$0xff] %vm283, %v2027
        %2060 = vst.msk [vmem:[#allocation2 + $0xd8] sm:$0xff] %vm283, %v2028
        %2061 = vst.msk [vmem:[#allocation2 + $0xe0] sm:$0xff] %vm283, %v2029
        %2062 = vst.msk [vmem:[#allocation2 + $0xe8] sm:$0xff] %vm283, %v2030
        %2063 = vst.msk [vmem:[#allocation2 + $0xf0] sm:$0xff] %vm283, %v2031
        %2064 = vst.msk [vmem:[#allocation2 + $0xf8] sm:$0xff] %vm283, %v2032
        %v2065 = vld [vmem:[%s1357] sm:$0xff]
        %v2066 = vld [vmem:[%s1357 + $0x8] sm:$0xff]
        %v2067 = vld [vmem:[%s1357 + $0x18] sm:$0xff]
        %v2068 = vld [vmem:[%s1357 + $0x20] sm:$0xff]
        %v2069 = vld [vmem:[%s1357 + $0x30] sm:$0xff]
        %v2070 = vld [vmem:[%s1357 + $0x38] sm:$0xff]
        %v2071 = vld [vmem:[%s1357 + $0x48] sm:$0xff]
        %v2072 = vld [vmem:[%s1357 + $0x50] sm:$0xff]
        %v2073 = vld [vmem:[%s1357 + $0x60] sm:$0xff]
        %v2074 = vld [vmem:[%s1357 + $0x68] sm:$0xff]
        %v2075 = vld [vmem:[%s1357 + $0x78] sm:$0xff]
        %v2076 = vld [vmem:[%s1357 + $0x80] sm:$0xff]
        %v2077 = vld [vmem:[%s1357 + $0x90] sm:$0xff]
        %v2078 = vld [vmem:[%s1357 + $0x98] sm:$0xff]
        %v2079 = vld [vmem:[%s1357 + $0xa8] sm:$0xff]
        %v2080 = vld [vmem:[%s1357 + $0xb0] sm:$0xff]
        %v2081 = vld [vmem:[%s1357 + $0xc0] sm:$0xff]
        %v2082 = vld [vmem:[%s1357 + $0xc8] sm:$0xff]
        %v2083 = vld [vmem:[%s1357 + $0xd8] sm:$0xff]
        %v2084 = vld [vmem:[%s1357 + $0xe0] sm:$0xff]
        %v2085 = vld [vmem:[%s1357 + $0xf0] sm:$0xff]
        %v2086 = vld [vmem:[%s1357 + $0xf8] sm:$0xff]
        %v2087 = vld [vmem:[%s1357 + $0x108] sm:$0xff]
        %v2088 = vld [vmem:[%s1357 + $0x110] sm:$0xff]
        %v2089 = vld [vmem:[%s1357 + $0x120] sm:$0xff]
        %v2090 = vld [vmem:[%s1357 + $0x128] sm:$0xff]
        %v2091 = vld [vmem:[%s1357 + $0x138] sm:$0xff]
        %v2092 = vld [vmem:[%s1357 + $0x140] sm:$0xff]
        %v2093 = vld [vmem:[%s1357 + $0x150] sm:$0xff]
        %v2094 = vld [vmem:[%s1357 + $0x158] sm:$0xff]
        %v2095 = vld [vmem:[%s1357 + $0x168] sm:$0xff]
        %v2096 = vld [vmem:[%s1357 + $0x170] sm:$0xff]
        %2129 = vrot.lane.b32.xlu0 %v2065, 4
        %v2130 = vpop.permute.xlu0 %2129
        %2131 = vrot.lane.b32.xlu0 %v2066, 4
        %v2132 = vpop.permute.xlu0 %2131
        %2133 = vrot.lane.b32.xlu0 %v2067, 4
        %v2134 = vpop.permute.xlu0 %2133
        %2135 = vrot.lane.b32.xlu0 %v2068, 4
        %v2136 = vpop.permute.xlu0 %2135
        %2137 = vrot.lane.b32.xlu0 %v2069, 4
        %v2138 = vpop.permute.xlu0 %2137
        %2139 = vrot.lane.b32.xlu0 %v2070, 4
        %v2140 = vpop.permute.xlu0 %2139
        %2141 = vrot.lane.b32.xlu0 %v2071, 4
        %v2142 = vpop.permute.xlu0 %2141
        %2143 = vrot.lane.b32.xlu0 %v2072, 4
        %v2144 = vpop.permute.xlu0 %2143
        %2145 = vrot.lane.b32.xlu0 %v2073, 4
        %v2146 = vpop.permute.xlu0 %2145
        %2147 = vrot.lane.b32.xlu0 %v2074, 4
        %v2148 = vpop.permute.xlu0 %2147
        %2149 = vrot.lane.b32.xlu0 %v2075, 4
        %v2150 = vpop.permute.xlu0 %2149
        %2151 = vrot.lane.b32.xlu0 %v2076, 4
        %v2152 = vpop.permute.xlu0 %2151
        %2153 = vrot.lane.b32.xlu0 %v2077, 4
        %v2154 = vpop.permute.xlu0 %2153
        %2155 = vrot.lane.b32.xlu0 %v2078, 4
        %v2156 = vpop.permute.xlu0 %2155
        %2157 = vrot.lane.b32.xlu0 %v2079, 4
        %v2158 = vpop.permute.xlu0 %2157
        %2159 = vrot.lane.b32.xlu0 %v2080, 4
        %v2160 = vpop.permute.xlu0 %2159
        %2161 = vrot.lane.b32.xlu0 %v2081, 4
        %v2162 = vpop.permute.xlu0 %2161
        %2163 = vrot.lane.b32.xlu0 %v2082, 4
        %v2164 = vpop.permute.xlu0 %2163
        %2165 = vrot.lane.b32.xlu0 %v2083, 4
        %v2166 = vpop.permute.xlu0 %2165
        %2167 = vrot.lane.b32.xlu0 %v2084, 4
        %v2168 = vpop.permute.xlu0 %2167
        %2169 = vrot.lane.b32.xlu0 %v2085, 4
        %v2170 = vpop.permute.xlu0 %2169
        %2171 = vrot.lane.b32.xlu0 %v2086, 4
        %v2172 = vpop.permute.xlu0 %2171
        %2173 = vrot.lane.b32.xlu0 %v2087, 4
        %v2174 = vpop.permute.xlu0 %2173
        %2175 = vrot.lane.b32.xlu0 %v2088, 4
        %v2176 = vpop.permute.xlu0 %2175
        %2177 = vrot.lane.b32.xlu0 %v2089, 4
        %v2178 = vpop.permute.xlu0 %2177
        %2179 = vrot.lane.b32.xlu0 %v2090, 4
        %v2180 = vpop.permute.xlu0 %2179
        %2181 = vrot.lane.b32.xlu0 %v2091, 4
        %v2182 = vpop.permute.xlu0 %2181
        %2183 = vrot.lane.b32.xlu0 %v2092, 4
        %v2184 = vpop.permute.xlu0 %2183
        %2185 = vrot.lane.b32.xlu0 %v2093, 4
        %v2186 = vpop.permute.xlu0 %2185
        %2187 = vrot.lane.b32.xlu0 %v2094, 4
        %v2188 = vpop.permute.xlu0 %2187
        %2189 = vrot.lane.b32.xlu0 %v2095, 4
        %v2190 = vpop.permute.xlu0 %2189
        %2191 = vrot.lane.b32.xlu0 %v2096, 4
        %v2192 = vpop.permute.xlu0 %2191
        %2225 = vst.msk [vmem:[#allocation2] sm:$0xff] %vm936, %v2130
        %2226 = vst.msk [vmem:[#allocation2 + $0x8] sm:$0xff] %vm936, %v2132
        %2227 = vst.msk [vmem:[#allocation2 + $0x10] sm:$0xff] %vm936, %v2134
        %2228 = vst.msk [vmem:[#allocation2 + $0x18] sm:$0xff] %vm936, %v2136
        %2229 = vst.msk [vmem:[#allocation2 + $0x20] sm:$0xff] %vm936, %v2138
        %2230 = vst.msk [vmem:[#allocation2 + $0x28] sm:$0xff] %vm936, %v2140
        %2231 = vst.msk [vmem:[#allocation2 + $0x30] sm:$0xff] %vm936, %v2142
        %2232 = vst.msk [vmem:[#allocation2 + $0x38] sm:$0xff] %vm936, %v2144
        %2233 = vst.msk [vmem:[#allocation2 + $0x40] sm:$0xff] %vm936, %v2146
        %2234 = vst.msk [vmem:[#allocation2 + $0x48] sm:$0xff] %vm936, %v2148
        %2235 = vst.msk [vmem:[#allocation2 + $0x50] sm:$0xff] %vm936, %v2150
        %2236 = vst.msk [vmem:[#allocation2 + $0x58] sm:$0xff] %vm936, %v2152
        %2237 = vst.msk [vmem:[#allocation2 + $0x60] sm:$0xff] %vm936, %v2154
        %2238 = vst.msk [vmem:[#allocation2 + $0x68] sm:$0xff] %vm936, %v2156
        %2239 = vst.msk [vmem:[#allocation2 + $0x70] sm:$0xff] %vm936, %v2158
        %2240 = vst.msk [vmem:[#allocation2 + $0x78] sm:$0xff] %vm936, %v2160
        %2241 = vst.msk [vmem:[#allocation2 + $0x80] sm:$0xff] %vm936, %v2162
        %2242 = vst.msk [vmem:[#allocation2 + $0x88] sm:$0xff] %vm936, %v2164
        %2243 = vst.msk [vmem:[#allocation2 + $0x90] sm:$0xff] %vm936, %v2166
        %2244 = vst.msk [vmem:[#allocation2 + $0x98] sm:$0xff] %vm936, %v2168
        %2245 = vst.msk [vmem:[#allocation2 + $0xa0] sm:$0xff] %vm936, %v2170
        %2246 = vst.msk [vmem:[#allocation2 + $0xa8] sm:$0xff] %vm936, %v2172
        %2247 = vst.msk [vmem:[#allocation2 + $0xb0] sm:$0xff] %vm936, %v2174
        %2248 = vst.msk [vmem:[#allocation2 + $0xb8] sm:$0xff] %vm936, %v2176
        %2249 = vst.msk [vmem:[#allocation2 + $0xc0] sm:$0xff] %vm936, %v2178
        %2250 = vst.msk [vmem:[#allocation2 + $0xc8] sm:$0xff] %vm936, %v2180
        %2251 = vst.msk [vmem:[#allocation2 + $0xd0] sm:$0xff] %vm936, %v2182
        %2252 = vst.msk [vmem:[#allocation2 + $0xd8] sm:$0xff] %vm936, %v2184
        %2253 = vst.msk [vmem:[#allocation2 + $0xe0] sm:$0xff] %vm936, %v2186
        %2254 = vst.msk [vmem:[#allocation2 + $0xe8] sm:$0xff] %vm936, %v2188
        %2255 = vst.msk [vmem:[#allocation2 + $0xf0] sm:$0xff] %vm936, %v2190
        %2256 = vst.msk [vmem:[#allocation2 + $0xf8] sm:$0xff] %vm936, %v2192
        %v2257 = vld [vmem:[%s249 + $0x1] sm:$0xff]
        %v2258 = vld [vmem:[%s249 + $0x9] sm:$0xff]
        %v2259 = vld [vmem:[%s249 + $0x19] sm:$0xff]
        %v2260 = vld [vmem:[%s249 + $0x21] sm:$0xff]
        %v2261 = vld [vmem:[%s249 + $0x31] sm:$0xff]
        %v2262 = vld [vmem:[%s249 + $0x39] sm:$0xff]
        %v2263 = vld [vmem:[%s249 + $0x49] sm:$0xff]
        %v2264 = vld [vmem:[%s249 + $0x51] sm:$0xff]
        %v2265 = vld [vmem:[%s249 + $0x61] sm:$0xff]
        %v2266 = vld [vmem:[%s249 + $0x69] sm:$0xff]
        %v2267 = vld [vmem:[%s249 + $0x79] sm:$0xff]
        %v2268 = vld [vmem:[%s249 + $0x81] sm:$0xff]
        %v2269 = vld [vmem:[%s249 + $0x91] sm:$0xff]
        %v2270 = vld [vmem:[%s249 + $0x99] sm:$0xff]
        %v2271 = vld [vmem:[%s249 + $0xa9] sm:$0xff]
        %v2272 = vld [vmem:[%s249 + $0xb1] sm:$0xff]
        %v2273 = vld [vmem:[%s249 + $0xc1] sm:$0xff]
        %v2274 = vld [vmem:[%s249 + $0xc9] sm:$0xff]
        %v2275 = vld [vmem:[%s249 + $0xd9] sm:$0xff]
        %v2276 = vld [vmem:[%s249 + $0xe1] sm:$0xff]
        %v2277 = vld [vmem:[%s249 + $0xf1] sm:$0xff]
        %v2278 = vld [vmem:[%s249 + $0xf9] sm:$0xff]
        %v2279 = vld [vmem:[%s249 + $0x109] sm:$0xff]
        %v2280 = vld [vmem:[%s249 + $0x111] sm:$0xff]
        %v2281 = vld [vmem:[%s249 + $0x121] sm:$0xff]
        %v2282 = vld [vmem:[%s249 + $0x129] sm:$0xff]
        %v2283 = vld [vmem:[%s249 + $0x139] sm:$0xff]
        %v2284 = vld [vmem:[%s249 + $0x141] sm:$0xff]
        %v2285 = vld [vmem:[%s249 + $0x151] sm:$0xff]
        %v2286 = vld [vmem:[%s249 + $0x159] sm:$0xff]
        %v2287 = vld [vmem:[%s249 + $0x169] sm:$0xff]
        %v2288 = vld [vmem:[%s249 + $0x171] sm:$0xff]
        %2321 = vrot.lane.b32.xlu0 %v2257, 8
        %v2322 = vpop.permute.xlu0 %2321
        %2323 = vrot.lane.b32.xlu0 %v2258, 8
        %v2324 = vpop.permute.xlu0 %2323
        %2325 = vrot.lane.b32.xlu0 %v2259, 8
        %v2326 = vpop.permute.xlu0 %2325
        %2327 = vrot.lane.b32.xlu0 %v2260, 8
        %v2328 = vpop.permute.xlu0 %2327
        %2329 = vrot.lane.b32.xlu0 %v2261, 8
        %v2330 = vpop.permute.xlu0 %2329
        %2331 = vrot.lane.b32.xlu0 %v2262, 8
        %v2332 = vpop.permute.xlu0 %2331
        %2333 = vrot.lane.b32.xlu0 %v2263, 8
        %v2334 = vpop.permute.xlu0 %2333
        %2335 = vrot.lane.b32.xlu0 %v2264, 8
        %v2336 = vpop.permute.xlu0 %2335
        %2337 = vrot.lane.b32.xlu0 %v2265, 8
        %v2338 = vpop.permute.xlu0 %2337
        %2339 = vrot.lane.b32.xlu0 %v2266, 8
        %v2340 = vpop.permute.xlu0 %2339
        %2341 = vrot.lane.b32.xlu0 %v2267, 8
        %v2342 = vpop.permute.xlu0 %2341
        %2343 = vrot.lane.b32.xlu0 %v2268, 8
        %v2344 = vpop.permute.xlu0 %2343
        %2345 = vrot.lane.b32.xlu0 %v2269, 8
        %v2346 = vpop.permute.xlu0 %2345
        %2347 = vrot.lane.b32.xlu0 %v2270, 8
        %v2348 = vpop.permute.xlu0 %2347
        %2349 = vrot.lane.b32.xlu0 %v2271, 8
        %v2350 = vpop.permute.xlu0 %2349
        %2351 = vrot.lane.b32.xlu0 %v2272, 8
        %v2352 = vpop.permute.xlu0 %2351
        %2353 = vrot.lane.b32.xlu0 %v2273, 8
        %v2354 = vpop.permute.xlu0 %2353
        %2355 = vrot.lane.b32.xlu0 %v2274, 8
        %v2356 = vpop.permute.xlu0 %2355
        %2357 = vrot.lane.b32.xlu0 %v2275, 8
        %v2358 = vpop.permute.xlu0 %2357
        %2359 = vrot.lane.b32.xlu0 %v2276, 8
        %v2360 = vpop.permute.xlu0 %2359
        %2361 = vrot.lane.b32.xlu0 %v2277, 8
        %v2362 = vpop.permute.xlu0 %2361
        %2363 = vrot.lane.b32.xlu0 %v2278, 8
        %v2364 = vpop.permute.xlu0 %2363
        %2365 = vrot.lane.b32.xlu0 %v2279, 8
        %v2366 = vpop.permute.xlu0 %2365
        %2367 = vrot.lane.b32.xlu0 %v2280, 8
        %v2368 = vpop.permute.xlu0 %2367
        %2369 = vrot.lane.b32.xlu0 %v2281, 8
        %v2370 = vpop.permute.xlu0 %2369
        %2371 = vrot.lane.b32.xlu0 %v2282, 8
        %v2372 = vpop.permute.xlu0 %2371
        %2373 = vrot.lane.b32.xlu0 %v2283, 8
        %v2374 = vpop.permute.xlu0 %2373
        %2375 = vrot.lane.b32.xlu0 %v2284, 8
        %v2376 = vpop.permute.xlu0 %2375
        %2377 = vrot.lane.b32.xlu0 %v2285, 8
        %v2378 = vpop.permute.xlu0 %2377
        %2379 = vrot.lane.b32.xlu0 %v2286, 8
        %v2380 = vpop.permute.xlu0 %2379
        %2381 = vrot.lane.b32.xlu0 %v2287, 8
        %v2382 = vpop.permute.xlu0 %2381
        %2383 = vrot.lane.b32.xlu0 %v2288, 8
        %v2384 = vpop.permute.xlu0 %2383
        %vm2417 = vcmask 97344
        %2418 = vst.msk [vmem:[#allocation2] sm:$0xff] %vm2417, %v2322
        %2419 = vst.msk [vmem:[#allocation2 + $0x8] sm:$0xff] %vm2417, %v2324
        %2420 = vst.msk [vmem:[#allocation2 + $0x10] sm:$0xff] %vm2417, %v2326
        %2421 = vst.msk [vmem:[#allocation2 + $0x18] sm:$0xff] %vm2417, %v2328
        %2422 = vst.msk [vmem:[#allocation2 + $0x20] sm:$0xff] %vm2417, %v2330
        %2423 = vst.msk [vmem:[#allocation2 + $0x28] sm:$0xff] %vm2417, %v2332
        %2424 = vst.msk [vmem:[#allocation2 + $0x30] sm:$0xff] %vm2417, %v2334
        %2425 = vst.msk [vmem:[#allocation2 + $0x38] sm:$0xff] %vm2417, %v2336
        %2426 = vst.msk [vmem:[#allocation2 + $0x40] sm:$0xff] %vm2417, %v2338
        %2427 = vst.msk [vmem:[#allocation2 + $0x48] sm:$0xff] %vm2417, %v2340
        %2428 = vst.msk [vmem:[#allocation2 + $0x50] sm:$0xff] %vm2417, %v2342
        %2429 = vst.msk [vmem:[#allocation2 + $0x58] sm:$0xff] %vm2417, %v2344
        %2430 = vst.msk [vmem:[#allocation2 + $0x60] sm:$0xff] %vm2417, %v2346
        %2431 = vst.msk [vmem:[#allocation2 + $0x68] sm:$0xff] %vm2417, %v2348
        %2432 = vst.msk [vmem:[#allocation2 + $0x70] sm:$0xff] %vm2417, %v2350
        %2433 = vst.msk [vmem:[#allocation2 + $0x78] sm:$0xff] %vm2417, %v2352
        %2434 = vst.msk [vmem:[#allocation2 + $0x80] sm:$0xff] %vm2417, %v2354
        %2435 = vst.msk [vmem:[#allocation2 + $0x88] sm:$0xff] %vm2417, %v2356
        %2436 = vst.msk [vmem:[#allocation2 + $0x90] sm:$0xff] %vm2417, %v2358
        %2437 = vst.msk [vmem:[#allocation2 + $0x98] sm:$0xff] %vm2417, %v2360
        %2438 = vst.msk [vmem:[#allocation2 + $0xa0] sm:$0xff] %vm2417, %v2362
        %2439 = vst.msk [vmem:[#allocation2 + $0xa8] sm:$0xff] %vm2417, %v2364
        %2440 = vst.msk [vmem:[#allocation2 + $0xb0] sm:$0xff] %vm2417, %v2366
        %2441 = vst.msk [vmem:[#allocation2 + $0xb8] sm:$0xff] %vm2417, %v2368
        %2442 = vst.msk [vmem:[#allocation2 + $0xc0] sm:$0xff] %vm2417, %v2370
        %2443 = vst.msk [vmem:[#allocation2 + $0xc8] sm:$0xff] %vm2417, %v2372
        %2444 = vst.msk [vmem:[#allocation2 + $0xd0] sm:$0xff] %vm2417, %v2374
        %2445 = vst.msk [vmem:[#allocation2 + $0xd8] sm:$0xff] %vm2417, %v2376
        %2446 = vst.msk [vmem:[#allocation2 + $0xe0] sm:$0xff] %vm2417, %v2378
        %2447 = vst.msk [vmem:[#allocation2 + $0xe8] sm:$0xff] %vm2417, %v2380
        %2448 = vst.msk [vmem:[#allocation2 + $0xf0] sm:$0xff] %vm2417, %v2382
        %2449 = vst.msk [vmem:[#allocation2 + $0xf8] sm:$0xff] %vm2417, %v2384
        %v2450 = vld [vmem:[%s249] sm:$0xff]
        %v2451 = vld [vmem:[%s249 + $0x8] sm:$0xff]
        %v2452 = vld [vmem:[%s249 + $0x18] sm:$0xff]
        %v2453 = vld [vmem:[%s249 + $0x20] sm:$0xff]
        %v2454 = vld [vmem:[%s249 + $0x30] sm:$0xff]
        %v2455 = vld [vmem:[%s249 + $0x38] sm:$0xff]
        %v2456 = vld [vmem:[%s249 + $0x48] sm:$0xff]
        %v2457 = vld [vmem:[%s249 + $0x50] sm:$0xff]
        %v2458 = vld [vmem:[%s249 + $0x60] sm:$0xff]
        %v2459 = vld [vmem:[%s249 + $0x68] sm:$0xff]
        %v2460 = vld [vmem:[%s249 + $0x78] sm:$0xff]
        %v2461 = vld [vmem:[%s249 + $0x80] sm:$0xff]
        %v2462 = vld [vmem:[%s249 + $0x90] sm:$0xff]
        %v2463 = vld [vmem:[%s249 + $0x98] sm:$0xff]
        %v2464 = vld [vmem:[%s249 + $0xa8] sm:$0xff]
        %v2465 = vld [vmem:[%s249 + $0xb0] sm:$0xff]
        %v2466 = vld [vmem:[%s249 + $0xc0] sm:$0xff]
        %v2467 = vld [vmem:[%s249 + $0xc8] sm:$0xff]
        %v2468 = vld [vmem:[%s249 + $0xd8] sm:$0xff]
        %v2469 = vld [vmem:[%s249 + $0xe0] sm:$0xff]
        %v2470 = vld [vmem:[%s249 + $0xf0] sm:$0xff]
        %v2471 = vld [vmem:[%s249 + $0xf8] sm:$0xff]
        %v2472 = vld [vmem:[%s249 + $0x108] sm:$0xff]
        %v2473 = vld [vmem:[%s249 + $0x110] sm:$0xff]
        %v2474 = vld [vmem:[%s249 + $0x120] sm:$0xff]
        %v2475 = vld [vmem:[%s249 + $0x128] sm:$0xff]
        %v2476 = vld [vmem:[%s249 + $0x138] sm:$0xff]
        %v2477 = vld [vmem:[%s249 + $0x140] sm:$0xff]
        %v2478 = vld [vmem:[%s249 + $0x150] sm:$0xff]
        %v2479 = vld [vmem:[%s249 + $0x158] sm:$0xff]
        %v2480 = vld [vmem:[%s249 + $0x168] sm:$0xff]
        %v2481 = vld [vmem:[%s249 + $0x170] sm:$0xff]
        %2514 = vrot.lane.b32.xlu0 %v2450, 12
        %v2515 = vpop.permute.xlu0 %2514
        %2516 = vrot.lane.b32.xlu0 %v2451, 12
        %v2517 = vpop.permute.xlu0 %2516
        %2518 = vrot.lane.b32.xlu0 %v2452, 12
        %v2519 = vpop.permute.xlu0 %2518
        %2520 = vrot.lane.b32.xlu0 %v2453, 12
        %v2521 = vpop.permute.xlu0 %2520
        %2522 = vrot.lane.b32.xlu0 %v2454, 12
        %v2523 = vpop.permute.xlu0 %2522
        %2524 = vrot.lane.b32.xlu0 %v2455, 12
        %v2525 = vpop.permute.xlu0 %2524
        %2526 = vrot.lane.b32.xlu0 %v2456, 12
        %v2527 = vpop.permute.xlu0 %2526
        %2528 = vrot.lane.b32.xlu0 %v2457, 12
        %v2529 = vpop.permute.xlu0 %2528
        %2530 = vrot.lane.b32.xlu0 %v2458, 12
        %v2531 = vpop.permute.xlu0 %2530
        %2532 = vrot.lane.b32.xlu0 %v2459, 12
        %v2533 = vpop.permute.xlu0 %2532
        %2534 = vrot.lane.b32.xlu0 %v2460, 12
        %v2535 = vpop.permute.xlu0 %2534
        %2536 = vrot.lane.b32.xlu0 %v2461, 12
        %v2537 = vpop.permute.xlu0 %2536
        %2538 = vrot.lane.b32.xlu0 %v2462, 12
        %v2539 = vpop.permute.xlu0 %2538
        %2540 = vrot.lane.b32.xlu0 %v2463, 12
        %v2541 = vpop.permute.xlu0 %2540
        %2542 = vrot.lane.b32.xlu0 %v2464, 12
        %v2543 = vpop.permute.xlu0 %2542
        %2544 = vrot.lane.b32.xlu0 %v2465, 12
        %v2545 = vpop.permute.xlu0 %2544
        %2546 = vrot.lane.b32.xlu0 %v2466, 12
        %v2547 = vpop.permute.xlu0 %2546
        %2548 = vrot.lane.b32.xlu0 %v2467, 12
        %v2549 = vpop.permute.xlu0 %2548
        %2550 = vrot.lane.b32.xlu0 %v2468, 12
        %v2551 = vpop.permute.xlu0 %2550
        %2552 = vrot.lane.b32.xlu0 %v2469, 12
        %v2553 = vpop.permute.xlu0 %2552
        %2554 = vrot.lane.b32.xlu0 %v2470, 12
        %v2555 = vpop.permute.xlu0 %2554
        %2556 = vrot.lane.b32.xlu0 %v2471, 12
        %v2557 = vpop.permute.xlu0 %2556
        %2558 = vrot.lane.b32.xlu0 %v2472, 12
        %v2559 = vpop.permute.xlu0 %2558
        %2560 = vrot.lane.b32.xlu0 %v2473, 12
        %v2561 = vpop.permute.xlu0 %2560
        %2562 = vrot.lane.b32.xlu0 %v2474, 12
        %v2563 = vpop.permute.xlu0 %2562
        %2564 = vrot.lane.b32.xlu0 %v2475, 12
        %v2565 = vpop.permute.xlu0 %2564
        %2566 = vrot.lane.b32.xlu0 %v2476, 12
        %v2567 = vpop.permute.xlu0 %2566
        %2568 = vrot.lane.b32.xlu0 %v2477, 12
        %v2569 = vpop.permute.xlu0 %2568
        %2570 = vrot.lane.b32.xlu0 %v2478, 12
        %v2571 = vpop.permute.xlu0 %2570
        %2572 = vrot.lane.b32.xlu0 %v2479, 12
        %v2573 = vpop.permute.xlu0 %2572
        %2574 = vrot.lane.b32.xlu0 %v2480, 12
        %v2575 = vpop.permute.xlu0 %2574
        %2576 = vrot.lane.b32.xlu0 %v2481, 12
        %v2577 = vpop.permute.xlu0 %2576
        %vm2610 = vcmask 130144
        %2611 = vst.msk [vmem:[#allocation2] sm:$0xff] %vm2610, %v2515
        %2612 = vst.msk [vmem:[#allocation2 + $0x8] sm:$0xff] %vm2610, %v2517
        %2613 = vst.msk [vmem:[#allocation2 + $0x10] sm:$0xff] %vm2610, %v2519
        %2614 = vst.msk [vmem:[#allocation2 + $0x18] sm:$0xff] %vm2610, %v2521
        %2615 = vst.msk [vmem:[#allocation2 + $0x20] sm:$0xff] %vm2610, %v2523
        %2616 = vst.msk [vmem:[#allocation2 + $0x28] sm:$0xff] %vm2610, %v2525
        %2617 = vst.msk [vmem:[#allocation2 + $0x30] sm:$0xff] %vm2610, %v2527
        %2618 = vst.msk [vmem:[#allocation2 + $0x38] sm:$0xff] %vm2610, %v2529
        %2619 = vst.msk [vmem:[#allocation2 + $0x40] sm:$0xff] %vm2610, %v2531
        %2620 = vst.msk [vmem:[#allocation2 + $0x48] sm:$0xff] %vm2610, %v2533
        %2621 = vst.msk [vmem:[#allocation2 + $0x50] sm:$0xff] %vm2610, %v2535
        %2622 = vst.msk [vmem:[#allocation2 + $0x58] sm:$0xff] %vm2610, %v2537
        %2623 = vst.msk [vmem:[#allocation2 + $0x60] sm:$0xff] %vm2610, %v2539
        %2624 = vst.msk [vmem:[#allocation2 + $0x68] sm:$0xff] %vm2610, %v2541
        %2625 = vst.msk [vmem:[#allocation2 + $0x70] sm:$0xff] %vm2610, %v2543
        %2626 = vst.msk [vmem:[#allocation2 + $0x78] sm:$0xff] %vm2610, %v2545
        %2627 = vst.msk [vmem:[#allocation2 + $0x80] sm:$0xff] %vm2610, %v2547
        %2628 = vst.msk [vmem:[#allocation2 + $0x88] sm:$0xff] %vm2610, %v2549
        %2629 = vst.msk [vmem:[#allocation2 + $0x90] sm:$0xff] %vm2610, %v2551
        %2630 = vst.msk [vmem:[#allocation2 + $0x98] sm:$0xff] %vm2610, %v2553
        %2631 = vst.msk [vmem:[#allocation2 + $0xa0] sm:$0xff] %vm2610, %v2555
        %2632 = vst.msk [vmem:[#allocation2 + $0xa8] sm:$0xff] %vm2610, %v2557
        %2633 = vst.msk [vmem:[#allocation2 + $0xb0] sm:$0xff] %vm2610, %v2559
        %2634 = vst.msk [vmem:[#allocation2 + $0xb8] sm:$0xff] %vm2610, %v2561
        %2635 = vst.msk [vmem:[#allocation2 + $0xc0] sm:$0xff] %vm2610, %v2563
        %2636 = vst.msk [vmem:[#allocation2 + $0xc8] sm:$0xff] %vm2610, %v2565
        %2637 = vst.msk [vmem:[#allocation2 + $0xd0] sm:$0xff] %vm2610, %v2567
        %2638 = vst.msk [vmem:[#allocation2 + $0xd8] sm:$0xff] %vm2610, %v2569
        %2639 = vst.msk [vmem:[#allocation2 + $0xe0] sm:$0xff] %vm2610, %v2571
        %2640 = vst.msk [vmem:[#allocation2 + $0xe8] sm:$0xff] %vm2610, %v2573
        %2641 = vst.msk [vmem:[#allocation2 + $0xf0] sm:$0xff] %vm2610, %v2575
        %2642 = vst.msk [vmem:[#allocation2 + $0xf8] sm:$0xff] %vm2610, %v2577
        %v2643 = vld [vmem:[#allocation2] sm:$0xff]
        %v2644 = vld [vmem:[#allocation2 + $0x8] sm:$0xff]
        %v2645 = vld [vmem:[#allocation2 + $0x10] sm:$0xff]
        %v2646 = vld [vmem:[#allocation2 + $0x18] sm:$0xff]
        %v2647 = vld [vmem:[#allocation2 + $0x20] sm:$0xff]
        %v2648 = vld [vmem:[#allocation2 + $0x28] sm:$0xff]
        %v2649 = vld [vmem:[#allocation2 + $0x30] sm:$0xff]
        %v2650 = vld [vmem:[#allocation2 + $0x38] sm:$0xff]
        %v2651 = vld [vmem:[#allocation2 + $0x40] sm:$0xff]
        %v2652 = vld [vmem:[#allocation2 + $0x48] sm:$0xff]
        %v2653 = vld [vmem:[#allocation2 + $0x50] sm:$0xff]
        %v2654 = vld [vmem:[#allocation2 + $0x58] sm:$0xff]
        %v2655 = vld [vmem:[#allocation2 + $0x60] sm:$0xff]
        %v2656 = vld [vmem:[#allocation2 + $0x68] sm:$0xff]
        %v2657 = vld [vmem:[#allocation2 + $0x70] sm:$0xff]
        %v2658 = vld [vmem:[#allocation2 + $0x78] sm:$0xff]
        %v2659 = vld [vmem:[#allocation2 + $0x80] sm:$0xff]
        %v2660 = vld [vmem:[#allocation2 + $0x88] sm:$0xff]
        %v2661 = vld [vmem:[#allocation2 + $0x90] sm:$0xff]
        %v2662 = vld [vmem:[#allocation2 + $0x98] sm:$0xff]
        %v2663 = vld [vmem:[#allocation2 + $0xa0] sm:$0xff]
        %v2664 = vld [vmem:[#allocation2 + $0xa8] sm:$0xff]
        %v2665 = vld [vmem:[#allocation2 + $0xb0] sm:$0xff]
        %v2666 = vld [vmem:[#allocation2 + $0xb8] sm:$0xff]
        %v2667 = vld [vmem:[#allocation2 + $0xc0] sm:$0xff]
        %v2668 = vld [vmem:[#allocation2 + $0xc8] sm:$0xff]
        %v2669 = vld [vmem:[#allocation2 + $0xd0] sm:$0xff]
        %v2670 = vld [vmem:[#allocation2 + $0xd8] sm:$0xff]
        %v2671 = vld [vmem:[#allocation2 + $0xe0] sm:$0xff]
        %v2672 = vld [vmem:[#allocation2 + $0xe8] sm:$0xff]
        %v2673 = vld [vmem:[#allocation2 + $0xf0] sm:$0xff]
        %v2674 = vld [vmem:[#allocation2 + $0xf8] sm:$0xff]
        %v2675 = vld [vmem:[%s4] sm:$0xff]
        %v2676 = vld [vmem:[%s4 + $0x8] sm:$0xff]
        %vm2677 = vcmask 130048
        %v2679 = vsel %vm2677, %v2643, 0
        %v2682 = vsel %vm2677, %v2644, 0
        %v2685 = vsel %vm2677, %v2645, 0
        %v2688 = vsel %vm2677, %v2646, 0
        %v2691 = vsel %vm2677, %v2647, 0
        %v2694 = vsel %vm2677, %v2648, 0
        %v2697 = vsel %vm2677, %v2649, 0
        %v2700 = vsel %vm2677, %v2650, 0
        %v2703 = vsel %vm2677, %v2651, 0
        %v2706 = vsel %vm2677, %v2652, 0
        %v2709 = vsel %vm2677, %v2653, 0
        %v2712 = vsel %vm2677, %v2654, 0
        %v2715 = vsel %vm2677, %v2655, 0
        %v2718 = vsel %vm2677, %v2656, 0
        %v2721 = vsel %vm2677, %v2657, 0
        %v2724 = vsel %vm2677, %v2658, 0
        %v2727 = vsel %vm2677, %v2659, 0
        %v2730 = vsel %vm2677, %v2660, 0
        %v2733 = vsel %vm2677, %v2661, 0
        %v2736 = vsel %vm2677, %v2662, 0
        %v2739 = vsel %vm2677, %v2663, 0
        %v2742 = vsel %vm2677, %v2664, 0
        %v2745 = vsel %vm2677, %v2665, 0
        %v2748 = vsel %vm2677, %v2666, 0
        %v2751 = vsel %vm2677, %v2667, 0
        %v2754 = vsel %vm2677, %v2668, 0
        %v2757 = vsel %vm2677, %v2669, 0
        %v2760 = vsel %vm2677, %v2670, 0
        %v2763 = vsel %vm2677, %v2671, 0
        %v2766 = vsel %vm2677, %v2672, 0
        %v2769 = vsel %vm2677, %v2673, 0
        %v2772 = vsel %vm2677, %v2674, 0
        %2774 = vmatprep.subr.mxu0 0.0
        %2775 = vmatpush1.msra.mxu0 0.0
        %2776 = vmatprep.subr.mxu0 0.0
        %2777 = vmatpush1.msra.mxu0 0.0
        %2778 = vmatprep.subr.mxu0 0.0
        %2779 = vmatpush1.msra.mxu0 0.0
        %2780 = vmatprep.subr.mxu0 0.0
        %2781 = vmatpush1.msra.mxu0 0.0
        %2782 = vmatprep.subr.mxu0 0.0
        %2783 = vmatpush1.msra.mxu0 0.0
        %2784 = vmatprep.subr.mxu0 0.0
        %2785 = vmatpush1.msra.mxu0 0.0
        %2786 = vmatprep.subr.mxu0 0.0
        %2787 = vmatpush1.msra.mxu0 0.0
        %2788 = vmatprep.subr.mxu0 0.0
        %2789 = vmatpush1.msra.mxu0 0.0
        %2790 = vmatprep.subr.mxu0 0.0
        %2791 = vmatpush1.msra.mxu0 0.0
        %2792 = vmatprep.subr.mxu0 0.0
        %2793 = vmatpush1.msra.mxu0 0.0
        %2794 = vmatprep.subr.mxu0 0.0
        %2795 = vmatpush1.msra.mxu0 0.0
        %2796 = vmatprep.subr.mxu0 0.0
        %2797 = vmatpush1.msra.mxu0 0.0
        %2798 = vmatprep.subr.mxu0 0.0
        %2799 = vmatpush1.msra.mxu0 0.0
        %2800 = vmatprep.subr.mxu0 0.0
        %2801 = vmatpush1.msra.mxu0 0.0
        %2802 = vmatprep.subr.mxu0 0.0
        %2803 = vmatpush1.msra.mxu0 %v2676
        %2804 = vmatprep.subr.mxu0 0.0
        %2805 = vmatpush1.msra.mxu0 %v2675
        %2806 = vmatprep.subr.mxu0 0.0
        %2807 = vmatpush2.msra.mxu0 0.0
        %2808 = vmatprep.subr.mxu0 0.0
        %2809 = vmatpush2.msra.mxu0 0.0
        %2810 = vmatprep.subr.mxu0 0.0
        %2811 = vmatpush2.msra.mxu0 0.0
        %2812 = vmatprep.subr.mxu0 0.0
        %2813 = vmatpush2.msra.mxu0 0.0
        %2814 = vmatprep.subr.mxu0 0.0
        %2815 = vmatpush2.msra.mxu0 0.0
        %2816 = vmatprep.subr.mxu0 0.0
        %2817 = vmatpush2.msra.mxu0 0.0
        %2818 = vmatprep.subr.mxu0 0.0
        %2819 = vmatpush2.msra.mxu0 0.0
        %2820 = vmatprep.subr.mxu0 0.0
        %2821 = vmatpush2.msra.mxu0 0.0
        %2822 = vmatprep.subr.mxu0 0.0
        %2823 = vmatpush2.msra.mxu0 0.0
        %2824 = vmatprep.subr.mxu0 0.0
        %2825 = vmatpush2.msra.mxu0 0.0
        %2826 = vmatprep.subr.mxu0 0.0
        %2827 = vmatpush2.msra.mxu0 0.0
        %2828 = vmatprep.subr.mxu0 0.0
        %2829 = vmatpush2.msra.mxu0 0.0
        %2830 = vmatprep.subr.mxu0 0.0
        %2831 = vmatpush2.msra.mxu0 0.0
        %2832 = vmatprep.subr.mxu0 0.0
        %2833 = vmatpush2.msra.mxu0 0.0
        %2834 = vmatprep.subr.mxu0 0.0
        %2835 = vmatpush2.msra.mxu0 0.0
        %2836 = vmatprep.subr.mxu0 0.0
        %2837 = vmatpush2.msra.mxu0 0.0
        %2838 = vmatprep.mubr.f32.mxu0 0.0
        %2839 = vmatmul.mubr.f32.gmra.mxu0 %v2679
        %v2840 = vpop.f32.mrf.mxu0
        %v2841 = vadd.f32 %v353, %v2840
        %v2842 = vpop.f32.mrf.mxu0
        %2843 = vmatprep.mubr.f32.mxu0 0.0
        %2844 = vmatmul.mubr.f32.gmra.mxu0 %v2682
        %v2845 = vpop.f32.mrf.mxu0
        %v2846 = vadd.f32 %v353, %v2845
        %v2847 = vpop.f32.mrf.mxu0
        %2848 = vmatprep.mubr.f32.mxu0 0.0
        %2849 = vmatmul.mubr.f32.gmra.mxu0 %v2685
        %v2850 = vpop.f32.mrf.mxu0
        %v2851 = vadd.f32 %v353, %v2850
        %v2852 = vpop.f32.mrf.mxu0
        %2853 = vmatprep.mubr.f32.mxu0 0.0
        %2854 = vmatmul.mubr.f32.gmra.mxu0 %v2688
        %v2855 = vpop.f32.mrf.mxu0
        %v2856 = vadd.f32 %v353, %v2855
        %v2857 = vpop.f32.mrf.mxu0
        %2858 = vmatprep.mubr.f32.mxu0 0.0
        %2859 = vmatmul.mubr.f32.gmra.mxu0 %v2691
        %v2860 = vpop.f32.mrf.mxu0
        %v2861 = vadd.f32 %v353, %v2860
        %v2862 = vpop.f32.mrf.mxu0
        %2863 = vmatprep.mubr.f32.mxu0 0.0
        %2864 = vmatmul.mubr.f32.gmra.mxu0 %v2694
        %v2865 = vpop.f32.mrf.mxu0
        %v2866 = vadd.f32 %v353, %v2865
        %v2867 = vpop.f32.mrf.mxu0
        %2868 = vmatprep.mubr.f32.mxu0 0.0
        %2869 = vmatmul.mubr.f32.gmra.mxu0 %v2697
        %v2870 = vpop.f32.mrf.mxu0
        %v2871 = vadd.f32 %v353, %v2870
        %v2872 = vpop.f32.mrf.mxu0
        %2873 = vmatprep.mubr.f32.mxu0 0.0
        %2874 = vmatmul.mubr.f32.gmra.mxu0 %v2700
        %v2875 = vpop.f32.mrf.mxu0
        %v2876 = vadd.f32 %v353, %v2875
        %v2877 = vpop.f32.mrf.mxu0
        %2878 = vmatprep.mubr.f32.mxu0 0.0
        %2879 = vmatmul.mubr.f32.gmra.mxu0 %v2703
        %v2880 = vpop.f32.mrf.mxu0
        %v2881 = vadd.f32 %v353, %v2880
        %v2882 = vpop.f32.mrf.mxu0
        %2883 = vmatprep.mubr.f32.mxu0 0.0
        %2884 = vmatmul.mubr.f32.gmra.mxu0 %v2706
        %v2885 = vpop.f32.mrf.mxu0
        %v2886 = vadd.f32 %v353, %v2885
        %v2887 = vpop.f32.mrf.mxu0
        %2888 = vmatprep.mubr.f32.mxu0 0.0
        %2889 = vmatmul.mubr.f32.gmra.mxu0 %v2709
        %v2890 = vpop.f32.mrf.mxu0
        %v2891 = vadd.f32 %v353, %v2890
        %v2892 = vpop.f32.mrf.mxu0
        %2893 = vmatprep.mubr.f32.mxu0 0.0
        %2894 = vmatmul.mubr.f32.gmra.mxu0 %v2712
        %v2895 = vpop.f32.mrf.mxu0
        %v2896 = vadd.f32 %v353, %v2895
        %v2897 = vpop.f32.mrf.mxu0
        %2898 = vmatprep.mubr.f32.mxu0 0.0
        %2899 = vmatmul.mubr.f32.gmra.mxu0 %v2715
        %v2900 = vpop.f32.mrf.mxu0
        %v2901 = vadd.f32 %v353, %v2900
        %v2902 = vpop.f32.mrf.mxu0
        %2903 = vmatprep.mubr.f32.mxu0 0.0
        %2904 = vmatmul.mubr.f32.gmra.mxu0 %v2718
        %v2905 = vpop.f32.mrf.mxu0
        %v2906 = vadd.f32 %v353, %v2905
        %v2907 = vpop.f32.mrf.mxu0
        %2908 = vmatprep.mubr.f32.mxu0 0.0
        %2909 = vmatmul.mubr.f32.gmra.mxu0 %v2721
        %v2910 = vpop.f32.mrf.mxu0
        %v2911 = vadd.f32 %v353, %v2910
        %v2912 = vpop.f32.mrf.mxu0
        %2913 = vmatprep.mubr.f32.mxu0 0.0
        %2914 = vmatmul.mubr.f32.gmra.mxu0 %v2724
        %v2915 = vpop.f32.mrf.mxu0
        %v2916 = vadd.f32 %v353, %v2915
        %v2917 = vpop.f32.mrf.mxu0
        %2918 = vmatprep.mubr.f32.mxu0 0.0
        %2919 = vmatmul.mubr.f32.gmra.mxu0 %v2727
        %v2920 = vpop.f32.mrf.mxu0
        %v2921 = vadd.f32 %v353, %v2920
        %v2922 = vpop.f32.mrf.mxu0
        %2923 = vmatprep.mubr.f32.mxu0 0.0
        %2924 = vmatmul.mubr.f32.gmra.mxu0 %v2730
        %v2925 = vpop.f32.mrf.mxu0
        %v2926 = vadd.f32 %v353, %v2925
        %v2927 = vpop.f32.mrf.mxu0
        %2928 = vmatprep.mubr.f32.mxu0 0.0
        %2929 = vmatmul.mubr.f32.gmra.mxu0 %v2733
        %v2930 = vpop.f32.mrf.mxu0
        %v2931 = vadd.f32 %v353, %v2930
        %v2932 = vpop.f32.mrf.mxu0
        %2933 = vmatprep.mubr.f32.mxu0 0.0
        %2934 = vmatmul.mubr.f32.gmra.mxu0 %v2736
        %v2935 = vpop.f32.mrf.mxu0
        %v2936 = vadd.f32 %v353, %v2935
        %v2937 = vpop.f32.mrf.mxu0
        %2938 = vmatprep.mubr.f32.mxu0 0.0
        %2939 = vmatmul.mubr.f32.gmra.mxu0 %v2739
        %v2940 = vpop.f32.mrf.mxu0
        %v2941 = vadd.f32 %v353, %v2940
        %v2942 = vpop.f32.mrf.mxu0
        %2943 = vmatprep.mubr.f32.mxu0 0.0
        %2944 = vmatmul.mubr.f32.gmra.mxu0 %v2742
        %v2945 = vpop.f32.mrf.mxu0
        %v2946 = vadd.f32 %v353, %v2945
        %v2947 = vpop.f32.mrf.mxu0
        %2948 = vmatprep.mubr.f32.mxu0 0.0
        %2949 = vmatmul.mubr.f32.gmra.mxu0 %v2745
        %v2950 = vpop.f32.mrf.mxu0
        %v2951 = vadd.f32 %v353, %v2950
        %v2952 = vpop.f32.mrf.mxu0
        %2953 = vmatprep.mubr.f32.mxu0 0.0
        %2954 = vmatmul.mubr.f32.gmra.mxu0 %v2748
        %v2955 = vpop.f32.mrf.mxu0
        %v2956 = vadd.f32 %v353, %v2955
        %v2957 = vpop.f32.mrf.mxu0
        %2958 = vmatprep.mubr.f32.mxu0 0.0
        %2959 = vmatmul.mubr.f32.gmra.mxu0 %v2751
        %v2960 = vpop.f32.mrf.mxu0
        %v2961 = vadd.f32 %v353, %v2960
        %v2962 = vpop.f32.mrf.mxu0
        %2963 = vmatprep.mubr.f32.mxu0 0.0
        %2964 = vmatmul.mubr.f32.gmra.mxu0 %v2754
        %v2965 = vpop.f32.mrf.mxu0
        %v2966 = vadd.f32 %v353, %v2965
        %v2967 = vpop.f32.mrf.mxu0
        %2968 = vmatprep.mubr.f32.mxu0 0.0
        %2969 = vmatmul.mubr.f32.gmra.mxu0 %v2757
        %v2970 = vpop.f32.mrf.mxu0
        %v2971 = vadd.f32 %v353, %v2970
        %v2972 = vpop.f32.mrf.mxu0
        %2973 = vmatprep.mubr.f32.mxu0 0.0
        %2974 = vmatmul.mubr.f32.gmra.mxu0 %v2760
        %v2975 = vpop.f32.mrf.mxu0
        %v2976 = vadd.f32 %v353, %v2975
        %v2977 = vpop.f32.mrf.mxu0
        %2978 = vmatprep.mubr.f32.mxu0 0.0
        %2979 = vmatmul.mubr.f32.gmra.mxu0 %v2763
        %v2980 = vpop.f32.mrf.mxu0
        %v2981 = vadd.f32 %v353, %v2980
        %v2982 = vpop.f32.mrf.mxu0
        %2983 = vmatprep.mubr.f32.mxu0 0.0
        %2984 = vmatmul.mubr.f32.gmra.mxu0 %v2766
        %v2985 = vpop.f32.mrf.mxu0
        %v2986 = vadd.f32 %v353, %v2985
        %v2987 = vpop.f32.mrf.mxu0
        %2988 = vmatprep.mubr.f32.mxu0 0.0
        %2989 = vmatmul.mubr.f32.gmra.mxu0 %v2769
        %v2990 = vpop.f32.mrf.mxu0
        %v2991 = vadd.f32 %v353, %v2990
        %v2992 = vpop.f32.mrf.mxu0
        %2993 = vmatprep.mubr.f32.mxu0 0.0
        %2994 = vmatmul.mubr.f32.gmra.mxu0 %v2772
        %v2995 = vpop.f32.mrf.mxu0
        %v2996 = vadd.f32 %v353, %v2995
        %v2997 = vpop.f32.mrf.mxu0
        %2998 = vdwg.mxu0
        %s2999 = scalar_lea.vmem %s244, 768 [#allocation3]
        %3000 = vst [vmem:[%s2999] sm:$0xff] %v2841
        %3001 = vst [vmem:[%s2999 + $0x8] sm:$0xff] %v2846
        %3002 = vst [vmem:[%s2999 + $0x10] sm:$0xff] %v2851
        %3003 = vst [vmem:[%s2999 + $0x18] sm:$0xff] %v2856
        %3004 = vst [vmem:[%s2999 + $0x20] sm:$0xff] %v2861
        %3005 = vst [vmem:[%s2999 + $0x28] sm:$0xff] %v2866
        %3006 = vst [vmem:[%s2999 + $0x30] sm:$0xff] %v2871
        %3007 = vst [vmem:[%s2999 + $0x38] sm:$0xff] %v2876
        %3008 = vst [vmem:[%s2999 + $0x40] sm:$0xff] %v2881
        %3009 = vst [vmem:[%s2999 + $0x48] sm:$0xff] %v2886
        %3010 = vst [vmem:[%s2999 + $0x50] sm:$0xff] %v2891
        %3011 = vst [vmem:[%s2999 + $0x58] sm:$0xff] %v2896
        %3012 = vst [vmem:[%s2999 + $0x60] sm:$0xff] %v2901
        %3013 = vst [vmem:[%s2999 + $0x68] sm:$0xff] %v2906
        %3014 = vst [vmem:[%s2999 + $0x70] sm:$0xff] %v2911
        %3015 = vst [vmem:[%s2999 + $0x78] sm:$0xff] %v2916
        %3016 = vst [vmem:[%s2999 + $0x80] sm:$0xff] %v2921
        %3017 = vst [vmem:[%s2999 + $0x88] sm:$0xff] %v2926
        %3018 = vst [vmem:[%s2999 + $0x90] sm:$0xff] %v2931
        %3019 = vst [vmem:[%s2999 + $0x98] sm:$0xff] %v2936
        %3020 = vst [vmem:[%s2999 + $0xa0] sm:$0xff] %v2941
        %3021 = vst [vmem:[%s2999 + $0xa8] sm:$0xff] %v2946
        %3022 = vst [vmem:[%s2999 + $0xb0] sm:$0xff] %v2951
        %3023 = vst [vmem:[%s2999 + $0xb8] sm:$0xff] %v2956
        %3024 = vst [vmem:[%s2999 + $0xc0] sm:$0xff] %v2961
        %3025 = vst [vmem:[%s2999 + $0xc8] sm:$0xff] %v2966
        %3026 = vst [vmem:[%s2999 + $0xd0] sm:$0xff] %v2971
        %3027 = vst [vmem:[%s2999 + $0xd8] sm:$0xff] %v2976
        %3028 = vst [vmem:[%s2999 + $0xe0] sm:$0xff] %v2981
        %3029 = vst [vmem:[%s2999 + $0xe8] sm:$0xff] %v2986
        %3030 = vst [vmem:[%s2999 + $0xf0] sm:$0xff] %v2991
        %3031 = vst [vmem:[%s2999 + $0xf8] sm:$0xff] %v2996
        %s3032 = sand.u32 %s159, 1
        %s3033 = scalar_lea.sflag [#allocation4], %s3032
        %s3034 = sand.u32 %s159, 1
        %s3035 = smul.addr %s3034, 1024
        %s3036 = scalar_lea.vmem [#allocation3], %s3035
        // Predicated region
        $region45: #{tpu_custom_call.1} parent=43 // pred_check
          %p3037 = pneg %p169
        $region46: #{tpu_custom_call.1} parent=43 // pred_check_branch
          %3039 = sbr.rel (%p3037) target = $region48
        $region47: #{tpu_custom_call.1} parent=43 // pred_region
          %s3041 = ssub.s32 16384, 16384
          %3042 = vsyncadd %s3033, %s3041
          %s3043 = smul.addr %s20, 128
          %s3044 = smul.addr %s3043, 128
          %s3045 = scalar_lea.hbm %s6, %s3044
          %s3046 = sshll.u32 %s3036, 4
          %s3047 = int_to_ptr.vmem [resolvable:$true] %s3046
          %3052 = dma.vmem_to_hbm [thread:$0]  %s3047, 16384, %s3045, %s3033, 128, 128, 8
        $region48: #{tpu_custom_call.1} parent=43 // pred_fallthru
          _
      $region44: #{tpu_custom_call.1} parent=5 // pred_fallthru
        _
      %p3053 = scmp.le.s32.totalorder 2, %s15
      // Predicated region
      $region49: #{tpu_custom_call.1} parent=5 // pred_check
        %p3054 = pneg %p3053
      $region50: #{tpu_custom_call.1} parent=5 // pred_check_branch
        %3056 = sbr.rel (%p3054) target = $region52
      $region51: #{tpu_custom_call.1} parent=5 // pred_region
        %s3057 = ssub.s32 %s15, 2
        // Predicated region
        $region53: #{tpu_custom_call.1} parent=51 // pred_check
          %p3058 = pneg %p175
        $region54: #{tpu_custom_call.1} parent=51 // pred_check_branch
          %3060 = sbr.rel (%p3058) target = $region56
        $region55: #{tpu_custom_call.1} parent=51 // pred_region
          %s3061 = sand.u32 %s160, 1
          %s3062 = scalar_lea.sflag [#allocation4], %s3061
          %s3063 = sand.u32 %s160, 1
          %s3064 = smul.addr %s3063, 1024
          %s3065 = scalar_lea.vmem [#allocation3], %s3064
          %3066 = dma.done %s3062, 16384
        $region56: #{tpu_custom_call.1} parent=51 // pred_fallthru
          _
      $region52: #{tpu_custom_call.1} parent=5 // pred_fallthru
        _
    $region6: #{tpu_custom_call.1} parent=1 // loop_footer
      %s19 = sadd.s32 1, %s15
    $region7: #{tpu_custom_call.1} parent=1 // loop_footer_branch
      %14 = sbr.rel target = $region3
    $region8: #{tpu_custom_call.1} parent=1 // loop_exit
      _
    %3067 = vsyncpa [#allocation4], 1
    %s3068 = scalar_lea.sflag [#allocation4], 1
    %3069 = vsyncpa %s3068, 1

</llo_original>
